<compile_context>
chip_gen: v5e
topology: v5e:2x2
jax: 0.10.0
libtpu: 0.0.40
codegen_flags: <defaults>
</compile_context>

<pallas_src>
import functools

import jax
import jax.numpy as jnp
from jax.experimental import pallas as pl
from jax.experimental.pallas import tpu as pltpu


# ----------------------------------------------------------------------------
# Generation-aware limits / tiling helpers
# ----------------------------------------------------------------------------

def _vmem_limit_bytes():
    try:
        cap = pltpu.get_tpu_info().vmem_capacity_bytes
    except Exception:
        cap = 64 * 1024 * 1024          # conservative (v7x-sized) fallback
    return int(min(cap * 3 // 4, 100 * 1024 * 1024))


_VMEM_LIMIT = _vmem_limit_bytes()                     # ~48 MiB v7x, ~96 MiB v5e/v6e
_ROW_TILE_TARGET = 512 if _VMEM_LIMIT >= 72 * 1024 * 1024 else 256


def _row_tile(m, target=None):
    """Fixed-size row tile; the grid uses pl.cdiv so M need not divide."""
    if target is None:
        target = _ROW_TILE_TARGET
    return min(target, m)


def _q_tile(s_pad):
    """Largest power-of-two query tile (>=16) dividing the padded sequence."""
    for t in (256, 128, 64, 32, 16):
        if s_pad % t == 0:
            return t
    return s_pad


def _hd_tile(hd, target=1024):
    """MLP hidden-dim tile (bounds fp32 intermediate + per-step weight block)."""
    for t in (1024, 512, 256, 128):
        if t <= target and hd % t == 0:
            return t
    return hd


def _cparams(sem=("parallel",)):
    return pltpu.CompilerParams(dimension_semantics=sem,
                                vmem_limit_bytes=_VMEM_LIMIT)


# ----------------------------------------------------------------------------
# Pallas kernels
# ----------------------------------------------------------------------------

def _linear_kernel(x_ref, w_ref, b_ref, o_ref):
    # o = x @ w + b ; bf16 MXU operands, fp32 accumulation.
    o_ref[...] = (jnp.dot(x_ref[...].astype(jnp.bfloat16), w_ref[...],
                          preferred_element_type=jnp.float32)
                  + b_ref[...]).astype(o_ref.dtype)


def _ln_kernel(x_ref, g_ref, b_ref, o_ref, *, eps):
    x = x_ref[...].astype(jnp.float32)
    mu = jnp.mean(x, axis=-1, keepdims=True)
    var = jnp.mean(jnp.square(x - mu), axis=-1, keepdims=True)
    o_ref[...] = ((x - mu) * jax.lax.rsqrt(var + eps) * g_ref[...]
                  + b_ref[...]).astype(o_ref.dtype)


def _ln_linear_kernel(x_ref, g_ref, b_ref, w_ref, bias_ref, o_ref, *, eps):
    # o = LN(x) @ w + bias ; LN fp32, matmul operands bf16, fp32 accumulate.
    x = x_ref[...]
    mu = jnp.mean(x, axis=-1, keepdims=True)
    var = jnp.mean(jnp.square(x - mu), axis=-1, keepdims=True)
    y = (x - mu) * jax.lax.rsqrt(var + eps) * g_ref[...] + b_ref[...]
    o_ref[...] = (jnp.dot(y.astype(jnp.bfloat16), w_ref[...],
                          preferred_element_type=jnp.float32)
                  + bias_ref[...]).astype(o_ref.dtype)


def _ln_mlp_resid_kernel(x_ref, g_ref, b_ref, w1_ref, b1_ref, w2_ref, b2_ref,
                         o_ref, y_ref, *, eps):
    # o = x + cproj( quickgelu( fc( LN(x) ) ) ), hidden dim tiled over grid
    # axis 1 (reduction, "arbitrary"); x and o blocks resident across it.
    j = pl.program_id(1)

    @pl.when(j == 0)
    def _():
        x = x_ref[...]
        mu = jnp.mean(x, axis=-1, keepdims=True)
        var = jnp.mean(jnp.square(x - mu), axis=-1, keepdims=True)
        y = (x - mu) * jax.lax.rsqrt(var + eps) * g_ref[...] + b_ref[...]
        y_ref[...] = y.astype(jnp.bfloat16)          # LN output, reused per chunk
        o_ref[...] = x + b2_ref[...]                 # residual + cproj bias once

    h = (jnp.dot(y_ref[...], w1_ref[...], preferred_element_type=jnp.float32)
         + b1_ref[...])
    h = h * jax.nn.sigmoid(1.702 * h)                # QuickGELU (fp32, EUP)
    o_ref[...] += jnp.dot(h.astype(jnp.bfloat16), w2_ref[...],
                          preferred_element_type=jnp.float32)


def _attn_outproj_kernel(qkv_ref, w_ref, b_ref, r_ref, o_ref, *,
                         heads, scale, s_valid, tq):
    # grid = (batch, q_tile). qkv block: (1, S, 3D) bf16, resident across the q
    # axis; per head: softmax(q k^T) v, then fused out-projection by contracting
    # with the head's (Dh, D) slice of W_out into a (tq, D) fp32 accumulator.
    # Output = residual + attn_out @ W_out + b_out; lane-dense (tq, D) store.
    S = qkv_ref.shape[1]
    D = qkv_ref.shape[2] // 3
    Dh = D // heads
    q0 = pl.multiple_of(pl.program_id(1) * tq, tq)
    q_rows = qkv_ref[0, pl.ds(q0, tq), :]                       # (tq, 3D) bf16

    mask = None
    if s_valid < S:                                             # mask pad keys
        key_ids = jax.lax.broadcasted_iota(jnp.int32, (1, S), 1)
        mask = key_ids < s_valid

    acc = r_ref[0] + b_ref[...]                                 # (tq, D) fp32
    for h in range(heads):
        qh = q_rows[:, h * Dh:(h + 1) * Dh]
        kh = qkv_ref[0, :, D + h * Dh:D + (h + 1) * Dh]         # (S, Dh) bf16
        vh = qkv_ref[0, :, 2 * D + h * Dh:2 * D + (h + 1) * Dh]
        s = jax.lax.dot_general(qh, kh, (((1,), (1,)), ((), ())),
                                preferred_element_type=jnp.float32) * scale
        if mask is not None:
            s = jnp.where(mask, s, -1e30)
        m = jnp.max(s, axis=-1, keepdims=True)
        p = jnp.exp(s - m)
        p = p * pl.reciprocal(jnp.sum(p, axis=-1, keepdims=True), approx=True)
        pv = jnp.dot(p.astype(jnp.bfloat16), vh,
                     preferred_element_type=jnp.float32)        # (tq, Dh)
        acc = acc + jnp.dot(pv.astype(jnp.bfloat16),
                            w_ref[h * Dh:(h + 1) * Dh, :],
                            preferred_element_type=jnp.float32)
    o_ref[0] = acc.astype(o_ref.dtype)


# ----------------------------------------------------------------------------
# pallas_call wrappers
# ----------------------------------------------------------------------------

def linear(x, w, b, out_dtype=jnp.float32):
    M, K = x.shape
    N = w.shape[1]
    tm = _row_tile(M)
    return pl.pallas_call(
        _linear_kernel,
        out_shape=jax.ShapeDtypeStruct((M, N), out_dtype),
        grid=(pl.cdiv(M, tm),),
        in_specs=[pl.BlockSpec((tm, K), lambda i: (i, 0)),
                  pl.BlockSpec((K, N), lambda i: (0, 0)),
                  pl.BlockSpec((1, N), lambda i: (0, 0))],
        out_specs=pl.BlockSpec((tm, N), lambda i: (i, 0)),
        compiler_params=_cparams(),
        cost_estimate=pl.CostEstimate(
            flops=2 * M * K * N, transcendentals=0,
            bytes_accessed=M * K * 4 + K * N * 2 + M * N * 4),
    )(x, w.astype(jnp.bfloat16), b.reshape(1, N).astype(jnp.float32))


def layer_norm(x, g, b, eps=1e-5):
    M, D = x.shape
    tm = _row_tile(M)
    return pl.pallas_call(
        functools.partial(_ln_kernel, eps=eps),
        out_shape=jax.ShapeDtypeStruct((M, D), jnp.float32),
        grid=(pl.cdiv(M, tm),),
        in_specs=[pl.BlockSpec((tm, D), lambda i: (i, 0)),
                  pl.BlockSpec((1, D), lambda i: (0, 0)),
                  pl.BlockSpec((1, D), lambda i: (0, 0))],
        out_specs=pl.BlockSpec((tm, D), lambda i: (i, 0)),
        compiler_params=_cparams(),
    )(x, g.reshape(1, D), b.reshape(1, D))


def ln_linear(x, g, b, w, bias, out_dtype=jnp.bfloat16, eps=1e-5):
    M, D = x.shape
    N = w.shape[1]
    tm = _row_tile(M)
    return pl.pallas_call(
        functools.partial(_ln_linear_kernel, eps=eps),
        out_shape=jax.ShapeDtypeStruct((M, N), out_dtype),
        grid=(pl.cdiv(M, tm),),
        in_specs=[pl.BlockSpec((tm, D), lambda i: (i, 0)),
                  pl.BlockSpec((1, D), lambda i: (0, 0)),
                  pl.BlockSpec((1, D), lambda i: (0, 0)),
                  pl.BlockSpec((D, N), lambda i: (0, 0)),
                  pl.BlockSpec((1, N), lambda i: (0, 0))],
        out_specs=pl.BlockSpec((tm, N), lambda i: (i, 0)),
        compiler_params=_cparams(),
        cost_estimate=pl.CostEstimate(
            flops=2 * M * D * N, transcendentals=0,
            bytes_accessed=M * D * 4 + D * N * 2 + M * N * 2),
    )(x, g.reshape(1, D), b.reshape(1, D), w.astype(jnp.bfloat16),
      bias.reshape(1, N))


def ln_mlp_residual(x, g, b, w1, b1, w2, b2, eps=1e-5):
    M, D = x.shape
    Hd = w1.shape[1]
    tm = _row_tile(M)
    thd = _hd_tile(Hd)
    return pl.pallas_call(
        functools.partial(_ln_mlp_resid_kernel, eps=eps),
        out_shape=jax.ShapeDtypeStruct((M, D), jnp.float32),
        grid=(pl.cdiv(M, tm), Hd // thd),
        in_specs=[pl.BlockSpec((tm, D), lambda i, j: (i, 0)),
                  pl.BlockSpec((1, D), lambda i, j: (0, 0)),
                  pl.BlockSpec((1, D), lambda i, j: (0, 0)),
                  pl.BlockSpec((D, thd), lambda i, j: (0, j)),
                  pl.BlockSpec((1, thd), lambda i, j: (0, j)),
                  pl.BlockSpec((thd, D), lambda i, j: (j, 0)),
                  pl.BlockSpec((1, D), lambda i, j: (0, 0))],
        out_specs=pl.BlockSpec((tm, D), lambda i, j: (i, 0)),
        scratch_shapes=[pltpu.VMEM((tm, D), jnp.bfloat16)],
        compiler_params=_cparams(("parallel", "arbitrary")),
        input_output_aliases={0: 0},
        cost_estimate=pl.CostEstimate(
            flops=4 * M * D * Hd, transcendentals=M * Hd,
            bytes_accessed=2 * M * D * 4 + 2 * D * Hd * 2),
    )(x, g.reshape(1, D), b.reshape(1, D), w1.astype(jnp.bfloat16),
      b1.reshape(1, Hd), w2.astype(jnp.bfloat16), b2.reshape(1, D))


def attention_block(qkv, out_w, out_b, resid, heads, s_valid):
    """out = resid + MHA(qkv) @ out_w + out_b.  qkv (B,S,3D) bf16, resid fp32."""
    B, S, threeD = qkv.shape
    D = threeD // 3
    Dh = D // heads
    scale = 1.0 / (Dh ** 0.5)
    tq = _q_tile(S)
    return pl.pallas_call(
        functools.partial(_attn_outproj_kernel, heads=heads, scale=scale,
                          s_valid=s_valid, tq=tq),
        out_shape=jax.ShapeDtypeStruct((B, S, D), jnp.float32),
        grid=(B, S // tq),
        in_specs=[pl.BlockSpec((1, S, threeD), lambda b, q: (b, 0, 0)),
                  pl.BlockSpec((D, D), lambda b, q: (0, 0)),
                  pl.BlockSpec((1, D), lambda b, q: (0, 0)),
                  pl.BlockSpec((1, tq, D), lambda b, q: (b, q, 0))],
        out_specs=pl.BlockSpec((1, tq, D), lambda b, q: (b, q, 0)),
        compiler_params=_cparams(("parallel", "parallel")),
        input_output_aliases={3: 0},
        cost_estimate=pl.CostEstimate(
            flops=B * (4 * heads * S * S * Dh + 2 * S * D * D),
            transcendentals=B * heads * S * S,
            bytes_accessed=B * S * threeD * 2 + 2 * B * S * D * 4 + D * D * 2),
    )(qkv, out_w.astype(jnp.bfloat16),
      out_b.reshape(1, D).astype(jnp.float32), resid)


# ----------------------------------------------------------------------------
# Model: parameters + forward
# ----------------------------------------------------------------------------

def init_params(key, *, image_size, patch, in_ch, width, heads, layers, out_dim):
    np_side = image_size // patch
    num_patches = np_side * np_side
    seq = num_patches + 1
    mlp_width = 4 * width

    def nrm(k, shape, scale=0.02):
        return (scale * jax.random.normal(k, shape)).astype(jnp.float32)

    def w16(k, shape, scale=0.02):    # matmul weights stored bf16 (MXU operands)
        return nrm(k, shape, scale).astype(jnp.bfloat16)

    keys = iter(jax.random.split(key, 8 + 12 * layers))
    p = {
        # PyTorch conv1.weight is (D, C, P, P); stored pre-reshaped to
        # (C*P*P, D) so the stride-P patch conv is a plain matmul.
        "conv1_w": w16(next(keys), (in_ch * patch * patch, width)),
        "conv1_b": jnp.zeros((width,), jnp.float32),      # conv1 has bias=False
        "class_embedding": nrm(next(keys), (width,)),
        "positional_embedding": nrm(next(keys), (seq, width)),
        "ln_pre_g": jnp.ones((width,), jnp.float32),
        "ln_pre_b": jnp.zeros((width,), jnp.float32),
        "ln_post_g": jnp.ones((width,), jnp.float32),
        "ln_post_b": jnp.zeros((width,), jnp.float32),
        "proj": w16(next(keys), (width, out_dim)),
        "proj_b": jnp.zeros((out_dim,), jnp.float32),
        "blocks": [],
    }
    for _ in range(layers):
        blk = {
            "ln1_g": jnp.ones((width,), jnp.float32),
            "ln1_b": jnp.zeros((width,), jnp.float32),
            # NOTE: PyTorch in_proj_weight / out_proj.weight are (out, in);
            # transpose when porting real CLIP checkpoints.
            "qkv_w": w16(next(keys), (width, 3 * width)),
            "qkv_b": jnp.zeros((3 * width,), jnp.float32),
            "out_w": w16(next(keys), (width, width)),
            "out_b": jnp.zeros((width,), jnp.float32),
            "ln2_g": jnp.ones((width,), jnp.float32),
            "ln2_b": jnp.zeros((width,), jnp.float32),
            "fc_w": w16(next(keys), (width, mlp_width)),
            "fc_b": jnp.zeros((mlp_width,), jnp.float32),
            "cproj_w": w16(next(keys), (mlp_width, width)),
            "cproj_b": jnp.zeros((width,), jnp.float32),
        }
        p["blocks"].append(blk)
    cfg = dict(image_size=image_size, patch=patch, in_ch=in_ch, width=width,
               heads=heads, layers=layers, out_dim=out_dim, seq=seq,
               num_patches=num_patches)
    return p, cfg


def visual_forward(params, cfg, x, output_tokens=True):
    """x: [B, C, H, W] float32 (NCHW).  Returns (pooled, tokens)."""
    B, C, H, W = x.shape
    P = cfg["patch"]
    D = cfg["width"]
    heads = cfg["heads"]
    Hp, Wp = H // P, W // P
    Np = Hp * Wp
    S = Np + 1
    S_pad = -(-S // 16) * 16          # pad seq to multiple of 16 (clean bf16 tiles)

    # --- patch embedding (stride-P conv == matmul over flattened patches) ---
    patches = x.reshape(B, C, Hp, P, Wp, P).transpose(0, 2, 4, 1, 3, 5)
    patches = patches.reshape(B * Np, C * P * P)
    tok = linear(patches, params["conv1_w"], params["conv1_b"])   # (B*Np, D) f32
    tok = tok.reshape(B, Np, D)

    # --- class token + pad slots + positional embedding (plain-JAX glue) ---
    cls = jnp.broadcast_to(params["class_embedding"][None, None, :], (B, 1, D))
    pad = jnp.zeros((B, S_pad - S, D), jnp.float32)
    h = jnp.concatenate([cls, tok, pad], axis=1)                  # (B, S_pad, D)
    pos = jnp.concatenate(
        [params["positional_embedding"],
         jnp.zeros((S_pad - S, D), jnp.float32)], axis=0)
    h = h + pos[None]

    M = B * S_pad
    h = layer_norm(h.reshape(M, D), params["ln_pre_g"], params["ln_pre_b"])

    # --- residual attention blocks: 3 fused pallas_calls per layer ---
    for blk in params["blocks"]:
        # (LN1 + QKV projection) -> bf16 qkv buffer
        qkv = ln_linear(h, blk["ln1_g"], blk["ln1_b"],
                        blk["qkv_w"], blk["qkv_b"])               # (M, 3D) bf16
        # attention + fused out-projection + residual (residual aliased in-place)
        h = attention_block(qkv.reshape(B, S_pad, 3 * D),
                            blk["out_w"], blk["out_b"],
                            h.reshape(B, S_pad, D), heads, S)     # (B,S_pad,D) f32
        h = h.reshape(M, D)
        # (LN2 + fc + QuickGELU + cproj + residual), hidden dim tiled
        h = ln_mlp_residual(h, blk["ln2_g"], blk["ln2_b"],
                            blk["fc_w"], blk["fc_b"],
                            blk["cproj_w"], blk["cproj_b"])

    # --- ln_post, pool (cls token), projection ---
    h = layer_norm(h, params["ln_post_g"], params["ln_post_b"]).reshape(B, S_pad, D)
    pooled_pre = h[:, 0, :]                                        # (B, D)
    tokens = h[:, 1:S, :]                                          # (B, Np, D)
    pooled = linear(pooled_pre, params["proj"], params["proj_b"])  # (B, out_dim)

    if output_tokens:
        return pooled, tokens
    return pooled


# ----------------------------------------------------------------------------
# main
# ----------------------------------------------------------------------------

if __name__ == "__main__":
    key = jax.random.PRNGKey(0)
    k_param, k_x = jax.random.split(key)

    # small ViT config: 24x24 image, 4x4 patches -> 36 patches + cls = 37 tokens
    # (padded to 48), width 64, 4 heads (Dh=16), 2 layers, out_dim 32.
    params, cfg = init_params(
        k_param, image_size=24, patch=4, in_ch=3,
        width=64, heads=4, layers=2, out_dim=32,
    )

    x = jax.random.normal(k_x, (2, 3, 24, 24), dtype=jnp.float32)  # NCHW

    fwd = jax.jit(functools.partial(visual_forward, params, cfg,
                                    output_tokens=True))
    pooled, tokens = fwd(x)
    jax.block_until_ready((pooled, tokens))

    assert pooled.shape == (2, 32), pooled.shape
    assert tokens.shape == (2, 36, 64), tokens.shape
    assert bool(jnp.all(jnp.isfinite(pooled)))
    assert bool(jnp.all(jnp.isfinite(tokens)))
    print("KERNEL_OK")
</pallas_src>

<mosaic_0001>
module attributes {stable_mosaic.version = 11 : i64} {
  func.func @_linear_kernel(%arg0: i32, %arg1: memref<72x48xf32, #tpu.memory_space<vmem>>, %arg2: memref<48x64xbf16, #tpu.memory_space<vmem>>, %arg3: memref<1x64xf32, #tpu.memory_space<vmem>>, %arg4: memref<72x64xf32, #tpu.memory_space<vmem>>) attributes {dimension_semantics = [#tpu.dimension_semantics<parallel>], iteration_bounds = array<i64: 1>, scalar_prefetch = 0 : i64, scratch_operands = 0 : i64, tpu.core_type = #tpu.core_type<tc>, window_params = [{transform_indices = @transform_0, window_bounds = array<i64: 72, 48>}, {pipeline_mode = #tpu.pipeline_mode<synchronous>, transform_indices = @transform_1, window_bounds = array<i64: 48, 64>}, {pipeline_mode = #tpu.pipeline_mode<synchronous>, transform_indices = @transform_2, window_bounds = array<i64: 1, 64>}, {transform_indices = @transform_3, window_bounds = array<i64: 72, 64>}]} {
    %c0 = arith.constant 0 : index
    %c0_0 = arith.constant 0 : index
    %0 = vector.load %arg1[%c0, %c0_0] : memref<72x48xf32, #tpu.memory_space<vmem>>, vector<72x48xf32>
    %1 = arith.truncf %0 : vector<72x48xf32> to vector<72x48xbf16>
    %c0_1 = arith.constant 0 : index
    %c0_2 = arith.constant 0 : index
    %2 = vector.load %arg2[%c0_1, %c0_2] : memref<48x64xbf16, #tpu.memory_space<vmem>>, vector<48x64xbf16>
    %cst = arith.constant dense<0.000000e+00> : vector<72x64xf32>
    %3 = tpu.matmul %1, %2, %cst {dimension_numbers = #tpu.dot_dimension_numbers<[1], [0], [0], [1], [0, 0, 1, 1], [], []>} : vector<72x48xbf16>, vector<48x64xbf16>, vector<72x64xf32> -> vector<72x64xf32>
    %c0_3 = arith.constant 0 : index
    %c0_4 = arith.constant 0 : index
    %4 = vector.load %arg3[%c0_3, %c0_4] : memref<1x64xf32, #tpu.memory_space<vmem>>, vector<1x64xf32>
    %5 = vector.broadcast %4 : vector<1x64xf32> to vector<72x64xf32>
    %6 = arith.addf %3, %5 : vector<72x64xf32>
    %c0_5 = arith.constant 0 : index
    %c0_6 = arith.constant 0 : index
    %7 = vector.load %arg4[%c0_5, %c0_6] : memref<72x64xf32, #tpu.memory_space<vmem>>, vector<72x64xf32>
    tpu.vector_store %arg4[%c0_5, %c0_6], %6 {strides = array<i32>} : memref<72x64xf32, #tpu.memory_space<vmem>>, vector<72x64xf32>,
    return
  }
  func.func @transform_0(%arg0: i32) -> (i32, i32) {
    %c0_i32 = arith.constant 0 : i32
    %c0_i32_0 = arith.constant 0 : i32
    return %arg0, %c0_i32 : i32, i32
  }
  func.func @transform_1(%arg0: i32) -> (i32, i32) {
    %c0_i32 = arith.constant 0 : i32
    %c0_i32_0 = arith.constant 0 : i32
    %c0_i32_1 = arith.constant 0 : i32
    return %c0_i32, %c0_i32_0 : i32, i32
  }
  func.func @transform_2(%arg0: i32) -> (i32, i32) {
    %c0_i32 = arith.constant 0 : i32
    %c0_i32_0 = arith.constant 0 : i32
    %c0_i32_1 = arith.constant 0 : i32
    return %c0_i32, %c0_i32_0 : i32, i32
  }
  func.func @transform_3(%arg0: i32) -> (i32, i32) {
    %c0_i32 = arith.constant 0 : i32
    %c0_i32_0 = arith.constant 0 : i32
    return %arg0, %c0_i32 : i32, i32
  }
}

module attributes {stable_mosaic.version = 11 : i64} {
  func.func @_ln_kernel(%arg0: i32, %arg1: memref<96x64xf32, #tpu.memory_space<vmem>>, %arg2: memref<1x64xf32, #tpu.memory_space<vmem>>, %arg3: memref<1x64xf32, #tpu.memory_space<vmem>>, %arg4: memref<96x64xf32, #tpu.memory_space<vmem>>) attributes {dimension_semantics = [#tpu.dimension_semantics<parallel>], iteration_bounds = array<i64: 1>, scalar_prefetch = 0 : i64, scratch_operands = 0 : i64, tpu.core_type = #tpu.core_type<tc>, window_params = [{transform_indices = @transform_0, window_bounds = array<i64: 96, 64>}, {pipeline_mode = #tpu.pipeline_mode<synchronous>, transform_indices = @transform_1, window_bounds = array<i64: 1, 64>}, {pipeline_mode = #tpu.pipeline_mode<synchronous>, transform_indices = @transform_2, window_bounds = array<i64: 1, 64>}, {transform_indices = @transform_3, window_bounds = array<i64: 96, 64>}]} {
    %c0 = arith.constant 0 : index
    %c0_0 = arith.constant 0 : index
    %0 = vector.load %arg1[%c0, %c0_0] : memref<96x64xf32, #tpu.memory_space<vmem>>, vector<96x64xf32>
    %cst = arith.constant dense<0.000000e+00> : vector<96xf32>
    %1 = vector.multi_reduction <add>, %0, %cst [1] : vector<96x64xf32> to vector<96xf32>
    %2 = vector.shape_cast %1 : vector<96xf32> to vector<96x1xf32>
    %cst_1 = arith.constant 6.400000e+01 : f32
    %3 = vector.broadcast %cst_1 : f32 to vector<96x1xf32>
    %4 = arith.divf %2, %3 : vector<96x1xf32>
    %5 = vector.broadcast %4 : vector<96x1xf32> to vector<96x64xf32>
    %6 = arith.subf %0, %5 : vector<96x64xf32>
    %7 = arith.mulf %6, %6 : vector<96x64xf32>
    %cst_2 = arith.constant dense<0.000000e+00> : vector<96xf32>
    %8 = vector.multi_reduction <add>, %7, %cst_2 [1] : vector<96x64xf32> to vector<96xf32>
    %9 = vector.shape_cast %8 : vector<96xf32> to vector<96x1xf32>
    %cst_3 = arith.constant 6.400000e+01 : f32
    %10 = vector.broadcast %cst_3 : f32 to vector<96x1xf32>
    %11 = arith.divf %9, %10 : vector<96x1xf32>
    %12 = vector.broadcast %4 : vector<96x1xf32> to vector<96x64xf32>
    %13 = arith.subf %0, %12 : vector<96x64xf32>
    %cst_4 = arith.constant 9.99999974E-6 : f32
    %14 = vector.broadcast %cst_4 : f32 to vector<96x1xf32>
    %15 = arith.addf %11, %14 : vector<96x1xf32>
    %16 = math.rsqrt %15 : vector<96x1xf32>
    %17 = vector.broadcast %16 : vector<96x1xf32> to vector<96x64xf32>
    %18 = arith.mulf %13, %17 : vector<96x64xf32>
    %c0_5 = arith.constant 0 : index
    %c0_6 = arith.constant 0 : index
    %19 = vector.load %arg2[%c0_5, %c0_6] : memref<1x64xf32, #tpu.memory_space<vmem>>, vector<1x64xf32>
    %20 = vector.broadcast %19 : vector<1x64xf32> to vector<96x64xf32>
    %21 = arith.mulf %18, %20 : vector<96x64xf32>
    %c0_7 = arith.constant 0 : index
    %c0_8 = arith.constant 0 : index
    %22 = vector.load %arg3[%c0_7, %c0_8] : memref<1x64xf32, #tpu.memory_space<vmem>>, vector<1x64xf32>
    %23 = vector.broadcast %22 : vector<1x64xf32> to vector<96x64xf32>
    %24 = arith.addf %21, %23 : vector<96x64xf32>
    %c0_9 = arith.constant 0 : index
    %c0_10 = arith.constant 0 : index
    %25 = vector.load %arg4[%c0_9, %c0_10] : memref<96x64xf32, #tpu.memory_space<vmem>>, vector<96x64xf32>
    tpu.vector_store %arg4[%c0_9, %c0_10], %24 {strides = array<i32>} : memref<96x64xf32, #tpu.memory_space<vmem>>, vector<96x64xf32>,
    return
  }
  func.func @transform_0(%arg0: i32) -> (i32, i32) {
    %c0_i32 = arith.constant 0 : i32
    %c0_i32_0 = arith.constant 0 : i32
    return %arg0, %c0_i32 : i32, i32
  }
  func.func @transform_1(%arg0: i32) -> (i32, i32) {
    %c0_i32 = arith.constant 0 : i32
    %c0_i32_0 = arith.constant 0 : i32
    %c0_i32_1 = arith.constant 0 : i32
    return %c0_i32, %c0_i32_0 : i32, i32
  }
  func.func @transform_2(%arg0: i32) -> (i32, i32) {
    %c0_i32 = arith.constant 0 : i32
    %c0_i32_0 = arith.constant 0 : i32
    %c0_i32_1 = arith.constant 0 : i32
    return %c0_i32, %c0_i32_0 : i32, i32
  }
  func.func @transform_3(%arg0: i32) -> (i32, i32) {
    %c0_i32 = arith.constant 0 : i32
    %c0_i32_0 = arith.constant 0 : i32
    return %arg0, %c0_i32 : i32, i32
  }
}

module attributes {stable_mosaic.version = 11 : i64} {
  func.func @_attn_outproj_kernel(%arg0: i32, %arg1: i32, %arg2: memref<1x48x192xbf16, #tpu.memory_space<vmem>>, %arg3: memref<64x64xbf16, #tpu.memory_space<vmem>>, %arg4: memref<1x64xf32, #tpu.memory_space<vmem>>, %arg5: memref<1x16x64xf32, #tpu.memory_space<vmem>>, %arg6: memref<1x16x64xf32, #tpu.memory_space<vmem>>) attributes {dimension_semantics = [#tpu.dimension_semantics<parallel>, #tpu.dimension_semantics<parallel>], iteration_bounds = array<i64: 2, 3>, scalar_prefetch = 0 : i64, scratch_operands = 0 : i64, tpu.core_type = #tpu.core_type<tc>, window_params = [{transform_indices = @transform_0, window_bounds = array<i64: 1, 48, 192>}, {pipeline_mode = #tpu.pipeline_mode<synchronous>, transform_indices = @transform_1, window_bounds = array<i64: 64, 64>}, {pipeline_mode = #tpu.pipeline_mode<synchronous>, transform_indices = @transform_2, window_bounds = array<i64: 1, 64>}, {transform_indices = @transform_3, window_bounds = array<i64: 1, 16, 64>}, {transform_indices = @transform_4, window_bounds = array<i64: 1, 16, 64>}]} {
    %c16_i32 = arith.constant 16 : i32
    %0 = arith.muli %arg1, %c16_i32 : i32
    %1 = tpu.assume_multiple %0, 16 : i32
    %c0 = arith.constant 0 : index
    %2 = arith.index_cast %1 : i32 to index
    %c0_0 = arith.constant 0 : index
    %3 = vector.load %arg2[%c0, %2, %c0_0] : memref<1x48x192xbf16, #tpu.memory_space<vmem>>, vector<1x16x192xbf16>
    %4 = vector.shape_cast %3 : vector<1x16x192xbf16> to vector<16x192xbf16>
    %5 = tpu.iota {dimensions = array<i32: 1>} : vector<1x48xi32>
    %c37_i32 = arith.constant 37 : i32
    %6 = vector.broadcast %c37_i32 : i32 to vector<1x48xi32>
    %7 = arith.cmpi slt, %5, %6 : vector<1x48xi32>
    %c0_1 = arith.constant 0 : index
    %c0_2 = arith.constant 0 : index
    %c0_3 = arith.constant 0 : index
    %8 = vector.load %arg5[%c0_1, %c0_2, %c0_3] : memref<1x16x64xf32, #tpu.memory_space<vmem>>, vector<1x16x64xf32>
    %9 = vector.shape_cast %8 : vector<1x16x64xf32> to vector<16x64xf32>
    %c0_4 = arith.constant 0 : index
    %c0_5 = arith.constant 0 : index
    %10 = vector.load %arg4[%c0_4, %c0_5] : memref<1x64xf32, #tpu.memory_space<vmem>>, vector<1x64xf32>
    %11 = vector.broadcast %10 : vector<1x64xf32> to vector<16x64xf32>
    %12 = arith.addf %9, %11 : vector<16x64xf32>
    %13 = vector.extract_strided_slice %4 {offsets = [0, 0], sizes = [16, 16], strides = [1, 1]} : vector<16x192xbf16> to vector<16x16xbf16>
    %c0_6 = arith.constant 0 : index
    %c0_7 = arith.constant 0 : index
    %c64 = arith.constant 64 : index
    %14 = vector.load %arg2[%c0_6, %c0_7, %c64] : memref<1x48x192xbf16, #tpu.memory_space<vmem>>, vector<1x48x16xbf16>
    %15 = vector.shape_cast %14 : vector<1x48x16xbf16> to vector<48x16xbf16>
    %c0_8 = arith.constant 0 : index
    %c0_9 = arith.constant 0 : index
    %c128 = arith.constant 128 : index
    %16 = vector.load %arg2[%c0_8, %c0_9, %c128] : memref<1x48x192xbf16, #tpu.memory_space<vmem>>, vector<1x48x16xbf16>
    %17 = vector.shape_cast %16 : vector<1x48x16xbf16> to vector<48x16xbf16>
    %cst = arith.constant dense<0.000000e+00> : vector<16x48xf32>
    %18 = tpu.matmul %13, %15, %cst {dimension_numbers = #tpu.dot_dimension_numbers<[1], [1], [0], [0], [0, 0, 1, 0], [], []>} : vector<16x16xbf16>, vector<48x16xbf16>, vector<16x48xf32> -> vector<16x48xf32>
    %cst_10 = arith.constant 2.500000e-01 : f32
    %19 = vector.broadcast %cst_10 : f32 to vector<16x48xf32>
    %20 = arith.mulf %18, %19 : vector<16x48xf32>
    %cst_11 = arith.constant -1.000000e+30 : f32
    %21 = vector.shape_cast %7 : vector<1x48xi1> to vector<1x48xi1>
    %22 = vector.broadcast %21 : vector<1x48xi1> to vector<16x48xi1>
    %23 = vector.broadcast %cst_11 : f32 to vector<16x48xf32>
    %24 = arith.select %22, %20, %23 : vector<16x48xi1>, vector<16x48xf32>
    %cst_12 = arith.constant dense<0xFF800000> : vector<16xf32>
    %25 = vector.multi_reduction <maximumf>, %24, %cst_12 [1] : vector<16x48xf32> to vector<16xf32>
    %26 = vector.shape_cast %25 : vector<16xf32> to vector<16x1xf32>
    %27 = vector.broadcast %26 : vector<16x1xf32> to vector<16x48xf32>
    %28 = arith.subf %24, %27 : vector<16x48xf32>
    %29 = math.exp %28 : vector<16x48xf32>
    %cst_13 = arith.constant dense<0.000000e+00> : vector<16xf32>
    %30 = vector.multi_reduction <add>, %29, %cst_13 [1] : vector<16x48xf32> to vector<16xf32>
    %31 = vector.shape_cast %30 : vector<16xf32> to vector<16x1xf32>
    %32 = tpu.reciprocal %31 {approx = true} : vector<16x1xf32> -> vector<16x1xf32>
    %33 = vector.broadcast %32 : vector<16x1xf32> to vector<16x48xf32>
    %34 = arith.mulf %29, %33 : vector<16x48xf32>
    %35 = arith.truncf %34 : vector<16x48xf32> to vector<16x48xbf16>
    %cst_14 = arith.constant dense<0.000000e+00> : vector<16x16xf32>
    %36 = tpu.matmul %35, %17, %cst_14 {dimension_numbers = #tpu.dot_dimension_numbers<[1], [0], [0], [1], [0, 0, 1, 1], [], []>} : vector<16x48xbf16>, vector<48x16xbf16>, vector<16x16xf32> -> vector<16x16xf32>
    %37 = arith.truncf %36 : vector<16x16xf32> to vector<16x16xbf16>
    %c0_15 = arith.constant 0 : index
    %c0_16 = arith.constant 0 : index
    %38 = vector.load %arg3[%c0_15, %c0_16] : memref<64x64xbf16, #tpu.memory_space<vmem>>, vector<16x64xbf16>
    %cst_17 = arith.constant dense<0.000000e+00> : vector<16x64xf32>
    %39 = tpu.matmul %37, %38, %cst_17 {dimension_numbers = #tpu.dot_dimension_numbers<[1], [0], [0], [1], [0, 0, 1, 1], [], []>} : vector<16x16xbf16>, vector<16x64xbf16>, vector<16x64xf32> -> vector<16x64xf32>
    %40 = arith.addf %12, %39 : vector<16x64xf32>
    %41 = vector.extract_strided_slice %4 {offsets = [0, 16], sizes = [16, 16], strides = [1, 1]} : vector<16x192xbf16> to vector<16x16xbf16>
    %c0_18 = arith.constant 0 : index
    %c0_19 = arith.constant 0 : index
    %c80 = arith.constant 80 : index
    %42 = vector.load %arg2[%c0_18, %c0_19, %c80] : memref<1x48x192xbf16, #tpu.memory_space<vmem>>, vector<1x48x16xbf16>
    %43 = vector.shape_cast %42 : vector<1x48x16xbf16> to vector<48x16xbf16>
    %c0_20 = arith.constant 0 : index
    %c0_21 = arith.constant 0 : index
    %c144 = arith.constant 144 : index
    %44 = vector.load %arg2[%c0_20, %c0_21, %c144] : memref<1x48x192xbf16, #tpu.memory_space<vmem>>, vector<1x48x16xbf16>
    %45 = vector.shape_cast %44 : vector<1x48x16xbf16> to vector<48x16xbf16>
    %cst_22 = arith.constant dense<0.000000e+00> : vector<16x48xf32>
    %46 = tpu.matmul %41, %43, %cst_22 {dimension_numbers = #tpu.dot_dimension_numbers<[1], [1], [0], [0], [0, 0, 1, 0], [], []>} : vector<16x16xbf16>, vector<48x16xbf16>, vector<16x48xf32> -> vector<16x48xf32>
    %cst_23 = arith.constant 2.500000e-01 : f32
    %47 = vector.broadcast %cst_23 : f32 to vector<16x48xf32>
    %48 = arith.mulf %46, %47 : vector<16x48xf32>
    %cst_24 = arith.constant -1.000000e+30 : f32
    %49 = vector.shape_cast %7 : vector<1x48xi1> to vector<1x48xi1>
    %50 = vector.broadcast %49 : vector<1x48xi1> to vector<16x48xi1>
    %51 = vector.broadcast %cst_24 : f32 to vector<16x48xf32>
    %52 = arith.select %50, %48, %51 : vector<16x48xi1>, vector<16x48xf32>
    %cst_25 = arith.constant dense<0xFF800000> : vector<16xf32>
    %53 = vector.multi_reduction <maximumf>, %52, %cst_25 [1] : vector<16x48xf32> to vector<16xf32>
    %54 = vector.shape_cast %53 : vector<16xf32> to vector<16x1xf32>
    %55 = vector.broadcast %54 : vector<16x1xf32> to vector<16x48xf32>
    %56 = arith.subf %52, %55 : vector<16x48xf32>
    %57 = math.exp %56 : vector<16x48xf32>
    %cst_26 = arith.constant dense<0.000000e+00> : vector<16xf32>
    %58 = vector.multi_reduction <add>, %57, %cst_26 [1] : vector<16x48xf32> to vector<16xf32>
    %59 = vector.shape_cast %58 : vector<16xf32> to vector<16x1xf32>
    %60 = tpu.reciprocal %59 {approx = true} : vector<16x1xf32> -> vector<16x1xf32>
    %61 = vector.broadcast %60 : vector<16x1xf32> to vector<16x48xf32>
    %62 = arith.mulf %57, %61 : vector<16x48xf32>
    %63 = arith.truncf %62 : vector<16x48xf32> to vector<16x48xbf16>
    %cst_27 = arith.constant dense<0.000000e+00> : vector<16x16xf32>
    %64 = tpu.matmul %63, %45, %cst_27 {dimension_numbers = #tpu.dot_dimension_numbers<[1], [0], [0], [1], [0, 0, 1, 1], [], []>} : vector<16x48xbf16>, vector<48x16xbf16>, vector<16x16xf32> -> vector<16x16xf32>
    %65 = arith.truncf %64 : vector<16x16xf32> to vector<16x16xbf16>
    %c16 = arith.constant 16 : index
    %c0_28 = arith.constant 0 : index
    %66 = vector.load %arg3[%c16, %c0_28] : memref<64x64xbf16, #tpu.memory_space<vmem>>, vector<16x64xbf16>
    %cst_29 = arith.constant dense<0.000000e+00> : vector<16x64xf32>
    %67 = tpu.matmul %65, %66, %cst_29 {dimension_numbers = #tpu.dot_dimension_numbers<[1], [0], [0], [1], [0, 0, 1, 1], [], []>} : vector<16x16xbf16>, vector<16x64xbf16>, vector<16x64xf32> -> vector<16x64xf32>
    %68 = arith.addf %40, %67 : vector<16x64xf32>
    %69 = vector.extract_strided_slice %4 {offsets = [0, 32], sizes = [16, 16], strides = [1, 1]} : vector<16x192xbf16> to vector<16x16xbf16>
    %c0_30 = arith.constant 0 : index
    %c0_31 = arith.constant 0 : index
    %c96 = arith.constant 96 : index
    %70 = vector.load %arg2[%c0_30, %c0_31, %c96] : memref<1x48x192xbf16, #tpu.memory_space<vmem>>, vector<1x48x16xbf16>
    %71 = vector.shape_cast %70 : vector<1x48x16xbf16> to vector<48x16xbf16>
    %c0_32 = arith.constant 0 : index
    %c0_33 = arith.constant 0 : index
    %c160 = arith.constant 160 : index
    %72 = vector.load %arg2[%c0_32, %c0_33, %c160] : memref<1x48x192xbf16, #tpu.memory_space<vmem>>, vector<1x48x16xbf16>
    %73 = vector.shape_cast %72 : vector<1x48x16xbf16> to vector<48x16xbf16>
    %cst_34 = arith.constant dense<0.000000e+00> : vector<16x48xf32>
    %74 = tpu.matmul %69, %71, %cst_34 {dimension_numbers = #tpu.dot_dimension_numbers<[1], [1], [0], [0], [0, 0, 1, 0], [], []>} : vector<16x16xbf16>, vector<48x16xbf16>, vector<16x48xf32> -> vector<16x48xf32>
    %cst_35 = arith.constant 2.500000e-01 : f32
    %75 = vector.broadcast %cst_35 : f32 to vector<16x48xf32>
    %76 = arith.mulf %74, %75 : vector<16x48xf32>
    %cst_36 = arith.constant -1.000000e+30 : f32
    %77 = vector.shape_cast %7 : vector<1x48xi1> to vector<1x48xi1>
    %78 = vector.broadcast %77 : vector<1x48xi1> to vector<16x48xi1>
    %79 = vector.broadcast %cst_36 : f32 to vector<16x48xf32>
    %80 = arith.select %78, %76, %79 : vector<16x48xi1>, vector<16x48xf32>
    %cst_37 = arith.constant dense<0xFF800000> : vector<16xf32>
    %81 = vector.multi_reduction <maximumf>, %80, %cst_37 [1] : vector<16x48xf32> to vector<16xf32>
    %82 = vector.shape_cast %81 : vector<16xf32> to vector<16x1xf32>
    %83 = vector.broadcast %82 : vector<16x1xf32> to vector<16x48xf32>
    %84 = arith.subf %80, %83 : vector<16x48xf32>
    %85 = math.exp %84 : vector<16x48xf32>
    %cst_38 = arith.constant dense<0.000000e+00> : vector<16xf32>
    %86 = vector.multi_reduction <add>, %85, %cst_38 [1] : vector<16x48xf32> to vector<16xf32>
    %87 = vector.shape_cast %86 : vector<16xf32> to vector<16x1xf32>
    %88 = tpu.reciprocal %87 {approx = true} : vector<16x1xf32> -> vector<16x1xf32>
    %89 = vector.broadcast %88 : vector<16x1xf32> to vector<16x48xf32>
    %90 = arith.mulf %85, %89 : vector<16x48xf32>
    %91 = arith.truncf %90 : vector<16x48xf32> to vector<16x48xbf16>
    %cst_39 = arith.constant dense<0.000000e+00> : vector<16x16xf32>
    %92 = tpu.matmul %91, %73, %cst_39 {dimension_numbers = #tpu.dot_dimension_numbers<[1], [0], [0], [1], [0, 0, 1, 1], [], []>} : vector<16x48xbf16>, vector<48x16xbf16>, vector<16x16xf32> -> vector<16x16xf32>
    %93 = arith.truncf %92 : vector<16x16xf32> to vector<16x16xbf16>
    %c32 = arith.constant 32 : index
    %c0_40 = arith.constant 0 : index
    %94 = vector.load %arg3[%c32, %c0_40] : memref<64x64xbf16, #tpu.memory_space<vmem>>, vector<16x64xbf16>
    %cst_41 = arith.constant dense<0.000000e+00> : vector<16x64xf32>
    %95 = tpu.matmul %93, %94, %cst_41 {dimension_numbers = #tpu.dot_dimension_numbers<[1], [0], [0], [1], [0, 0, 1, 1], [], []>} : vector<16x16xbf16>, vector<16x64xbf16>, vector<16x64xf32> -> vector<16x64xf32>
    %96 = arith.addf %68, %95 : vector<16x64xf32>
    %97 = vector.extract_strided_slice %4 {offsets = [0, 48], sizes = [16, 16], strides = [1, 1]} : vector<16x192xbf16> to vector<16x16xbf16>
    %c0_42 = arith.constant 0 : index
    %c0_43 = arith.constant 0 : index
    %c112 = arith.constant 112 : index
    %98 = vector.load %arg2[%c0_42, %c0_43, %c112] : memref<1x48x192xbf16, #tpu.memory_space<vmem>>, vector<1x48x16xbf16>
    %99 = vector.shape_cast %98 : vector<1x48x16xbf16> to vector<48x16xbf16>
    %c0_44 = arith.constant 0 : index
    %c0_45 = arith.constant 0 : index
    %c176 = arith.constant 176 : index
    %100 = vector.load %arg2[%c0_44, %c0_45, %c176] : memref<1x48x192xbf16, #tpu.memory_space<vmem>>, vector<1x48x16xbf16>
    %101 = vector.shape_cast %100 : vector<1x48x16xbf16> to vector<48x16xbf16>
    %cst_46 = arith.constant dense<0.000000e+00> : vector<16x48xf32>
    %102 = tpu.matmul %97, %99, %cst_46 {dimension_numbers = #tpu.dot_dimension_numbers<[1], [1], [0], [0], [0, 0, 1, 0], [], []>} : vector<16x16xbf16>, vector<48x16xbf16>, vector<16x48xf32> -> vector<16x48xf32>
    %cst_47 = arith.constant 2.500000e-01 : f32
    %103 = vector.broadcast %cst_47 : f32 to vector<16x48xf32>
    %104 = arith.mulf %102, %103 : vector<16x48xf32>
    %cst_48 = arith.constant -1.000000e+30 : f32
    %105 = vector.shape_cast %7 : vector<1x48xi1> to vector<1x48xi1>
    %106 = vector.broadcast %105 : vector<1x48xi1> to vector<16x48xi1>
    %107 = vector.broadcast %cst_48 : f32 to vector<16x48xf32>
    %108 = arith.select %106, %104, %107 : vector<16x48xi1>, vector<16x48xf32>
    %cst_49 = arith.constant dense<0xFF800000> : vector<16xf32>
    %109 = vector.multi_reduction <maximumf>, %108, %cst_49 [1] : vector<16x48xf32> to vector<16xf32>
    %110 = vector.shape_cast %109 : vector<16xf32> to vector<16x1xf32>
    %111 = vector.broadcast %110 : vector<16x1xf32> to vector<16x48xf32>
    %112 = arith.subf %108, %111 : vector<16x48xf32>
    %113 = math.exp %112 : vector<16x48xf32>
    %cst_50 = arith.constant dense<0.000000e+00> : vector<16xf32>
    %114 = vector.multi_reduction <add>, %113, %cst_50 [1] : vector<16x48xf32> to vector<16xf32>
    %115 = vector.shape_cast %114 : vector<16xf32> to vector<16x1xf32>
    %116 = tpu.reciprocal %115 {approx = true} : vector<16x1xf32> -> vector<16x1xf32>
    %117 = vector.broadcast %116 : vector<16x1xf32> to vector<16x48xf32>
    %118 = arith.mulf %113, %117 : vector<16x48xf32>
    %119 = arith.truncf %118 : vector<16x48xf32> to vector<16x48xbf16>
    %cst_51 = arith.constant dense<0.000000e+00> : vector<16x16xf32>
    %120 = tpu.matmul %119, %101, %cst_51 {dimension_numbers = #tpu.dot_dimension_numbers<[1], [0], [0], [1], [0, 0, 1, 1], [], []>} : vector<16x48xbf16>, vector<48x16xbf16>, vector<16x16xf32> -> vector<16x16xf32>
    %121 = arith.truncf %120 : vector<16x16xf32> to vector<16x16xbf16>
    %c48 = arith.constant 48 : index
    %c0_52 = arith.constant 0 : index
    %122 = vector.load %arg3[%c48, %c0_52] : memref<64x64xbf16, #tpu.memory_space<vmem>>, vector<16x64xbf16>
    %cst_53 = arith.constant dense<0.000000e+00> : vector<16x64xf32>
    %123 = tpu.matmul %121, %122, %cst_53 {dimension_numbers = #tpu.dot_dimension_numbers<[1], [0], [0], [1], [0, 0, 1, 1], [], []>} : vector<16x16xbf16>, vector<16x64xbf16>, vector<16x64xf32> -> vector<16x64xf32>
    %124 = arith.addf %96, %123 : vector<16x64xf32>
    %c0_54 = arith.constant 0 : index
    %c0_55 = arith.constant 0 : index
    %c0_56 = arith.constant 0 : index
    %125 = vector.load %arg6[%c0_54, %c0_55, %c0_56] : memref<1x16x64xf32, #tpu.memory_space<vmem>>, vector<1x16x64xf32>
    %126 = vector.shape_cast %125 : vector<1x16x64xf32> to vector<16x64xf32>
    %127 = vector.shape_cast %124 : vector<16x64xf32> to vector<1x16x64xf32>
    tpu.vector_store %arg6[%c0_54, %c0_55, %c0_56], %127 {strides = array<i32>} : memref<1x16x64xf32, #tpu.memory_space<vmem>>, vector<1x16x64xf32>,
    return
  }
  func.func @transform_0(%arg0: i32, %arg1: i32) -> (i32, i32, i32) {
    %c0_i32 = arith.constant 0 : i32
    %c0_i32_0 = arith.constant 0 : i32
    %c0_i32_1 = arith.constant 0 : i32
    return %arg0, %c0_i32, %c0_i32_0 : i32, i32, i32
  }
  func.func @transform_1(%arg0: i32, %arg1: i32) -> (i32, i32) {
    %c0_i32 = arith.constant 0 : i32
    %c0_i32_0 = arith.constant 0 : i32
    %c0_i32_1 = arith.constant 0 : i32
    return %c0_i32, %c0_i32_0 : i32, i32
  }
  func.func @transform_2(%arg0: i32, %arg1: i32) -> (i32, i32) {
    %c0_i32 = arith.constant 0 : i32
    %c0_i32_0 = arith.constant 0 : i32
    %c0_i32_1 = arith.constant 0 : i32
    return %c0_i32, %c0_i32_0 : i32, i32
  }
  func.func @transform_3(%arg0: i32, %arg1: i32) -> (i32, i32, i32) {
    %c0_i32 = arith.constant 0 : i32
    %c0_i32_0 = arith.constant 0 : i32
    return %arg0, %arg1, %c0_i32 : i32, i32, i32
  }
  func.func @transform_4(%arg0: i32, %arg1: i32) -> (i32, i32, i32) {
    %c0_i32 = arith.constant 0 : i32
    %c0_i32_0 = arith.constant 0 : i32
    return %arg0, %arg1, %c0_i32 : i32, i32, i32
  }
}

module attributes {stable_mosaic.version = 11 : i64} {
  func.func @_ln_linear_kernel(%arg0: i32, %arg1: memref<96x64xf32, #tpu.memory_space<vmem>>, %arg2: memref<1x64xf32, #tpu.memory_space<vmem>>, %arg3: memref<1x64xf32, #tpu.memory_space<vmem>>, %arg4: memref<64x192xbf16, #tpu.memory_space<vmem>>, %arg5: memref<1x192xf32, #tpu.memory_space<vmem>>, %arg6: memref<96x192xbf16, #tpu.memory_space<vmem>>) attributes {dimension_semantics = [#tpu.dimension_semantics<parallel>], iteration_bounds = array<i64: 1>, scalar_prefetch = 0 : i64, scratch_operands = 0 : i64, tpu.core_type = #tpu.core_type<tc>, window_params = [{transform_indices = @transform_0, window_bounds = array<i64: 96, 64>}, {pipeline_mode = #tpu.pipeline_mode<synchronous>, transform_indices = @transform_1, window_bounds = array<i64: 1, 64>}, {pipeline_mode = #tpu.pipeline_mode<synchronous>, transform_indices = @transform_2, window_bounds = array<i64: 1, 64>}, {pipeline_mode = #tpu.pipeline_mode<synchronous>, transform_indices = @transform_3, window_bounds = array<i64: 64, 192>}, {pipeline_mode = #tpu.pipeline_mode<synchronous>, transform_indices = @transform_4, window_bounds = array<i64: 1, 192>}, {transform_indices = @transform_5, window_bounds = array<i64: 96, 192>}]} {
    %c0 = arith.constant 0 : index
    %c0_0 = arith.constant 0 : index
    %0 = vector.load %arg1[%c0, %c0_0] : memref<96x64xf32, #tpu.memory_space<vmem>>, vector<96x64xf32>
    %cst = arith.constant dense<0.000000e+00> : vector<96xf32>
    %1 = vector.multi_reduction <add>, %0, %cst [1] : vector<96x64xf32> to vector<96xf32>
    %2 = vector.shape_cast %1 : vector<96xf32> to vector<96x1xf32>
    %cst_1 = arith.constant 6.400000e+01 : f32
    %3 = vector.broadcast %cst_1 : f32 to vector<96x1xf32>
    %4 = arith.divf %2, %3 : vector<96x1xf32>
    %5 = vector.broadcast %4 : vector<96x1xf32> to vector<96x64xf32>
    %6 = arith.subf %0, %5 : vector<96x64xf32>
    %7 = arith.mulf %6, %6 : vector<96x64xf32>
    %cst_2 = arith.constant dense<0.000000e+00> : vector<96xf32>
    %8 = vector.multi_reduction <add>, %7, %cst_2 [1] : vector<96x64xf32> to vector<96xf32>
    %9 = vector.shape_cast %8 : vector<96xf32> to vector<96x1xf32>
    %cst_3 = arith.constant 6.400000e+01 : f32
    %10 = vector.broadcast %cst_3 : f32 to vector<96x1xf32>
    %11 = arith.divf %9, %10 : vector<96x1xf32>
    %12 = vector.broadcast %4 : vector<96x1xf32> to vector<96x64xf32>
    %13 = arith.subf %0, %12 : vector<96x64xf32>
    %cst_4 = arith.constant 9.99999974E-6 : f32
    %14 = vector.broadcast %cst_4 : f32 to vector<96x1xf32>
    %15 = arith.addf %11, %14 : vector<96x1xf32>
    %16 = math.rsqrt %15 : vector<96x1xf32>
    %17 = vector.broadcast %16 : vector<96x1xf32> to vector<96x64xf32>
    %18 = arith.mulf %13, %17 : vector<96x64xf32>
    %c0_5 = arith.constant 0 : index
    %c0_6 = arith.constant 0 : index
    %19 = vector.load %arg2[%c0_5, %c0_6] : memref<1x64xf32, #tpu.memory_space<vmem>>, vector<1x64xf32>
    %20 = vector.broadcast %19 : vector<1x64xf32> to vector<96x64xf32>
    %21 = arith.mulf %18, %20 : vector<96x64xf32>
    %c0_7 = arith.constant 0 : index
    %c0_8 = arith.constant 0 : index
    %22 = vector.load %arg3[%c0_7, %c0_8] : memref<1x64xf32, #tpu.memory_space<vmem>>, vector<1x64xf32>
    %23 = vector.broadcast %22 : vector<1x64xf32> to vector<96x64xf32>
    %24 = arith.addf %21, %23 : vector<96x64xf32>
    %25 = arith.truncf %24 : vector<96x64xf32> to vector<96x64xbf16>
    %c0_9 = arith.constant 0 : index
    %c0_10 = arith.constant 0 : index
    %26 = vector.load %arg4[%c0_9, %c0_10] : memref<64x192xbf16, #tpu.memory_space<vmem>>, vector<64x192xbf16>
    %cst_11 = arith.constant dense<0.000000e+00> : vector<96x192xf32>
    %27 = tpu.matmul %25, %26, %cst_11 {dimension_numbers = #tpu.dot_dimension_numbers<[1], [0], [0], [1], [0, 0, 1, 1], [], []>} : vector<96x64xbf16>, vector<64x192xbf16>, vector<96x192xf32> -> vector<96x192xf32>
    %c0_12 = arith.constant 0 : index
    %c0_13 = arith.constant 0 : index
    %28 = vector.load %arg5[%c0_12, %c0_13] : memref<1x192xf32, #tpu.memory_space<vmem>>, vector<1x192xf32>
    %29 = vector.broadcast %28 : vector<1x192xf32> to vector<96x192xf32>
    %30 = arith.addf %27, %29 : vector<96x192xf32>
    %31 = arith.truncf %30 : vector<96x192xf32> to vector<96x192xbf16>
    %c0_14 = arith.constant 0 : index
    %c0_15 = arith.constant 0 : index
    %32 = vector.load %arg6[%c0_14, %c0_15] : memref<96x192xbf16, #tpu.memory_space<vmem>>, vector<96x192xbf16>
    tpu.vector_store %arg6[%c0_14, %c0_15], %31 {strides = array<i32>} : memref<96x192xbf16, #tpu.memory_space<vmem>>, vector<96x192xbf16>,
    return
  }
  func.func @transform_0(%arg0: i32) -> (i32, i32) {
    %c0_i32 = arith.constant 0 : i32
    %c0_i32_0 = arith.constant 0 : i32
    return %arg0, %c0_i32 : i32, i32
  }
  func.func @transform_1(%arg0: i32) -> (i32, i32) {
    %c0_i32 = arith.constant 0 : i32
    %c0_i32_0 = arith.constant 0 : i32
    %c0_i32_1 = arith.constant 0 : i32
    return %c0_i32, %c0_i32_0 : i32, i32
  }
  func.func @transform_2(%arg0: i32) -> (i32, i32) {
    %c0_i32 = arith.constant 0 : i32
    %c0_i32_0 = arith.constant 0 : i32
    %c0_i32_1 = arith.constant 0 : i32
    return %c0_i32, %c0_i32_0 : i32, i32
  }
  func.func @transform_3(%arg0: i32) -> (i32, i32) {
    %c0_i32 = arith.constant 0 : i32
    %c0_i32_0 = arith.constant 0 : i32
    %c0_i32_1 = arith.constant 0 : i32
    return %c0_i32, %c0_i32_0 : i32, i32
  }
  func.func @transform_4(%arg0: i32) -> (i32, i32) {
    %c0_i32 = arith.constant 0 : i32
    %c0_i32_0 = arith.constant 0 : i32
    %c0_i32_1 = arith.constant 0 : i32
    return %c0_i32, %c0_i32_0 : i32, i32
  }
  func.func @transform_5(%arg0: i32) -> (i32, i32) {
    %c0_i32 = arith.constant 0 : i32
    %c0_i32_0 = arith.constant 0 : i32
    return %arg0, %c0_i32 : i32, i32
  }
}

module attributes {stable_mosaic.version = 11 : i64} {
  func.func @_ln_mlp_resid_kernel(%arg0: i32, %arg1: i32, %arg2: memref<96x64xf32, #tpu.memory_space<vmem>>, %arg3: memref<1x64xf32, #tpu.memory_space<vmem>>, %arg4: memref<1x64xf32, #tpu.memory_space<vmem>>, %arg5: memref<64x256xbf16, #tpu.memory_space<vmem>>, %arg6: memref<1x256xf32, #tpu.memory_space<vmem>>, %arg7: memref<256x64xbf16, #tpu.memory_space<vmem>>, %arg8: memref<1x64xf32, #tpu.memory_space<vmem>>, %arg9: memref<96x64xf32, #tpu.memory_space<vmem>>, %arg10: memref<96x64xbf16, #tpu.memory_space<vmem>>) attributes {dimension_semantics = [#tpu.dimension_semantics<parallel>, #tpu.dimension_semantics<arbitrary>], iteration_bounds = array<i64: 1, 1>, scalar_prefetch = 0 : i64, scratch_operands = 1 : i64, tpu.core_type = #tpu.core_type<tc>, window_params = [{transform_indices = @transform_0, window_bounds = array<i64: 96, 64>}, {pipeline_mode = #tpu.pipeline_mode<synchronous>, transform_indices = @transform_1, window_bounds = array<i64: 1, 64>}, {pipeline_mode = #tpu.pipeline_mode<synchronous>, transform_indices = @transform_2, window_bounds = array<i64: 1, 64>}, {transform_indices = @transform_3, window_bounds = array<i64: 64, 256>}, {transform_indices = @transform_4, window_bounds = array<i64: 1, 256>}, {transform_indices = @transform_5, window_bounds = array<i64: 256, 64>}, {pipeline_mode = #tpu.pipeline_mode<synchronous>, transform_indices = @transform_6, window_bounds = array<i64: 1, 64>}, {transform_indices = @transform_7, window_bounds = array<i64: 96, 64>}]} {
    %c0_i32 = arith.constant 0 : i32
    %0 = arith.cmpi eq, %arg1, %c0_i32 : i32
    %1 = arith.extui %0 : i1 to i32
    %c0_i32_0 = arith.constant 0 : i32
    %2 = arith.cmpi ne, %1, %c0_i32_0 : i32
    scf.if %2 {
      %c0_15 = arith.constant 0 : index
      %c0_16 = arith.constant 0 : index
      %23 = vector.load %arg2[%c0_15, %c0_16] : memref<96x64xf32, #tpu.memory_space<vmem>>, vector<96x64xf32>
      %cst_17 = arith.constant dense<0.000000e+00> : vector<96xf32>
      %24 = vector.multi_reduction <add>, %23, %cst_17 [1] : vector<96x64xf32> to vector<96xf32>
      %25 = vector.shape_cast %24 : vector<96xf32> to vector<96x1xf32>
      %cst_18 = arith.constant 6.400000e+01 : f32
      %26 = vector.broadcast %cst_18 : f32 to vector<96x1xf32>
      %27 = arith.divf %25, %26 : vector<96x1xf32>
      %28 = vector.broadcast %27 : vector<96x1xf32> to vector<96x64xf32>
      %29 = arith.subf %23, %28 : vector<96x64xf32>
      %30 = arith.mulf %29, %29 : vector<96x64xf32>
      %cst_19 = arith.constant dense<0.000000e+00> : vector<96xf32>
      %31 = vector.multi_reduction <add>, %30, %cst_19 [1] : vector<96x64xf32> to vector<96xf32>
      %32 = vector.shape_cast %31 : vector<96xf32> to vector<96x1xf32>
      %cst_20 = arith.constant 6.400000e+01 : f32
      %33 = vector.broadcast %cst_20 : f32 to vector<96x1xf32>
      %34 = arith.divf %32, %33 : vector<96x1xf32>
      %35 = vector.broadcast %27 : vector<96x1xf32> to vector<96x64xf32>
      %36 = arith.subf %23, %35 : vector<96x64xf32>
      %cst_21 = arith.constant 9.99999974E-6 : f32
      %37 = vector.broadcast %cst_21 : f32 to vector<96x1xf32>
      %38 = arith.addf %34, %37 : vector<96x1xf32>
      %39 = math.rsqrt %38 : vector<96x1xf32>
      %40 = vector.broadcast %39 : vector<96x1xf32> to vector<96x64xf32>
      %41 = arith.mulf %36, %40 : vector<96x64xf32>
      %c0_22 = arith.constant 0 : index
      %c0_23 = arith.constant 0 : index
      %42 = vector.load %arg3[%c0_22, %c0_23] : memref<1x64xf32, #tpu.memory_space<vmem>>, vector<1x64xf32>
      %43 = vector.broadcast %42 : vector<1x64xf32> to vector<96x64xf32>
      %44 = arith.mulf %41, %43 : vector<96x64xf32>
      %c0_24 = arith.constant 0 : index
      %c0_25 = arith.constant 0 : index
      %45 = vector.load %arg4[%c0_24, %c0_25] : memref<1x64xf32, #tpu.memory_space<vmem>>, vector<1x64xf32>
      %46 = vector.broadcast %45 : vector<1x64xf32> to vector<96x64xf32>
      %47 = arith.addf %44, %46 : vector<96x64xf32>
      %48 = arith.truncf %47 : vector<96x64xf32> to vector<96x64xbf16>
      %c0_26 = arith.constant 0 : index
      %c0_27 = arith.constant 0 : index
      %49 = vector.load %arg10[%c0_26, %c0_27] : memref<96x64xbf16, #tpu.memory_space<vmem>>, vector<96x64xbf16>
      tpu.vector_store %arg10[%c0_26, %c0_27], %48 {strides = array<i32>} : memref<96x64xbf16, #tpu.memory_space<vmem>>, vector<96x64xbf16>,
      %c0_28 = arith.constant 0 : index
      %c0_29 = arith.constant 0 : index
      %50 = vector.load %arg8[%c0_28, %c0_29] : memref<1x64xf32, #tpu.memory_space<vmem>>, vector<1x64xf32>
      %51 = vector.broadcast %50 : vector<1x64xf32> to vector<96x64xf32>
      %52 = arith.addf %23, %51 : vector<96x64xf32>
      %c0_30 = arith.constant 0 : index
      %c0_31 = arith.constant 0 : index
      %53 = vector.load %arg9[%c0_30, %c0_31] : memref<96x64xf32, #tpu.memory_space<vmem>>, vector<96x64xf32>
      tpu.vector_store %arg9[%c0_30, %c0_31], %52 {strides = array<i32>} : memref<96x64xf32, #tpu.memory_space<vmem>>, vector<96x64xf32>,
    } else {
    }
    %c0 = arith.constant 0 : index
    %c0_1 = arith.constant 0 : index
    %3 = vector.load %arg10[%c0, %c0_1] : memref<96x64xbf16, #tpu.memory_space<vmem>>, vector<96x64xbf16>
    %c0_2 = arith.constant 0 : index
    %c0_3 = arith.constant 0 : index
    %4 = vector.load %arg5[%c0_2, %c0_3] : memref<64x256xbf16, #tpu.memory_space<vmem>>, vector<64x256xbf16>
    %cst = arith.constant dense<0.000000e+00> : vector<96x256xf32>
    %5 = tpu.matmul %3, %4, %cst {dimension_numbers = #tpu.dot_dimension_numbers<[1], [0], [0], [1], [0, 0, 1, 1], [], []>} : vector<96x64xbf16>, vector<64x256xbf16>, vector<96x256xf32> -> vector<96x256xf32>
    %c0_4 = arith.constant 0 : index
    %c0_5 = arith.constant 0 : index
    %6 = vector.load %arg6[%c0_4, %c0_5] : memref<1x256xf32, #tpu.memory_space<vmem>>, vector<1x256xf32>
    %7 = vector.broadcast %6 : vector<1x256xf32> to vector<96x256xf32>
    %8 = arith.addf %5, %7 : vector<96x256xf32>
    %cst_6 = arith.constant 1.702000e+00 : f32
    %9 = vector.broadcast %cst_6 : f32 to vector<96x256xf32>
    %10 = arith.mulf %9, %8 : vector<96x256xf32>
    %11 = arith.negf %10 : vector<96x256xf32>
    %12 = math.exp %11 : vector<96x256xf32>
    %cst_7 = arith.constant 1.000000e+00 : f32
    %13 = vector.broadcast %cst_7 : f32 to vector<96x256xf32>
    %14 = arith.addf %13, %12 : vector<96x256xf32>
    %15 = arith.divf %13, %14 : vector<96x256xf32>
    %16 = arith.mulf %8, %15 : vector<96x256xf32>
    %c0_8 = arith.constant 0 : index
    %c0_9 = arith.constant 0 : index
    %17 = vector.load %arg9[%c0_8, %c0_9] : memref<96x64xf32, #tpu.memory_space<vmem>>, vector<96x64xf32>
    %18 = arith.truncf %16 : vector<96x256xf32> to vector<96x256xbf16>
    %c0_10 = arith.constant 0 : index
    %c0_11 = arith.constant 0 : index
    %19 = vector.load %arg7[%c0_10, %c0_11] : memref<256x64xbf16, #tpu.memory_space<vmem>>, vector<256x64xbf16>
    %cst_12 = arith.constant dense<0.000000e+00> : vector<96x64xf32>
    %20 = tpu.matmul %18, %19, %cst_12 {dimension_numbers = #tpu.dot_dimension_numbers<[1], [0], [0], [1], [0, 0, 1, 1], [], []>} : vector<96x256xbf16>, vector<256x64xbf16>, vector<96x64xf32> -> vector<96x64xf32>
    %21 = arith.addf %17, %20 : vector<96x64xf32>
    %c0_13 = arith.constant 0 : index
    %c0_14 = arith.constant 0 : index
    %22 = vector.load %arg9[%c0_13, %c0_14] : memref<96x64xf32, #tpu.memory_space<vmem>>, vector<96x64xf32>
    tpu.vector_store %arg9[%c0_13, %c0_14], %21 {strides = array<i32>} : memref<96x64xf32, #tpu.memory_space<vmem>>, vector<96x64xf32>,
    return
  }
  func.func @transform_0(%arg0: i32, %arg1: i32) -> (i32, i32) {
    %c0_i32 = arith.constant 0 : i32
    %c0_i32_0 = arith.constant 0 : i32
    return %arg0, %c0_i32 : i32, i32
  }
  func.func @transform_1(%arg0: i32, %arg1: i32) -> (i32, i32) {
    %c0_i32 = arith.constant 0 : i32
    %c0_i32_0 = arith.constant 0 : i32
    %c0_i32_1 = arith.constant 0 : i32
    return %c0_i32, %c0_i32_0 : i32, i32
  }
  func.func @transform_2(%arg0: i32, %arg1: i32) -> (i32, i32) {
    %c0_i32 = arith.constant 0 : i32
    %c0_i32_0 = arith.constant 0 : i32
    %c0_i32_1 = arith.constant 0 : i32
    return %c0_i32, %c0_i32_0 : i32, i32
  }
  func.func @transform_3(%arg0: i32, %arg1: i32) -> (i32, i32) {
    %c0_i32 = arith.constant 0 : i32
    %c0_i32_0 = arith.constant 0 : i32
    return %c0_i32, %arg1 : i32, i32
  }
  func.func @transform_4(%arg0: i32, %arg1: i32) -> (i32, i32) {
    %c0_i32 = arith.constant 0 : i32
    %c0_i32_0 = arith.constant 0 : i32
    return %c0_i32, %arg1 : i32, i32
  }
  func.func @transform_5(%arg0: i32, %arg1: i32) -> (i32, i32) {
    %c0_i32 = arith.constant 0 : i32
    %c0_i32_0 = arith.constant 0 : i32
    return %arg1, %c0_i32 : i32, i32
  }
  func.func @transform_6(%arg0: i32, %arg1: i32) -> (i32, i32) {
    %c0_i32 = arith.constant 0 : i32
    %c0_i32_0 = arith.constant 0 : i32
    %c0_i32_1 = arith.constant 0 : i32
    return %c0_i32, %c0_i32_0 : i32, i32
  }
  func.func @transform_7(%arg0: i32, %arg1: i32) -> (i32, i32) {
    %c0_i32 = arith.constant 0 : i32
    %c0_i32_0 = arith.constant 0 : i32
    return %arg0, %c0_i32 : i32, i32
  }
}

module attributes {stable_mosaic.version = 11 : i64} {
  func.func @_linear_kernel(%arg0: i32, %arg1: memref<2x64xf32, #tpu.memory_space<vmem>>, %arg2: memref<64x32xbf16, #tpu.memory_space<vmem>>, %arg3: memref<1x32xf32, #tpu.memory_space<vmem>>, %arg4: memref<2x32xf32, #tpu.memory_space<vmem>>) attributes {dimension_semantics = [#tpu.dimension_semantics<parallel>], iteration_bounds = array<i64: 1>, scalar_prefetch = 0 : i64, scratch_operands = 0 : i64, tpu.core_type = #tpu.core_type<tc>, window_params = [{transform_indices = @transform_0, window_bounds = array<i64: 2, 64>}, {pipeline_mode = #tpu.pipeline_mode<synchronous>, transform_indices = @transform_1, window_bounds = array<i64: 64, 32>}, {pipeline_mode = #tpu.pipeline_mode<synchronous>, transform_indices = @transform_2, window_bounds = array<i64: 1, 32>}, {transform_indices = @transform_3, window_bounds = array<i64: 2, 32>}]} {
    %c0 = arith.constant 0 : index
    %c0_0 = arith.constant 0 : index
    %0 = vector.load %arg1[%c0, %c0_0] : memref<2x64xf32, #tpu.memory_space<vmem>>, vector<2x64xf32>
    %1 = arith.truncf %0 : vector<2x64xf32> to vector<2x64xbf16>
    %c0_1 = arith.constant 0 : index
    %c0_2 = arith.constant 0 : index
    %2 = vector.load %arg2[%c0_1, %c0_2] : memref<64x32xbf16, #tpu.memory_space<vmem>>, vector<64x32xbf16>
    %cst = arith.constant dense<0.000000e+00> : vector<2x32xf32>
    %3 = tpu.matmul %1, %2, %cst {dimension_numbers = #tpu.dot_dimension_numbers<[1], [0], [0], [1], [0, 0, 1, 1], [], []>} : vector<2x64xbf16>, vector<64x32xbf16>, vector<2x32xf32> -> vector<2x32xf32>
    %c0_3 = arith.constant 0 : index
    %c0_4 = arith.constant 0 : index
    %4 = vector.load %arg3[%c0_3, %c0_4] : memref<1x32xf32, #tpu.memory_space<vmem>>, vector<1x32xf32>
    %5 = vector.broadcast %4 : vector<1x32xf32> to vector<2x32xf32>
    %6 = arith.addf %3, %5 : vector<2x32xf32>
    %c0_5 = arith.constant 0 : index
    %c0_6 = arith.constant 0 : index
    %7 = vector.load %arg4[%c0_5, %c0_6] : memref<2x32xf32, #tpu.memory_space<vmem>>, vector<2x32xf32>
    tpu.vector_store %arg4[%c0_5, %c0_6], %6 {strides = array<i32>} : memref<2x32xf32, #tpu.memory_space<vmem>>, vector<2x32xf32>,
    return
  }
  func.func @transform_0(%arg0: i32) -> (i32, i32) {
    %c0_i32 = arith.constant 0 : i32
    %c0_i32_0 = arith.constant 0 : i32
    return %arg0, %c0_i32 : i32, i32
  }
  func.func @transform_1(%arg0: i32) -> (i32, i32) {
    %c0_i32 = arith.constant 0 : i32
    %c0_i32_0 = arith.constant 0 : i32
    %c0_i32_1 = arith.constant 0 : i32
    return %c0_i32, %c0_i32_0 : i32, i32
  }
  func.func @transform_2(%arg0: i32) -> (i32, i32) {
    %c0_i32 = arith.constant 0 : i32
    %c0_i32_0 = arith.constant 0 : i32
    %c0_i32_1 = arith.constant 0 : i32
    return %c0_i32, %c0_i32_0 : i32, i32
  }
  func.func @transform_3(%arg0: i32) -> (i32, i32) {
    %c0_i32 = arith.constant 0 : i32
    %c0_i32_0 = arith.constant 0 : i32
    return %arg0, %c0_i32 : i32, i32
  }
}

</mosaic_0001>

<llo_original>
// kernel: visual_forward.11
$region0: #{visual_forward.11}
  #allocation0 [shape = 'u32[]', space=smem, size = 0x4, offset = 0x4, fixed_abs, tag = 'smem constant byte address 0x4 - core index']
  #allocation1 [shape = 'u32[72,128]{1,0:T(1,128)}', space=vmem, size = 0x9000, scoped, tag = 'internal scratch']
  %s0 = inlined_call_operand.vmem [shape: f32[96,64], index: 0, kind: input, shape index: {}]
  %s1 = inlined_call_operand.vmem [shape: f32[1,64], index: 1, kind: input, shape index: {}]
  %s2 = inlined_call_operand.vmem [shape: f32[1,64], index: 2, kind: input, shape index: {}]
  %s3 = inlined_call_operand.vmem [shape: f32[96,64], index: 3, kind: output, shape index: {}]
  %s4 = sld [smem:[#allocation0]]
  $region22: #{visual_forward.11} parent=0
    _
  %s6 = ssub.s32 1, %s4
  %s7 = scalar_select 0, %s6, %s4
  // Predicated region
  $region2: #{visual_forward.11} parent=0 // pred_check
    _
  $region3: #{visual_forward.11} parent=0 // pred_check_branch
    %9 = sbr.rel (0) target = $region5
  $region4: #{visual_forward.11} parent=0 // pred_region
    _
  $region5: #{visual_forward.11} parent=0 // pred_fallthru
    _
  // Predicated region
  $region6: #{visual_forward.11} parent=0 // pred_check
    _
  $region7: #{visual_forward.11} parent=0 // pred_check_branch
    %11 = sbr.rel (0) target = $region9
  $region8: #{visual_forward.11} parent=0 // pred_region
    _
  $region9: #{visual_forward.11} parent=0 // pred_fallthru
    _
  // Predicated region
  $region10: #{visual_forward.11} parent=0 // pred_check
    _
  $region11: #{visual_forward.11} parent=0 // pred_check_branch
    %13 = sbr.rel (0) target = $region13
  $region12: #{visual_forward.11} parent=0 // pred_region
    _
  $region13: #{visual_forward.11} parent=0 // pred_fallthru
    _
  %v14 = vld [vmem:[%s0] sm:$0xff]
  %v15 = vld [vmem:[%s0 + $0x8] sm:$0xff]
  %v16 = vld [vmem:[%s0 + $0x10] sm:$0xff]
  %v17 = vld [vmem:[%s0 + $0x18] sm:$0xff]
  %v18 = vld [vmem:[%s0 + $0x20] sm:$0xff]
  %v19 = vld [vmem:[%s0 + $0x28] sm:$0xff]
  %v20 = vld [vmem:[%s0 + $0x30] sm:$0xff]
  %v21 = vld [vmem:[%s0 + $0x38] sm:$0xff]
  %v22 = vld [vmem:[%s0 + $0x40] sm:$0xff]
  %v23 = vld [vmem:[%s0 + $0x48] sm:$0xff]
  %v24 = vld [vmem:[%s0 + $0x50] sm:$0xff]
  %v25 = vld [vmem:[%s0 + $0x58] sm:$0xff]
  %vm26 = vcmask 523264
  %v27 = vsel %vm26, %v14, 0.0
  %28 = vadd.xlane.f32.xlu0 %v27
  %v29 = vpop.xlane.xlu0 %28
  %v30 = vsel %vm26, %v15, 0.0
  %31 = vadd.xlane.f32.xlu0 %v30
  %v32 = vpop.xlane.xlu0 %31
  %v33 = vsel %vm26, %v16, 0.0
  %34 = vadd.xlane.f32.xlu0 %v33
  %v35 = vpop.xlane.xlu0 %34
  %v36 = vsel %vm26, %v17, 0.0
  %37 = vadd.xlane.f32.xlu0 %v36
  %v38 = vpop.xlane.xlu0 %37
  %v39 = vsel %vm26, %v18, 0.0
  %40 = vadd.xlane.f32.xlu0 %v39
  %v41 = vpop.xlane.xlu0 %40
  %v42 = vsel %vm26, %v19, 0.0
  %43 = vadd.xlane.f32.xlu0 %v42
  %v44 = vpop.xlane.xlu0 %43
  %v45 = vsel %vm26, %v20, 0.0
  %46 = vadd.xlane.f32.xlu0 %v45
  %v47 = vpop.xlane.xlu0 %46
  %v48 = vsel %vm26, %v21, 0.0
  %49 = vadd.xlane.f32.xlu0 %v48
  %v50 = vpop.xlane.xlu0 %49
  %v51 = vsel %vm26, %v22, 0.0
  %52 = vadd.xlane.f32.xlu0 %v51
  %v53 = vpop.xlane.xlu0 %52
  %v54 = vsel %vm26, %v23, 0.0
  %55 = vadd.xlane.f32.xlu0 %v54
  %v56 = vpop.xlane.xlu0 %55
  %v57 = vsel %vm26, %v24, 0.0
  %58 = vadd.xlane.f32.xlu0 %v57
  %v59 = vpop.xlane.xlu0 %58
  %v60 = vsel %vm26, %v25, 0.0
  %61 = vadd.xlane.f32.xlu0 %v60
  %v62 = vpop.xlane.xlu0 %61
  %v63 = vrcp.pop 64.0
  %v64 = vmul.f32 64.0, %v63
  %v65 = vsub.f32 1.0, %v64
  %v66 = vmul.f32 %v63, %v65
  %v67 = vadd.f32 %v63, %v66
  %vm68 = vweird.f32 %v63
  %v69 = vsel %vm68, %v63, %v67
  %v70 = vmul.f32 %v29, %v69
  %v71 = vmul.f32 %v32, %v69
  %v72 = vmul.f32 %v35, %v69
  %v73 = vmul.f32 %v38, %v69
  %v74 = vmul.f32 %v41, %v69
  %v75 = vmul.f32 %v44, %v69
  %v76 = vmul.f32 %v47, %v69
  %v77 = vmul.f32 %v50, %v69
  %v78 = vmul.f32 %v53, %v69
  %v79 = vmul.f32 %v56, %v69
  %v80 = vmul.f32 %v59, %v69
  %v81 = vmul.f32 %v62, %v69
  %v82 = vsub.f32 %v14, %v70
  %v83 = vsub.f32 %v15, %v71
  %v84 = vsub.f32 %v16, %v72
  %v85 = vsub.f32 %v17, %v73
  %v86 = vsub.f32 %v18, %v74
  %v87 = vsub.f32 %v19, %v75
  %v88 = vsub.f32 %v20, %v76
  %v89 = vsub.f32 %v21, %v77
  %v90 = vsub.f32 %v22, %v78
  %v91 = vsub.f32 %v23, %v79
  %v92 = vsub.f32 %v24, %v80
  %v93 = vsub.f32 %v25, %v81
  %v94 = vmul.f32 %v82, %v82
  %v95 = vmul.f32 %v83, %v83
  %v96 = vmul.f32 %v84, %v84
  %v97 = vmul.f32 %v85, %v85
  %v98 = vmul.f32 %v86, %v86
  %v99 = vmul.f32 %v87, %v87
  %v100 = vmul.f32 %v88, %v88
  %v101 = vmul.f32 %v89, %v89
  %v102 = vmul.f32 %v90, %v90
  %v103 = vmul.f32 %v91, %v91
  %v104 = vmul.f32 %v92, %v92
  %v105 = vmul.f32 %v93, %v93
  %v106 = vsel %vm26, %v94, 0.0
  %107 = vadd.xlane.f32.xlu0 %v106
  %v108 = vpop.xlane.xlu0 %107
  %v109 = vsel %vm26, %v95, 0.0
  %110 = vadd.xlane.f32.xlu0 %v109
  %v111 = vpop.xlane.xlu0 %110
  %v112 = vsel %vm26, %v96, 0.0
  %113 = vadd.xlane.f32.xlu0 %v112
  %v114 = vpop.xlane.xlu0 %113
  %v115 = vsel %vm26, %v97, 0.0
  %116 = vadd.xlane.f32.xlu0 %v115
  %v117 = vpop.xlane.xlu0 %116
  %v118 = vsel %vm26, %v98, 0.0
  %119 = vadd.xlane.f32.xlu0 %v118
  %v120 = vpop.xlane.xlu0 %119
  %v121 = vsel %vm26, %v99, 0.0
  %122 = vadd.xlane.f32.xlu0 %v121
  %v123 = vpop.xlane.xlu0 %122
  %v124 = vsel %vm26, %v100, 0.0
  %125 = vadd.xlane.f32.xlu0 %v124
  %v126 = vpop.xlane.xlu0 %125
  %v127 = vsel %vm26, %v101, 0.0
  %128 = vadd.xlane.f32.xlu0 %v127
  %v129 = vpop.xlane.xlu0 %128
  %v130 = vsel %vm26, %v102, 0.0
  %131 = vadd.xlane.f32.xlu0 %v130
  %v132 = vpop.xlane.xlu0 %131
  %v133 = vsel %vm26, %v103, 0.0
  %134 = vadd.xlane.f32.xlu0 %v133
  %v135 = vpop.xlane.xlu0 %134
  %v136 = vsel %vm26, %v104, 0.0
  %137 = vadd.xlane.f32.xlu0 %v136
  %v138 = vpop.xlane.xlu0 %137
  %v139 = vsel %vm26, %v105, 0.0
  %140 = vadd.xlane.f32.xlu0 %v139
  %v141 = vpop.xlane.xlu0 %140
  %v142 = vmul.f32 %v108, %v69
  %v143 = vmul.f32 %v111, %v69
  %v144 = vmul.f32 %v114, %v69
  %v145 = vmul.f32 %v117, %v69
  %v146 = vmul.f32 %v120, %v69
  %v147 = vmul.f32 %v123, %v69
  %v148 = vmul.f32 %v126, %v69
  %v149 = vmul.f32 %v129, %v69
  %v150 = vmul.f32 %v132, %v69
  %v151 = vmul.f32 %v135, %v69
  %v152 = vmul.f32 %v138, %v69
  %v153 = vmul.f32 %v141, %v69
  %v154 = vadd.f32 %v142, 1e-05
  %v155 = vadd.f32 %v143, 1e-05
  %v156 = vadd.f32 %v144, 1e-05
  %v157 = vadd.f32 %v145, 1e-05
  %v158 = vadd.f32 %v146, 1e-05
  %v159 = vadd.f32 %v147, 1e-05
  %v160 = vadd.f32 %v148, 1e-05
  %v161 = vadd.f32 %v149, 1e-05
  %v162 = vadd.f32 %v150, 1e-05
  %v163 = vadd.f32 %v151, 1e-05
  %v164 = vadd.f32 %v152, 1e-05
  %v165 = vadd.f32 %v153, 1e-05
  %v166 = vrsqrt.pop %v154
  %v167 = vmul.f32 %v166, %v154
  %v168 = vmul.f32 %v167, %v166
  %v169 = vmul.f32 0.5, %v168
  %v170 = vsub.f32 1.5, %v169
  %v171 = vmul.f32 %v166, %v170
  %vm172 = vweird.f32 %v154
  %vm173 = vweird.f32 %v166
  %vm174 = vmor %vm172, %vm173
  %v175 = vsel %vm174, %v166, %v171
  %v176 = vrsqrt.pop %v155
  %v177 = vmul.f32 %v176, %v155
  %v178 = vmul.f32 %v177, %v176
  %v179 = vmul.f32 0.5, %v178
  %v180 = vsub.f32 1.5, %v179
  %v181 = vmul.f32 %v176, %v180
  %vm182 = vweird.f32 %v155
  %vm183 = vweird.f32 %v176
  %vm184 = vmor %vm182, %vm183
  %v185 = vsel %vm184, %v176, %v181
  %v186 = vrsqrt.pop %v156
  %v187 = vmul.f32 %v186, %v156
  %v188 = vmul.f32 %v187, %v186
  %v189 = vmul.f32 0.5, %v188
  %v190 = vsub.f32 1.5, %v189
  %v191 = vmul.f32 %v186, %v190
  %vm192 = vweird.f32 %v156
  %vm193 = vweird.f32 %v186
  %vm194 = vmor %vm192, %vm193
  %v195 = vsel %vm194, %v186, %v191
  %v196 = vrsqrt.pop %v157
  %v197 = vmul.f32 %v196, %v157
  %v198 = vmul.f32 %v197, %v196
  %v199 = vmul.f32 0.5, %v198
  %v200 = vsub.f32 1.5, %v199
  %v201 = vmul.f32 %v196, %v200
  %vm202 = vweird.f32 %v157
  %vm203 = vweird.f32 %v196
  %vm204 = vmor %vm202, %vm203
  %v205 = vsel %vm204, %v196, %v201
  %v206 = vrsqrt.pop %v158
  %v207 = vmul.f32 %v206, %v158
  %v208 = vmul.f32 %v207, %v206
  %v209 = vmul.f32 0.5, %v208
  %v210 = vsub.f32 1.5, %v209
  %v211 = vmul.f32 %v206, %v210
  %vm212 = vweird.f32 %v158
  %vm213 = vweird.f32 %v206
  %vm214 = vmor %vm212, %vm213
  %v215 = vsel %vm214, %v206, %v211
  %v216 = vrsqrt.pop %v159
  %v217 = vmul.f32 %v216, %v159
  %v218 = vmul.f32 %v217, %v216
  %v219 = vmul.f32 0.5, %v218
  %v220 = vsub.f32 1.5, %v219
  %v221 = vmul.f32 %v216, %v220
  %vm222 = vweird.f32 %v159
  %vm223 = vweird.f32 %v216
  %vm224 = vmor %vm222, %vm223
  %v225 = vsel %vm224, %v216, %v221
  %v226 = vrsqrt.pop %v160
  %v227 = vmul.f32 %v226, %v160
  %v228 = vmul.f32 %v227, %v226
  %v229 = vmul.f32 0.5, %v228
  %v230 = vsub.f32 1.5, %v229
  %v231 = vmul.f32 %v226, %v230
  %vm232 = vweird.f32 %v160
  %vm233 = vweird.f32 %v226
  %vm234 = vmor %vm232, %vm233
  %v235 = vsel %vm234, %v226, %v231
  %v236 = vrsqrt.pop %v161
  %v237 = vmul.f32 %v236, %v161
  %v238 = vmul.f32 %v237, %v236
  %v239 = vmul.f32 0.5, %v238
  %v240 = vsub.f32 1.5, %v239
  %v241 = vmul.f32 %v236, %v240
  %vm242 = vweird.f32 %v161
  %vm243 = vweird.f32 %v236
  %vm244 = vmor %vm242, %vm243
  %v245 = vsel %vm244, %v236, %v241
  %v246 = vrsqrt.pop %v162
  %v247 = vmul.f32 %v246, %v162
  %v248 = vmul.f32 %v247, %v246
  %v249 = vmul.f32 0.5, %v248
  %v250 = vsub.f32 1.5, %v249
  %v251 = vmul.f32 %v246, %v250
  %vm252 = vweird.f32 %v162
  %vm253 = vweird.f32 %v246
  %vm254 = vmor %vm252, %vm253
  %v255 = vsel %vm254, %v246, %v251
  %v256 = vrsqrt.pop %v163
  %v257 = vmul.f32 %v256, %v163
  %v258 = vmul.f32 %v257, %v256
  %v259 = vmul.f32 0.5, %v258
  %v260 = vsub.f32 1.5, %v259
  %v261 = vmul.f32 %v256, %v260
  %vm262 = vweird.f32 %v163
  %vm263 = vweird.f32 %v256
  %vm264 = vmor %vm262, %vm263
  %v265 = vsel %vm264, %v256, %v261
  %v266 = vrsqrt.pop %v164
  %v267 = vmul.f32 %v266, %v164
  %v268 = vmul.f32 %v267, %v266
  %v269 = vmul.f32 0.5, %v268
  %v270 = vsub.f32 1.5, %v269
  %v271 = vmul.f32 %v266, %v270
  %vm272 = vweird.f32 %v164
  %vm273 = vweird.f32 %v266
  %vm274 = vmor %vm272, %vm273
  %v275 = vsel %vm274, %v266, %v271
  %v276 = vrsqrt.pop %v165
  %v277 = vmul.f32 %v276, %v165
  %v278 = vmul.f32 %v277, %v276
  %v279 = vmul.f32 0.5, %v278
  %v280 = vsub.f32 1.5, %v279
  %v281 = vmul.f32 %v276, %v280
  %vm282 = vweird.f32 %v165
  %vm283 = vweird.f32 %v276
  %vm284 = vmor %vm282, %vm283
  %v285 = vsel %vm284, %v276, %v281
  %v286 = vmul.f32 %v82, %v175
  %v287 = vmul.f32 %v83, %v185
  %v288 = vmul.f32 %v84, %v195
  %v289 = vmul.f32 %v85, %v205
  %v290 = vmul.f32 %v86, %v215
  %v291 = vmul.f32 %v87, %v225
  %v292 = vmul.f32 %v88, %v235
  %v293 = vmul.f32 %v89, %v245
  %v294 = vmul.f32 %v90, %v255
  %v295 = vmul.f32 %v91, %v265
  %v296 = vmul.f32 %v92, %v275
  %v297 = vmul.f32 %v93, %v285
  %v298 = vld [vmem:[%s1] sm:$0x1]
  %v300 = vperm.slane %v298, 0
  %v302 = vmul.f32 %v286, %v300
  %v303 = vmul.f32 %v287, %v300
  %v304 = vmul.f32 %v288, %v300
  %v305 = vmul.f32 %v289, %v300
  %v306 = vmul.f32 %v290, %v300
  %v307 = vmul.f32 %v291, %v300
  %v308 = vmul.f32 %v292, %v300
  %v309 = vmul.f32 %v293, %v300
  %v310 = vmul.f32 %v294, %v300
  %v311 = vmul.f32 %v295, %v300
  %v312 = vmul.f32 %v296, %v300
  %v313 = vmul.f32 %v297, %v300
  %v314 = vld [vmem:[%s2] sm:$0x1]
  %v316 = vperm.slane %v314, 0
  %v318 = vadd.f32 %v302, %v316
  %v319 = vadd.f32 %v303, %v316
  %v320 = vadd.f32 %v304, %v316
  %v321 = vadd.f32 %v305, %v316
  %v322 = vadd.f32 %v306, %v316
  %v323 = vadd.f32 %v307, %v316
  %v324 = vadd.f32 %v308, %v316
  %v325 = vadd.f32 %v309, %v316
  %v326 = vadd.f32 %v310, %v316
  %v327 = vadd.f32 %v311, %v316
  %v328 = vadd.f32 %v312, %v316
  %v329 = vadd.f32 %v313, %v316
  %330 = vst.msk [vmem:[%s3] sm:$0xff] %vm26, %v318
  %331 = vst.msk [vmem:[%s3 + $0x8] sm:$0xff] %vm26, %v319
  %332 = vst.msk [vmem:[%s3 + $0x10] sm:$0xff] %vm26, %v320
  %333 = vst.msk [vmem:[%s3 + $0x18] sm:$0xff] %vm26, %v321
  %334 = vst.msk [vmem:[%s3 + $0x20] sm:$0xff] %vm26, %v322
  %335 = vst.msk [vmem:[%s3 + $0x28] sm:$0xff] %vm26, %v323
  %336 = vst.msk [vmem:[%s3 + $0x30] sm:$0xff] %vm26, %v324
  %337 = vst.msk [vmem:[%s3 + $0x38] sm:$0xff] %vm26, %v325
  %338 = vst.msk [vmem:[%s3 + $0x40] sm:$0xff] %vm26, %v326
  %339 = vst.msk [vmem:[%s3 + $0x48] sm:$0xff] %vm26, %v327
  %340 = vst.msk [vmem:[%s3 + $0x50] sm:$0xff] %vm26, %v328
  %341 = vst.msk [vmem:[%s3 + $0x58] sm:$0xff] %vm26, %v329
  // Predicated region
  $region14: #{visual_forward.11} parent=0 // pred_check
    _
  $region15: #{visual_forward.11} parent=0 // pred_check_branch
    %343 = sbr.rel (0) target = $region17
  $region16: #{visual_forward.11} parent=0 // pred_region
    _
  $region17: #{visual_forward.11} parent=0 // pred_fallthru
    _
  // Predicated region
  $region18: #{visual_forward.11} parent=0 // pred_check
    _
  $region19: #{visual_forward.11} parent=0 // pred_check_branch
    %345 = sbr.rel (0) target = $region21
  $region20: #{visual_forward.11} parent=0 // pred_region
    _
  $region21: #{visual_forward.11} parent=0 // pred_fallthru
    _

// kernel: visual_forward.10
$region0: #{visual_forward.10}
  #allocation0 [shape = 'u32[]', space=smem, size = 0x4, offset = 0x4, fixed_abs, tag = 'smem constant byte address 0x4 - core index']
  #allocation1 [shape = 'u32[72,128]{1,0:T(1,128)}', space=vmem, size = 0x9000, scoped, tag = 'internal scratch']
  %s0 = inlined_call_operand.vmem [shape: f32[72,48], index: 0, kind: input, shape index: {}]
  %s1 = inlined_call_operand.vmem [shape: bf16[48,64], index: 1, kind: input, shape index: {}]
  %s2 = inlined_call_operand.vmem [shape: f32[1,64], index: 2, kind: input, shape index: {}]
  %s3 = inlined_call_operand.vmem [shape: f32[72,64], index: 3, kind: output, shape index: {}]
  %s4 = sld [smem:[#allocation0]]
  $region22: #{visual_forward.10} parent=0
    _
  %s6 = ssub.s32 1, %s4
  %s7 = scalar_select 0, %s6, %s4
  // Predicated region
  $region2: #{visual_forward.10} parent=0 // pred_check
    _
  $region3: #{visual_forward.10} parent=0 // pred_check_branch
    %9 = sbr.rel (0) target = $region5
  $region4: #{visual_forward.10} parent=0 // pred_region
    _
  $region5: #{visual_forward.10} parent=0 // pred_fallthru
    _
  // Predicated region
  $region6: #{visual_forward.10} parent=0 // pred_check
    _
  $region7: #{visual_forward.10} parent=0 // pred_check_branch
    %11 = sbr.rel (0) target = $region9
  $region8: #{visual_forward.10} parent=0 // pred_region
    _
  $region9: #{visual_forward.10} parent=0 // pred_fallthru
    _
  // Predicated region
  $region10: #{visual_forward.10} parent=0 // pred_check
    _
  $region11: #{visual_forward.10} parent=0 // pred_check_branch
    %13 = sbr.rel (0) target = $region13
  $region12: #{visual_forward.10} parent=0 // pred_region
    _
  $region13: #{visual_forward.10} parent=0 // pred_fallthru
    _
  %v15 = vld [vmem:[%s0] sm:$0xff]
  %v16 = vld [vmem:[%s0 + $0x8] sm:$0xff]
  %v17 = vld [vmem:[%s0 + $0x10] sm:$0xff]
  %v18 = vld [vmem:[%s0 + $0x18] sm:$0xff]
  %v19 = vld [vmem:[%s0 + $0x20] sm:$0xff]
  %v20 = vld [vmem:[%s0 + $0x28] sm:$0xff]
  %v21 = vld [vmem:[%s0 + $0x30] sm:$0xff]
  %v22 = vld [vmem:[%s0 + $0x38] sm:$0xff]
  %v23 = vld [vmem:[%s0 + $0x40] sm:$0xff]
  %v24 = vpack.c.bf16 %v16, %v15
  %v25 = vpack.c.bf16 %v18, %v17
  %v26 = vpack.c.bf16 %v20, %v19
  %v27 = vpack.c.bf16 %v22, %v21
  %v28 = vpack.c.bf16 %v23, %v23
  %v29 = vld [vmem:[%s1] sm:$0xf]
  %v30 = vld [vmem:[%s1 + $0x4] sm:$0xf]
  %v31 = vld [vmem:[%s1 + $0x8] sm:$0xf]
  %v32 = vld [vmem:[%s1 + $0xc] sm:$0xf]
  %v33 = vld [vmem:[%s1 + $0x10] sm:$0xf]
  %v34 = vld [vmem:[%s1 + $0x14] sm:$0xf]
  %v35 = vld [vmem:[%s2] sm:$0x1]
  %v37 = vperm.slane %v35, 0
  %v45 = vunpack.c.l.b16 %v29
  %v46 = vunpack.c.l.b16 %v30
  %v47 = vunpack.c.l.b16 %v31
  %v48 = vunpack.c.l.b16 %v32
  %v49 = vunpack.c.l.b16 %v33
  %v50 = vunpack.c.l.b16 %v34
  %v51 = vpack.c.b16 %v46, %v45
  %v52 = vpack.c.b16 %v48, %v47
  %v53 = vpack.c.b16 %v50, %v49
  %vm57 = vcmask 392192
  %v59 = vsel %vm57, %v24, 0
  %v62 = vsel %vm57, %v25, 0
  %v65 = vsel %vm57, %v26, 0
  %v68 = vsel %vm57, %v27, 0
  %v71 = vsel %vm57, %v28, 0
  %73 = vmatpush.bf16.msra.mxu0 0
  %74 = vmatpush.bf16.msra.mxu0 0
  %75 = vmatpush.bf16.msra.mxu0 0
  %76 = vmatpush.bf16.msra.mxu0 0
  %77 = vmatpush.bf16.msra.mxu0 0
  %78 = vmatpush.bf16.msra.mxu0 %v53
  %79 = vmatpush.bf16.msra.mxu0 %v52
  %80 = vmatpush.bf16.msra.mxu0 %v51
  %81 = vmatmul.bf16.gmra.mxu0 %v59
  %v82 = vpop.f32.mrf.mxu0
  %v83 = vadd.f32 %v37, %v82
  %v84 = vpop.f32.mrf.mxu0
  %v85 = vadd.f32 %v37, %v84
  %86 = vmatmul.bf16.gmra.mxu0 %v62
  %v87 = vpop.f32.mrf.mxu0
  %v88 = vadd.f32 %v37, %v87
  %v89 = vpop.f32.mrf.mxu0
  %v90 = vadd.f32 %v37, %v89
  %91 = vmatmul.bf16.gmra.mxu0 %v65
  %v92 = vpop.f32.mrf.mxu0
  %v93 = vadd.f32 %v37, %v92
  %v94 = vpop.f32.mrf.mxu0
  %v95 = vadd.f32 %v37, %v94
  %96 = vmatmul.bf16.gmra.mxu0 %v68
  %v97 = vpop.f32.mrf.mxu0
  %v98 = vadd.f32 %v37, %v97
  %v99 = vpop.f32.mrf.mxu0
  %v100 = vadd.f32 %v37, %v99
  %101 = vmatmul.bf16.gmra.mxu0 %v71
  %v102 = vpop.f32.mrf.mxu0
  %v103 = vadd.f32 %v37, %v102
  %v104 = vpop.f32.mrf.mxu0
  %105 = vdwg.mxu0
  %vm106 = vcmask 523264
  %107 = vst.msk [vmem:[%s3] sm:$0xff] %vm106, %v83
  %108 = vst.msk [vmem:[%s3 + $0x8] sm:$0xff] %vm106, %v85
  %109 = vst.msk [vmem:[%s3 + $0x10] sm:$0xff] %vm106, %v88
  %110 = vst.msk [vmem:[%s3 + $0x18] sm:$0xff] %vm106, %v90
  %111 = vst.msk [vmem:[%s3 + $0x20] sm:$0xff] %vm106, %v93
  %112 = vst.msk [vmem:[%s3 + $0x28] sm:$0xff] %vm106, %v95
  %113 = vst.msk [vmem:[%s3 + $0x30] sm:$0xff] %vm106, %v98
  %114 = vst.msk [vmem:[%s3 + $0x38] sm:$0xff] %vm106, %v100
  %115 = vst.msk [vmem:[%s3 + $0x40] sm:$0xff] %vm106, %v103
  // Predicated region
  $region14: #{visual_forward.10} parent=0 // pred_check
    _
  $region15: #{visual_forward.10} parent=0 // pred_check_branch
    %117 = sbr.rel (0) target = $region17
  $region16: #{visual_forward.10} parent=0 // pred_region
    _
  $region17: #{visual_forward.10} parent=0 // pred_fallthru
    _
  // Predicated region
  $region18: #{visual_forward.10} parent=0 // pred_check
    _
  $region19: #{visual_forward.10} parent=0 // pred_check_branch
    %119 = sbr.rel (0) target = $region21
  $region20: #{visual_forward.10} parent=0 // pred_region
    _
  $region21: #{visual_forward.10} parent=0 // pred_fallthru
    _

// kernel: visual_forward.12
$region0: #{visual_forward.12}
  #allocation0 [shape = 'u32[]', space=smem, size = 0x4, offset = 0x4, fixed_abs, tag = 'smem constant byte address 0x4 - core index']
  #allocation1 [shape = 'u32[72,128]{1,0:T(1,128)}', space=vmem, size = 0x9000, scoped, tag = 'internal scratch']
  %s0 = inlined_call_operand.vmem [shape: f32[96,64], index: 0, kind: input, shape index: {}]
  %s1 = inlined_call_operand.vmem [shape: f32[1,64], index: 1, kind: input, shape index: {}]
  %s2 = inlined_call_operand.vmem [shape: f32[1,64], index: 2, kind: input, shape index: {}]
  %s3 = inlined_call_operand.vmem [shape: bf16[64,192], index: 3, kind: input, shape index: {}]
  %s4 = inlined_call_operand.vmem [shape: f32[1,192], index: 4, kind: input, shape index: {}]
  %s5 = inlined_call_operand.vmem [shape: bf16[96,192], index: 5, kind: output, shape index: {}]
  %s6 = sld [smem:[#allocation0]]
  $region30: #{visual_forward.12} parent=0
    _
  %s8 = ssub.s32 1, %s6
  %s9 = scalar_select 0, %s8, %s6
  // Predicated region
  $region2: #{visual_forward.12} parent=0 // pred_check
    _
  $region3: #{visual_forward.12} parent=0 // pred_check_branch
    %11 = sbr.rel (0) target = $region5
  $region4: #{visual_forward.12} parent=0 // pred_region
    _
  $region5: #{visual_forward.12} parent=0 // pred_fallthru
    _
  // Predicated region
  $region6: #{visual_forward.12} parent=0 // pred_check
    _
  $region7: #{visual_forward.12} parent=0 // pred_check_branch
    %13 = sbr.rel (0) target = $region9
  $region8: #{visual_forward.12} parent=0 // pred_region
    _
  $region9: #{visual_forward.12} parent=0 // pred_fallthru
    _
  // Predicated region
  $region10: #{visual_forward.12} parent=0 // pred_check
    _
  $region11: #{visual_forward.12} parent=0 // pred_check_branch
    %15 = sbr.rel (0) target = $region13
  $region12: #{visual_forward.12} parent=0 // pred_region
    _
  $region13: #{visual_forward.12} parent=0 // pred_fallthru
    _
  // Predicated region
  $region14: #{visual_forward.12} parent=0 // pred_check
    _
  $region15: #{visual_forward.12} parent=0 // pred_check_branch
    %17 = sbr.rel (0) target = $region17
  $region16: #{visual_forward.12} parent=0 // pred_region
    _
  $region17: #{visual_forward.12} parent=0 // pred_fallthru
    _
  // Predicated region
  $region18: #{visual_forward.12} parent=0 // pred_check
    _
  $region19: #{visual_forward.12} parent=0 // pred_check_branch
    %19 = sbr.rel (0) target = $region21
  $region20: #{visual_forward.12} parent=0 // pred_region
    _
  $region21: #{visual_forward.12} parent=0 // pred_fallthru
    _
  %v21 = vld [vmem:[%s0] sm:$0xff]
  %v22 = vld [vmem:[%s0 + $0x8] sm:$0xff]
  %v23 = vld [vmem:[%s0 + $0x10] sm:$0xff]
  %v24 = vld [vmem:[%s0 + $0x18] sm:$0xff]
  %v25 = vld [vmem:[%s0 + $0x20] sm:$0xff]
  %v26 = vld [vmem:[%s0 + $0x28] sm:$0xff]
  %v27 = vld [vmem:[%s0 + $0x30] sm:$0xff]
  %v28 = vld [vmem:[%s0 + $0x38] sm:$0xff]
  %v29 = vld [vmem:[%s0 + $0x40] sm:$0xff]
  %v30 = vld [vmem:[%s0 + $0x48] sm:$0xff]
  %v31 = vld [vmem:[%s0 + $0x50] sm:$0xff]
  %v32 = vld [vmem:[%s0 + $0x58] sm:$0xff]
  %vm33 = vcmask 523264
  %v34 = vsel %vm33, %v21, 0.0
  %35 = vadd.xlane.f32.xlu0 %v34
  %v36 = vpop.xlane.xlu0 %35
  %v37 = vsel %vm33, %v22, 0.0
  %38 = vadd.xlane.f32.xlu0 %v37
  %v39 = vpop.xlane.xlu0 %38
  %v40 = vsel %vm33, %v23, 0.0
  %41 = vadd.xlane.f32.xlu0 %v40
  %v42 = vpop.xlane.xlu0 %41
  %v43 = vsel %vm33, %v24, 0.0
  %44 = vadd.xlane.f32.xlu0 %v43
  %v45 = vpop.xlane.xlu0 %44
  %v46 = vsel %vm33, %v25, 0.0
  %47 = vadd.xlane.f32.xlu0 %v46
  %v48 = vpop.xlane.xlu0 %47
  %v49 = vsel %vm33, %v26, 0.0
  %50 = vadd.xlane.f32.xlu0 %v49
  %v51 = vpop.xlane.xlu0 %50
  %v52 = vsel %vm33, %v27, 0.0
  %53 = vadd.xlane.f32.xlu0 %v52
  %v54 = vpop.xlane.xlu0 %53
  %v55 = vsel %vm33, %v28, 0.0
  %56 = vadd.xlane.f32.xlu0 %v55
  %v57 = vpop.xlane.xlu0 %56
  %v58 = vsel %vm33, %v29, 0.0
  %59 = vadd.xlane.f32.xlu0 %v58
  %v60 = vpop.xlane.xlu0 %59
  %v61 = vsel %vm33, %v30, 0.0
  %62 = vadd.xlane.f32.xlu0 %v61
  %v63 = vpop.xlane.xlu0 %62
  %v64 = vsel %vm33, %v31, 0.0
  %65 = vadd.xlane.f32.xlu0 %v64
  %v66 = vpop.xlane.xlu0 %65
  %v67 = vsel %vm33, %v32, 0.0
  %68 = vadd.xlane.f32.xlu0 %v67
  %v69 = vpop.xlane.xlu0 %68
  %v70 = vrcp.pop 64.0
  %v71 = vmul.f32 64.0, %v70
  %v72 = vsub.f32 1.0, %v71
  %v73 = vmul.f32 %v70, %v72
  %v74 = vadd.f32 %v70, %v73
  %vm75 = vweird.f32 %v70
  %v76 = vsel %vm75, %v70, %v74
  %v77 = vmul.f32 %v36, %v76
  %v78 = vmul.f32 %v39, %v76
  %v79 = vmul.f32 %v42, %v76
  %v80 = vmul.f32 %v45, %v76
  %v81 = vmul.f32 %v48, %v76
  %v82 = vmul.f32 %v51, %v76
  %v83 = vmul.f32 %v54, %v76
  %v84 = vmul.f32 %v57, %v76
  %v85 = vmul.f32 %v60, %v76
  %v86 = vmul.f32 %v63, %v76
  %v87 = vmul.f32 %v66, %v76
  %v88 = vmul.f32 %v69, %v76
  %v89 = vsub.f32 %v21, %v77
  %v90 = vsub.f32 %v22, %v78
  %v91 = vsub.f32 %v23, %v79
  %v92 = vsub.f32 %v24, %v80
  %v93 = vsub.f32 %v25, %v81
  %v94 = vsub.f32 %v26, %v82
  %v95 = vsub.f32 %v27, %v83
  %v96 = vsub.f32 %v28, %v84
  %v97 = vsub.f32 %v29, %v85
  %v98 = vsub.f32 %v30, %v86
  %v99 = vsub.f32 %v31, %v87
  %v100 = vsub.f32 %v32, %v88
  %v101 = vmul.f32 %v89, %v89
  %v102 = vmul.f32 %v90, %v90
  %v103 = vmul.f32 %v91, %v91
  %v104 = vmul.f32 %v92, %v92
  %v105 = vmul.f32 %v93, %v93
  %v106 = vmul.f32 %v94, %v94
  %v107 = vmul.f32 %v95, %v95
  %v108 = vmul.f32 %v96, %v96
  %v109 = vmul.f32 %v97, %v97
  %v110 = vmul.f32 %v98, %v98
  %v111 = vmul.f32 %v99, %v99
  %v112 = vmul.f32 %v100, %v100
  %v113 = vsel %vm33, %v101, 0.0
  %114 = vadd.xlane.f32.xlu0 %v113
  %v115 = vpop.xlane.xlu0 %114
  %v116 = vsel %vm33, %v102, 0.0
  %117 = vadd.xlane.f32.xlu0 %v116
  %v118 = vpop.xlane.xlu0 %117
  %v119 = vsel %vm33, %v103, 0.0
  %120 = vadd.xlane.f32.xlu0 %v119
  %v121 = vpop.xlane.xlu0 %120
  %v122 = vsel %vm33, %v104, 0.0
  %123 = vadd.xlane.f32.xlu0 %v122
  %v124 = vpop.xlane.xlu0 %123
  %v125 = vsel %vm33, %v105, 0.0
  %126 = vadd.xlane.f32.xlu0 %v125
  %v127 = vpop.xlane.xlu0 %126
  %v128 = vsel %vm33, %v106, 0.0
  %129 = vadd.xlane.f32.xlu0 %v128
  %v130 = vpop.xlane.xlu0 %129
  %v131 = vsel %vm33, %v107, 0.0
  %132 = vadd.xlane.f32.xlu0 %v131
  %v133 = vpop.xlane.xlu0 %132
  %v134 = vsel %vm33, %v108, 0.0
  %135 = vadd.xlane.f32.xlu0 %v134
  %v136 = vpop.xlane.xlu0 %135
  %v137 = vsel %vm33, %v109, 0.0
  %138 = vadd.xlane.f32.xlu0 %v137
  %v139 = vpop.xlane.xlu0 %138
  %v140 = vsel %vm33, %v110, 0.0
  %141 = vadd.xlane.f32.xlu0 %v140
  %v142 = vpop.xlane.xlu0 %141
  %v143 = vsel %vm33, %v111, 0.0
  %144 = vadd.xlane.f32.xlu0 %v143
  %v145 = vpop.xlane.xlu0 %144
  %v146 = vsel %vm33, %v112, 0.0
  %147 = vadd.xlane.f32.xlu0 %v146
  %v148 = vpop.xlane.xlu0 %147
  %v149 = vmul.f32 %v115, %v76
  %v150 = vmul.f32 %v118, %v76
  %v151 = vmul.f32 %v121, %v76
  %v152 = vmul.f32 %v124, %v76
  %v153 = vmul.f32 %v127, %v76
  %v154 = vmul.f32 %v130, %v76
  %v155 = vmul.f32 %v133, %v76
  %v156 = vmul.f32 %v136, %v76
  %v157 = vmul.f32 %v139, %v76
  %v158 = vmul.f32 %v142, %v76
  %v159 = vmul.f32 %v145, %v76
  %v160 = vmul.f32 %v148, %v76
  %v161 = vadd.f32 %v149, 1e-05
  %v162 = vadd.f32 %v150, 1e-05
  %v163 = vadd.f32 %v151, 1e-05
  %v164 = vadd.f32 %v152, 1e-05
  %v165 = vadd.f32 %v153, 1e-05
  %v166 = vadd.f32 %v154, 1e-05
  %v167 = vadd.f32 %v155, 1e-05
  %v168 = vadd.f32 %v156, 1e-05
  %v169 = vadd.f32 %v157, 1e-05
  %v170 = vadd.f32 %v158, 1e-05
  %v171 = vadd.f32 %v159, 1e-05
  %v172 = vadd.f32 %v160, 1e-05
  %v173 = vrsqrt.pop %v161
  %v174 = vmul.f32 %v173, %v161
  %v175 = vmul.f32 %v174, %v173
  %v176 = vmul.f32 0.5, %v175
  %v177 = vsub.f32 1.5, %v176
  %v178 = vmul.f32 %v173, %v177
  %vm179 = vweird.f32 %v161
  %vm180 = vweird.f32 %v173
  %vm181 = vmor %vm179, %vm180
  %v182 = vsel %vm181, %v173, %v178
  %v183 = vrsqrt.pop %v162
  %v184 = vmul.f32 %v183, %v162
  %v185 = vmul.f32 %v184, %v183
  %v186 = vmul.f32 0.5, %v185
  %v187 = vsub.f32 1.5, %v186
  %v188 = vmul.f32 %v183, %v187
  %vm189 = vweird.f32 %v162
  %vm190 = vweird.f32 %v183
  %vm191 = vmor %vm189, %vm190
  %v192 = vsel %vm191, %v183, %v188
  %v193 = vrsqrt.pop %v163
  %v194 = vmul.f32 %v193, %v163
  %v195 = vmul.f32 %v194, %v193
  %v196 = vmul.f32 0.5, %v195
  %v197 = vsub.f32 1.5, %v196
  %v198 = vmul.f32 %v193, %v197
  %vm199 = vweird.f32 %v163
  %vm200 = vweird.f32 %v193
  %vm201 = vmor %vm199, %vm200
  %v202 = vsel %vm201, %v193, %v198
  %v203 = vrsqrt.pop %v164
  %v204 = vmul.f32 %v203, %v164
  %v205 = vmul.f32 %v204, %v203
  %v206 = vmul.f32 0.5, %v205
  %v207 = vsub.f32 1.5, %v206
  %v208 = vmul.f32 %v203, %v207
  %vm209 = vweird.f32 %v164
  %vm210 = vweird.f32 %v203
  %vm211 = vmor %vm209, %vm210
  %v212 = vsel %vm211, %v203, %v208
  %v213 = vrsqrt.pop %v165
  %v214 = vmul.f32 %v213, %v165
  %v215 = vmul.f32 %v214, %v213
  %v216 = vmul.f32 0.5, %v215
  %v217 = vsub.f32 1.5, %v216
  %v218 = vmul.f32 %v213, %v217
  %vm219 = vweird.f32 %v165
  %vm220 = vweird.f32 %v213
  %vm221 = vmor %vm219, %vm220
  %v222 = vsel %vm221, %v213, %v218
  %v223 = vrsqrt.pop %v166
  %v224 = vmul.f32 %v223, %v166
  %v225 = vmul.f32 %v224, %v223
  %v226 = vmul.f32 0.5, %v225
  %v227 = vsub.f32 1.5, %v226
  %v228 = vmul.f32 %v223, %v227
  %vm229 = vweird.f32 %v166
  %vm230 = vweird.f32 %v223
  %vm231 = vmor %vm229, %vm230
  %v232 = vsel %vm231, %v223, %v228
  %v233 = vrsqrt.pop %v167
  %v234 = vmul.f32 %v233, %v167
  %v235 = vmul.f32 %v234, %v233
  %v236 = vmul.f32 0.5, %v235
  %v237 = vsub.f32 1.5, %v236
  %v238 = vmul.f32 %v233, %v237
  %vm239 = vweird.f32 %v167
  %vm240 = vweird.f32 %v233
  %vm241 = vmor %vm239, %vm240
  %v242 = vsel %vm241, %v233, %v238
  %v243 = vrsqrt.pop %v168
  %v244 = vmul.f32 %v243, %v168
  %v245 = vmul.f32 %v244, %v243
  %v246 = vmul.f32 0.5, %v245
  %v247 = vsub.f32 1.5, %v246
  %v248 = vmul.f32 %v243, %v247
  %vm249 = vweird.f32 %v168
  %vm250 = vweird.f32 %v243
  %vm251 = vmor %vm249, %vm250
  %v252 = vsel %vm251, %v243, %v248
  %v253 = vrsqrt.pop %v169
  %v254 = vmul.f32 %v253, %v169
  %v255 = vmul.f32 %v254, %v253
  %v256 = vmul.f32 0.5, %v255
  %v257 = vsub.f32 1.5, %v256
  %v258 = vmul.f32 %v253, %v257
  %vm259 = vweird.f32 %v169
  %vm260 = vweird.f32 %v253
  %vm261 = vmor %vm259, %vm260
  %v262 = vsel %vm261, %v253, %v258
  %v263 = vrsqrt.pop %v170
  %v264 = vmul.f32 %v263, %v170
  %v265 = vmul.f32 %v264, %v263
  %v266 = vmul.f32 0.5, %v265
  %v267 = vsub.f32 1.5, %v266
  %v268 = vmul.f32 %v263, %v267
  %vm269 = vweird.f32 %v170
  %vm270 = vweird.f32 %v263
  %vm271 = vmor %vm269, %vm270
  %v272 = vsel %vm271, %v263, %v268
  %v273 = vrsqrt.pop %v171
  %v274 = vmul.f32 %v273, %v171
  %v275 = vmul.f32 %v274, %v273
  %v276 = vmul.f32 0.5, %v275
  %v277 = vsub.f32 1.5, %v276
  %v278 = vmul.f32 %v273, %v277
  %vm279 = vweird.f32 %v171
  %vm280 = vweird.f32 %v273
  %vm281 = vmor %vm279, %vm280
  %v282 = vsel %vm281, %v273, %v278
  %v283 = vrsqrt.pop %v172
  %v284 = vmul.f32 %v283, %v172
  %v285 = vmul.f32 %v284, %v283
  %v286 = vmul.f32 0.5, %v285
  %v287 = vsub.f32 1.5, %v286
  %v288 = vmul.f32 %v283, %v287
  %vm289 = vweird.f32 %v172
  %vm290 = vweird.f32 %v283
  %vm291 = vmor %vm289, %vm290
  %v292 = vsel %vm291, %v283, %v288
  %v293 = vmul.f32 %v89, %v182
  %v294 = vmul.f32 %v90, %v192
  %v295 = vmul.f32 %v91, %v202
  %v296 = vmul.f32 %v92, %v212
  %v297 = vmul.f32 %v93, %v222
  %v298 = vmul.f32 %v94, %v232
  %v299 = vmul.f32 %v95, %v242
  %v300 = vmul.f32 %v96, %v252
  %v301 = vmul.f32 %v97, %v262
  %v302 = vmul.f32 %v98, %v272
  %v303 = vmul.f32 %v99, %v282
  %v304 = vmul.f32 %v100, %v292
  %v305 = vld [vmem:[%s1] sm:$0x1]
  %v307 = vperm.slane %v305, 0
  %v309 = vmul.f32 %v293, %v307
  %v310 = vmul.f32 %v294, %v307
  %v311 = vmul.f32 %v295, %v307
  %v312 = vmul.f32 %v296, %v307
  %v313 = vmul.f32 %v297, %v307
  %v314 = vmul.f32 %v298, %v307
  %v315 = vmul.f32 %v299, %v307
  %v316 = vmul.f32 %v300, %v307
  %v317 = vmul.f32 %v301, %v307
  %v318 = vmul.f32 %v302, %v307
  %v319 = vmul.f32 %v303, %v307
  %v320 = vmul.f32 %v304, %v307
  %v321 = vld [vmem:[%s2] sm:$0x1]
  %v323 = vperm.slane %v321, 0
  %v325 = vadd.f32 %v309, %v323
  %v326 = vadd.f32 %v310, %v323
  %v327 = vadd.f32 %v311, %v323
  %v328 = vadd.f32 %v312, %v323
  %v329 = vadd.f32 %v313, %v323
  %v330 = vadd.f32 %v314, %v323
  %v331 = vadd.f32 %v315, %v323
  %v332 = vadd.f32 %v316, %v323
  %v333 = vadd.f32 %v317, %v323
  %v334 = vadd.f32 %v318, %v323
  %v335 = vadd.f32 %v319, %v323
  %v336 = vadd.f32 %v320, %v323
  %v337 = vpack.c.bf16 %v326, %v325
  %v338 = vpack.c.bf16 %v328, %v327
  %v339 = vpack.c.bf16 %v330, %v329
  %v340 = vpack.c.bf16 %v332, %v331
  %v341 = vpack.c.bf16 %v334, %v333
  %v342 = vpack.c.bf16 %v336, %v335
  %v343 = vld [vmem:[%s3] sm:$0xff]
  %v344 = vld [vmem:[%s3 + $0x8] sm:$0xff]
  %v345 = vld [vmem:[%s3 + $0x10] sm:$0xff]
  %v346 = vld [vmem:[%s3 + $0x18] sm:$0xff]
  %v347 = vld [vmem:[%s3 + $0x20] sm:$0xff]
  %v348 = vld [vmem:[%s3 + $0x28] sm:$0xff]
  %v349 = vld [vmem:[%s3 + $0x30] sm:$0xff]
  %v350 = vld [vmem:[%s3 + $0x38] sm:$0xff]
  %v351 = vld [vmem:[%s4] sm:$0x3]
  %v353 = vperm.slane %v351, 0
  %v354 = vperm.slane %v351, 1
  %v365 = vunpack.c.l.b16 %v343
  %v366 = vunpack.c.h.b16 %v343
  %v367 = vunpack.c.l.b16 %v344
  %v368 = vunpack.c.h.b16 %v344
  %v369 = vunpack.c.l.b16 %v345
  %v370 = vunpack.c.h.b16 %v345
  %v371 = vunpack.c.l.b16 %v346
  %v372 = vunpack.c.h.b16 %v346
  %v373 = vunpack.c.l.b16 %v347
  %v374 = vunpack.c.h.b16 %v347
  %v375 = vunpack.c.l.b16 %v348
  %v376 = vunpack.c.h.b16 %v348
  %v377 = vunpack.c.l.b16 %v349
  %v378 = vunpack.c.h.b16 %v349
  %v379 = vunpack.c.l.b16 %v350
  %v380 = vunpack.c.h.b16 %v350
  %v381 = vpack.c.b16 %v367, %v365
  %v382 = vpack.c.b16 %v368, %v366
  %v383 = vpack.c.b16 %v371, %v369
  %v384 = vpack.c.b16 %v372, %v370
  %v385 = vpack.c.b16 %v375, %v373
  %v386 = vpack.c.b16 %v376, %v374
  %v387 = vpack.c.b16 %v379, %v377
  %v388 = vpack.c.b16 %v380, %v378
  %v398 = vsel %vm33, %v337, 0
  %v401 = vsel %vm33, %v338, 0
  %v404 = vsel %vm33, %v339, 0
  %v407 = vsel %vm33, %v340, 0
  %v410 = vsel %vm33, %v341, 0
  %v413 = vsel %vm33, %v342, 0
  %415 = vmatpush.bf16.msra.mxu0 0
  %416 = vmatpush.bf16.msra.mxu0 0
  %417 = vmatpush.bf16.msra.mxu0 0
  %418 = vmatpush.bf16.msra.mxu0 0
  %419 = vmatpush.bf16.msra.mxu0 %v387
  %420 = vmatpush.bf16.msra.mxu0 %v385
  %421 = vmatpush.bf16.msra.mxu0 %v383
  %422 = vmatpush.bf16.msra.mxu0 %v381
  %423 = vmatmul.bf16.gmra.mxu0 %v398
  %v424 = vpop.f32.mrf.mxu0
  %v425 = vadd.f32 %v353, %v424
  %v426 = vpop.f32.mrf.mxu0
  %v427 = vadd.f32 %v353, %v426
  %428 = vmatmul.bf16.gmra.mxu0 %v401
  %v429 = vpop.f32.mrf.mxu0
  %v430 = vadd.f32 %v353, %v429
  %v431 = vpop.f32.mrf.mxu0
  %v432 = vadd.f32 %v353, %v431
  %433 = vmatmul.bf16.gmra.mxu0 %v404
  %v434 = vpop.f32.mrf.mxu0
  %v435 = vadd.f32 %v353, %v434
  %v436 = vpop.f32.mrf.mxu0
  %v437 = vadd.f32 %v353, %v436
  %438 = vmatmul.bf16.gmra.mxu0 %v407
  %v439 = vpop.f32.mrf.mxu0
  %v440 = vadd.f32 %v353, %v439
  %v441 = vpop.f32.mrf.mxu0
  %v442 = vadd.f32 %v353, %v441
  %443 = vmatmul.bf16.gmra.mxu0 %v410
  %v444 = vpop.f32.mrf.mxu0
  %v445 = vadd.f32 %v353, %v444
  %v446 = vpop.f32.mrf.mxu0
  %v447 = vadd.f32 %v353, %v446
  %448 = vmatmul.bf16.gmra.mxu0 %v413
  %v449 = vpop.f32.mrf.mxu0
  %v450 = vadd.f32 %v353, %v449
  %v451 = vpop.f32.mrf.mxu0
  %v452 = vadd.f32 %v353, %v451
  %453 = vdwg.mxu0
  %454 = vmatpush.bf16.msra.mxu0 0
  %455 = vmatpush.bf16.msra.mxu0 0
  %456 = vmatpush.bf16.msra.mxu0 0
  %457 = vmatpush.bf16.msra.mxu0 0
  %458 = vmatpush.bf16.msra.mxu0 %v388
  %459 = vmatpush.bf16.msra.mxu0 %v386
  %460 = vmatpush.bf16.msra.mxu0 %v384
  %461 = vmatpush.bf16.msra.mxu0 %v382
  %462 = vmatmul.bf16.gmra.mxu0 %v398
  %v463 = vpop.f32.mrf.mxu0
  %v464 = vadd.f32 %v354, %v463
  %v465 = vpop.f32.mrf.mxu0
  %v466 = vadd.f32 %v354, %v465
  %467 = vmatmul.bf16.gmra.mxu0 %v401
  %v468 = vpop.f32.mrf.mxu0
  %v469 = vadd.f32 %v354, %v468
  %v470 = vpop.f32.mrf.mxu0
  %v471 = vadd.f32 %v354, %v470
  %472 = vmatmul.bf16.gmra.mxu0 %v404
  %v473 = vpop.f32.mrf.mxu0
  %v474 = vadd.f32 %v354, %v473
  %v475 = vpop.f32.mrf.mxu0
  %v476 = vadd.f32 %v354, %v475
  %477 = vmatmul.bf16.gmra.mxu0 %v407
  %v478 = vpop.f32.mrf.mxu0
  %v479 = vadd.f32 %v354, %v478
  %v480 = vpop.f32.mrf.mxu0
  %v481 = vadd.f32 %v354, %v480
  %482 = vmatmul.bf16.gmra.mxu0 %v410
  %v483 = vpop.f32.mrf.mxu0
  %v484 = vadd.f32 %v354, %v483
  %v485 = vpop.f32.mrf.mxu0
  %v486 = vadd.f32 %v354, %v485
  %487 = vmatmul.bf16.gmra.mxu0 %v413
  %v488 = vpop.f32.mrf.mxu0
  %v489 = vadd.f32 %v354, %v488
  %v490 = vpop.f32.mrf.mxu0
  %v491 = vadd.f32 %v354, %v490
  %492 = vdwg.mxu0
  %v493 = vpack.c.bf16 %v464, %v425
  %v494 = vpack.c.bf16 %v466, %v427
  %v495 = vpack.c.bf16 %v469, %v430
  %v496 = vpack.c.bf16 %v471, %v432
  %v497 = vpack.c.bf16 %v474, %v435
  %v498 = vpack.c.bf16 %v476, %v437
  %v499 = vpack.c.bf16 %v479, %v440
  %v500 = vpack.c.bf16 %v481, %v442
  %v501 = vpack.c.bf16 %v484, %v445
  %v502 = vpack.c.bf16 %v486, %v447
  %v503 = vpack.c.bf16 %v489, %v450
  %v504 = vpack.c.bf16 %v491, %v452
  %vm505 = vcmask 1043456
  %vm506 = vcmask 523268
  %vm507 = vmor %vm506, %vm505
  %508 = vst.msk [vmem:[%s5] sm:$0xff] %vm507, %v493
  %509 = vst.msk [vmem:[%s5 + $0x8] sm:$0xff] %vm507, %v494
  %510 = vst.msk [vmem:[%s5 + $0x10] sm:$0xff] %vm507, %v495
  %511 = vst.msk [vmem:[%s5 + $0x18] sm:$0xff] %vm507, %v496
  %512 = vst.msk [vmem:[%s5 + $0x20] sm:$0xff] %vm507, %v497
  %513 = vst.msk [vmem:[%s5 + $0x28] sm:$0xff] %vm507, %v498
  %514 = vst.msk [vmem:[%s5 + $0x30] sm:$0xff] %vm507, %v499
  %515 = vst.msk [vmem:[%s5 + $0x38] sm:$0xff] %vm507, %v500
  %516 = vst.msk [vmem:[%s5 + $0x40] sm:$0xff] %vm507, %v501
  %517 = vst.msk [vmem:[%s5 + $0x48] sm:$0xff] %vm507, %v502
  %518 = vst.msk [vmem:[%s5 + $0x50] sm:$0xff] %vm507, %v503
  %519 = vst.msk [vmem:[%s5 + $0x58] sm:$0xff] %vm507, %v504
  // Predicated region
  $region22: #{visual_forward.12} parent=0 // pred_check
    _
  $region23: #{visual_forward.12} parent=0 // pred_check_branch
    %521 = sbr.rel (0) target = $region25
  $region24: #{visual_forward.12} parent=0 // pred_region
    _
  $region25: #{visual_forward.12} parent=0 // pred_fallthru
    _
  // Predicated region
  $region26: #{visual_forward.12} parent=0 // pred_check
    _
  $region27: #{visual_forward.12} parent=0 // pred_check_branch
    %523 = sbr.rel (0) target = $region29
  $region28: #{visual_forward.12} parent=0 // pred_region
    _
  $region29: #{visual_forward.12} parent=0 // pred_fallthru
    _

// kernel: visual_forward.13
$region0: #{visual_forward.13}
  #allocation0 [shape = 'u32[]', space=smem, size = 0x4, offset = 0x4, fixed_abs, tag = 'smem constant byte address 0x4 - core index']
  #allocation1 [shape = 'u32[72,128]{1,0:T(1,128)}', space=vmem, size = 0x9000, scoped, tag = 'internal scratch']
  %s0 = inlined_call_operand.vmem [shape: bf16[2,48,192], index: 0, kind: input, shape index: {}]
  %s1 = inlined_call_operand.vmem [shape: bf16[64,64], index: 1, kind: input, shape index: {}]
  %s2 = inlined_call_operand.vmem [shape: f32[1,64], index: 2, kind: input, shape index: {}]
  %s3 = inlined_call_operand.vmem [shape: f32[2,48,64], index: 3, kind: input, shape index: {}, may-alias: {3,4}]
  %s4 = inlined_call_operand.vmem [shape: f32[2,48,64], index: 4, kind: output, shape index: {}, may-alias: {3,4}]
  %s5 = sld [smem:[#allocation0]]
  $region49: #{visual_forward.13} parent=0
    _
  %s7 = ssub.s32 1, %s5
  %s8 = scalar_select 0, %s7, %s5
  loop: start=0, step=1, limit=8
  $region2: #{visual_forward.13} parent=0 // loop_pre_header
    _
  $region3: #{visual_forward.13} parent=0 // loop_header
    %s10 = sphi 0, %s14
    %p11 = scmp.ge.s32.totalorder %s10, 8
    %s17 = sphi 0, %s29
    %s18 = sphi 0, %s25
    %s19 = sphi 0, %s17
    %s20 = sphi 0, %s18
    %s21 = sphi 0, %s19
    %s22 = sphi 0, %s20
    %s32 = sphi 0, %s34
    %s35 = sphi 0, %s32
    %s36 = sphi 0, %s35
    %s52 = sphi 0, %s36
    %s56 = sphi 0, %s56
    %s58 = sphi 0, %s56
    %s59 = sphi 0, %s58
    %s73 = sphi 0, %s59
    %s77 = sphi 0, %s77
    %s79 = sphi 0, %s77
    %s80 = sphi 0, %s79
    %s94 = sphi 0, %s80
    %s102 = sphi 0, %s104
    %s105 = sphi 0, %s102
    %s106 = sphi 0, %s105
    %s122 = sphi 0, %s106
    %s130 = sphi 0, %s132
    %s133 = sphi 0, %s130
    %s134 = sphi 0, %s133
    %s150 = sphi 0, %s134
  $region4: #{visual_forward.13} parent=0 // loop_header_branch
    %13 = sbr.rel (%p11) target = $region8
  $region5: #{visual_forward.13} parent=0 // loop_body
    %s15 = ssub.s32 %s10, 1
    %s16 = ssub.s32 %s10, 2
    %s23 = sadd.s32 1, %s18
    %p24 = scmp.ge.s32.totalorder %s23, 3
    %s25 = scalar_select %p24, 0, %s23
    %s26 = sadd.s32 1, %s17
    %s27 = scalar_select %p24, %s26, %s17
    %p28 = scmp.ge.s32.totalorder %s27, 2
    %s29 = scalar_select %p28, 0, %s27
    %s30 = ssub.s32 %s17, %s29
    %p31 = scmp.eq.s32.totalorder %s30, 0
    %s33 = sadd.s32 %s32, 1
    %s34 = scalar_select %p31, %s32, %s33
    %p37 = pneg %p31
    %p38 = scmp.eq.s32.totalorder %s10, 5
    %p39 = por %p37, %p38
    %p40 = scmp.ne.s32.totalorder %s32, %s35
    %p41 = scmp.eq.s32.totalorder %s10, 0
    %p42 = por %p40, %p41
    %p43 = scmp.ne.s32.totalorder %s32, %s35
    %p44 = scmp.eq.s32.totalorder %s15, 5
    %p45 = por %p43, %p44
    %p46 = scmp.ne.s32.totalorder %s35, %s36
    %p47 = scmp.eq.s32.totalorder %s15, 0
    %p48 = por %p46, %p47
    %p49 = scmp.ne.s32.totalorder %s35, %s36
    %p50 = scmp.eq.s32.totalorder %s16, 5
    %p51 = por %p49, %p50
    %p53 = scmp.ne.s32.totalorder %s36, %s52
    %p54 = scmp.eq.s32.totalorder %s16, 0
    %p55 = por %p53, %p54
    %s57 = sadd.s32 %s56, 1
    %p60 = scmp.eq.s32.totalorder %s10, 5
    %p61 = scmp.ne.s32.totalorder %s56, %s58
    %p62 = scmp.eq.s32.totalorder %s10, 0
    %p63 = por %p61, %p62
    %p64 = scmp.ne.s32.totalorder %s56, %s58
    %p65 = scmp.eq.s32.totalorder %s15, 5
    %p66 = por %p64, %p65
    %p67 = scmp.ne.s32.totalorder %s58, %s59
    %p68 = scmp.eq.s32.totalorder %s15, 0
    %p69 = por %p67, %p68
    %p70 = scmp.ne.s32.totalorder %s58, %s59
    %p71 = scmp.eq.s32.totalorder %s16, 5
    %p72 = por %p70, %p71
    %p74 = scmp.ne.s32.totalorder %s59, %s73
    %p75 = scmp.eq.s32.totalorder %s16, 0
    %p76 = por %p74, %p75
    %s78 = sadd.s32 %s77, 1
    %p81 = scmp.eq.s32.totalorder %s10, 5
    %p82 = scmp.ne.s32.totalorder %s77, %s79
    %p83 = scmp.eq.s32.totalorder %s10, 0
    %p84 = por %p82, %p83
    %p85 = scmp.ne.s32.totalorder %s77, %s79
    %p86 = scmp.eq.s32.totalorder %s15, 5
    %p87 = por %p85, %p86
    %p88 = scmp.ne.s32.totalorder %s79, %s80
    %p89 = scmp.eq.s32.totalorder %s15, 0
    %p90 = por %p88, %p89
    %p91 = scmp.ne.s32.totalorder %s79, %s80
    %p92 = scmp.eq.s32.totalorder %s16, 5
    %p93 = por %p91, %p92
    %p95 = scmp.ne.s32.totalorder %s80, %s94
    %p96 = scmp.eq.s32.totalorder %s16, 0
    %p97 = por %p95, %p96
    %s98 = ssub.s32 %s17, %s29
    %s99 = ssub.s32 %s18, %s25
    %s100 = sor.u32 %s98, %s99
    %p101 = scmp.eq.s32.totalorder %s100, 0
    %s103 = sadd.s32 %s102, 1
    %s104 = scalar_select %p101, %s102, %s103
    %p107 = pneg %p101
    %p108 = scmp.eq.s32.totalorder %s10, 5
    %p109 = por %p107, %p108
    %p110 = scmp.ne.s32.totalorder %s102, %s105
    %p111 = scmp.eq.s32.totalorder %s10, 0
    %p112 = por %p110, %p111
    %p113 = scmp.ne.s32.totalorder %s102, %s105
    %p114 = scmp.eq.s32.totalorder %s15, 5
    %p115 = por %p113, %p114
    %p116 = scmp.ne.s32.totalorder %s105, %s106
    %p117 = scmp.eq.s32.totalorder %s15, 0
    %p118 = por %p116, %p117
    %p119 = scmp.ne.s32.totalorder %s105, %s106
    %p120 = scmp.eq.s32.totalorder %s16, 5
    %p121 = por %p119, %p120
    %p123 = scmp.ne.s32.totalorder %s106, %s122
    %p124 = scmp.eq.s32.totalorder %s16, 0
    %p125 = por %p123, %p124
    %s126 = ssub.s32 %s17, %s29
    %s127 = ssub.s32 %s18, %s25
    %s128 = sor.u32 %s126, %s127
    %p129 = scmp.eq.s32.totalorder %s128, 0
    %s131 = sadd.s32 %s130, 1
    %s132 = scalar_select %p129, %s130, %s131
    %p135 = pneg %p129
    %p136 = scmp.eq.s32.totalorder %s10, 5
    %p137 = por %p135, %p136
    %p138 = scmp.ne.s32.totalorder %s130, %s133
    %p139 = scmp.eq.s32.totalorder %s10, 0
    %p140 = por %p138, %p139
    %p141 = scmp.ne.s32.totalorder %s130, %s133
    %p142 = scmp.eq.s32.totalorder %s15, 5
    %p143 = por %p141, %p142
    %p144 = scmp.ne.s32.totalorder %s133, %s134
    %p145 = scmp.eq.s32.totalorder %s15, 0
    %p146 = por %p144, %p145
    %p147 = scmp.ne.s32.totalorder %s133, %s134
    %p148 = scmp.eq.s32.totalorder %s16, 5
    %p149 = por %p147, %p148
    %p151 = scmp.ne.s32.totalorder %s134, %s150
    %p152 = scmp.eq.s32.totalorder %s16, 0
    %p153 = por %p151, %p152
    %p154 = scmp.le.s32.totalorder 1, %s10
    %p155 = scmp.lt.s32.totalorder %s10, 7
    %p156 = pnand %p154, %p155
    %p157 = pneg %p156
    // Predicated region
    $region9: #{visual_forward.13} parent=5 // pred_check
      _
    $region10: #{visual_forward.13} parent=5 // pred_check_branch
      %159 = sbr.rel (%p156) target = $region12
    $region11: #{visual_forward.13} parent=5 // pred_region
      %s160 = ssub.s32 %s10, 1
      // Predicated region
      $region13: #{visual_forward.13} parent=11 // pred_check
        %p161 = pneg %p69
      $region14: #{visual_forward.13} parent=11 // pred_check_branch
        %163 = sbr.rel (%p161) target = $region16
      $region15: #{visual_forward.13} parent=11 // pred_region
        _
      $region16: #{visual_forward.13} parent=11 // pred_fallthru
        _
      // Predicated region
      $region17: #{visual_forward.13} parent=11 // pred_check
        %p164 = pneg %p90
      $region18: #{visual_forward.13} parent=11 // pred_check_branch
        %166 = sbr.rel (%p164) target = $region20
      $region19: #{visual_forward.13} parent=11 // pred_region
        _
      $region20: #{visual_forward.13} parent=11 // pred_fallthru
        _
    $region12: #{visual_forward.13} parent=5 // pred_fallthru
      _
    %p167 = scmp.lt.s32.totalorder %s10, 6
    // Predicated region
    $region21: #{visual_forward.13} parent=5 // pred_check
      %p168 = pneg %p167
    $region22: #{visual_forward.13} parent=5 // pred_check_branch
      %170 = sbr.rel (%p168) target = $region24
    $region23: #{visual_forward.13} parent=5 // pred_region
      // Predicated region
      $region25: #{visual_forward.13} parent=23 // pred_check
        %p171 = pneg %p42
      $region26: #{visual_forward.13} parent=23 // pred_check_branch
        %173 = sbr.rel (%p171) target = $region28
      $region27: #{visual_forward.13} parent=23 // pred_region
        %p174 = scmp.lt.s32.totalorder %s17, 1
        %s175 = scalar_select %p174, %s17, 1
        %s176 = smul.addr %s175, 12
        %s177 = smul.addr %s176, 4
        %s178 = scalar_lea.vmem %s0, %s177
      $region28: #{visual_forward.13} parent=23 // pred_fallthru
        _
      // Predicated region
      $region29: #{visual_forward.13} parent=23 // pred_check
        %p179 = pneg %p112
      $region30: #{visual_forward.13} parent=23 // pred_check_branch
        %181 = sbr.rel (%p179) target = $region32
      $region31: #{visual_forward.13} parent=23 // pred_region
        %s182 = smul.u32 2, %s18
        %p183 = scmp.lt.s32.totalorder %s17, 1
        %s184 = scalar_select %p183, %s17, 1
        %p185 = scmp.lt.s32.totalorder %s182, 5
        %s186 = scalar_select %p185, %s182, 5
        %s187 = smul.addr %s184, 6
        %s188 = sadd.s32 %s186, %s187
        %s189 = smul.addr %s188, 8
        %s190 = scalar_lea.vmem %s3, %s189
        %s191 = smul.u32 2, %s18
      $region32: #{visual_forward.13} parent=23 // pred_fallthru
        _
    $region24: #{visual_forward.13} parent=5 // pred_fallthru
      _
    %p192 = scmp.le.s32.totalorder 1, %s10
    %p193 = scmp.lt.s32.totalorder %s10, 7
    %p194 = pnand %p192, %p193
    %p195 = pneg %p194
    // Predicated region
    $region33: #{visual_forward.13} parent=5 // pred_check
      _
    $region34: #{visual_forward.13} parent=5 // pred_check_branch
      %197 = sbr.rel (%p194) target = $region36
    $region35: #{visual_forward.13} parent=5 // pred_region
      %s198 = ssub.s32 %s10, 1
      %p199 = scmp.lt.s32.totalorder %s19, 1
      %s200 = scalar_select %p199, %s19, 1
      %s201 = smul.addr %s200, 12
      %s202 = smul.addr %s201, 4
      %s203 = scalar_lea.vmem %s0, %s202
      %p204 = pneg %p48
      %p205 = pneg %p45
      %p206 = pneg %p69
      %p207 = pneg %p66
      %p208 = pneg %p90
      %p209 = pneg %p87
      %s210 = smul.u32 2, %s20
      %p211 = scmp.lt.s32.totalorder %s19, 1
      %s212 = scalar_select %p211, %s19, 1
      %p213 = scmp.lt.s32.totalorder %s210, 5
      %s214 = scalar_select %p213, %s210, 5
      %s215 = smul.addr %s212, 6
      %s216 = sadd.s32 %s214, %s215
      %s217 = smul.addr %s216, 8
      %s218 = scalar_lea.vmem %s3, %s217
      %p219 = pneg %p118
      %p220 = pneg %p115
      %p221 = pneg %p146
      %p222 = pneg %p143
      %s223 = smul.u32 2, %s20
      %p224 = scmp.lt.s32.totalorder %s19, 1
      %s225 = scalar_select %p224, %s19, 1
      %p226 = scmp.lt.s32.totalorder %s223, 5
      %s227 = scalar_select %p226, %s223, 5
      %s228 = smul.addr %s225, 6
      %s229 = sadd.s32 %s227, %s228
      %s230 = smul.addr %s229, 8
      %s231 = scalar_lea.vmem %s4, %s230
      %p232 = scmp.lt.s32.totalorder %s19, 1
      %s233 = scalar_select %p232, %s19, 1
      %s234 = smul.addr %s233, 12
      %s235 = smul.addr %s234, 4
      %s236 = scalar_lea.vmem %s0, %s235
      %s237 = smul.u32 2, %s20
      %p238 = scmp.lt.s32.totalorder %s19, 1
      %s239 = scalar_select %p238, %s19, 1
      %p240 = scmp.lt.s32.totalorder %s237, 5
      %s241 = scalar_select %p240, %s237, 5
      %s242 = smul.addr %s239, 6
      %s243 = sadd.s32 %s241, %s242
      %s244 = smul.addr %s243, 8
      %s245 = scalar_lea.vmem %s3, %s244
      %s246 = smul.u32 2, %s20
      %s247 = smul.u32 2, %s20
      %p248 = scmp.lt.s32.totalorder %s19, 1
      %s249 = scalar_select %p248, %s19, 1
      %p250 = scmp.lt.s32.totalorder %s247, 5
      %s251 = scalar_select %p250, %s247, 5
      %s252 = smul.addr %s249, 6
      %s253 = sadd.s32 %s251, %s252
      %s254 = smul.addr %s253, 8
      %s255 = scalar_lea.vmem %s4, %s254
      %s256 = smul.u32 2, %s20
      %s258 = smul.u32 %s20, 16
      %s259 = sshra.s32 %s258, 3
      %s260 = sand.u32 %s258, 7
      %s261 = smul.u32 %s259, 2
      %s262 = smul.addr %s261, 4
      %s263 = scalar_lea.vmem %s236, %s262
      %v264 = vld [vmem:[%s263] sm:$0xff]
      %v265 = vld [vmem:[%s263 + $0x8] sm:$0xff]
      %v266 = vlaneseq
      %v267 = vand.u32 %v266, 127
      %vm268 = vcmp.lt.s32.totalorder %v267, 37
      %v269 = vld [vmem:[%s245] sm:$0xff]
      %v270 = vld [vmem:[%s245 + $0x8] sm:$0xff]
      %v271 = vld [vmem:[%s2] sm:$0x1]
      %v273 = vperm.slane %v271, 0
      %v275 = vadd.f32 %v269, %v273
      %v276 = vadd.f32 %v270, %v273
      %v277 = vld [vmem:[%s236] sm:$0xf]
      %v278 = vld [vmem:[%s236 + $0x8] sm:$0xf]
      %v279 = vld [vmem:[%s236 + $0x10] sm:$0xf]
      %v280 = vld [vmem:[%s236 + $0x18] sm:$0xf]
      %v281 = vld [vmem:[%s236 + $0x20] sm:$0xf]
      %v282 = vld [vmem:[%s236 + $0x28] sm:$0xf]
      %v283 = vld [vmem:[%s236 + $0x4] sm:$0xf]
      %v284 = vld [vmem:[%s236 + $0xc] sm:$0xf]
      %v285 = vld [vmem:[%s236 + $0x14] sm:$0xf]
      %v286 = vld [vmem:[%s236 + $0x1c] sm:$0xf]
      %v287 = vld [vmem:[%s236 + $0x24] sm:$0xf]
      %v288 = vld [vmem:[%s236 + $0x2c] sm:$0xf]
      %v291 = vunpack.c.l.b16 %v264
      %v292 = vunpack.c.l.b16 %v265
      %v293 = vpack.c.b16 %v292, %v291
      %v300 = vunpack.c.l.b16 %v277
      %v301 = vunpack.c.l.b16 %v278
      %v302 = vunpack.c.l.b16 %v279
      %v303 = vunpack.c.l.b16 %v280
      %v304 = vunpack.c.l.b16 %v281
      %v305 = vunpack.c.l.b16 %v282
      %v306 = vpack.c.b16 %v301, %v300
      %v307 = vpack.c.b16 %v303, %v302
      %v308 = vpack.c.b16 %v305, %v304
      %309 = vrot.lane.b32.xlu0 %v306, 64
      %v310 = vpop.permute.xlu0 %309
      %311 = vrot.lane.b32.xlu0 %v307, 64
      %v312 = vpop.permute.xlu0 %311
      %313 = vrot.lane.b32.xlu0 %v308, 64
      %v314 = vpop.permute.xlu0 %313
      %vm315 = vcmask 130048
      %v317 = vsel %vm315, %v293, 0
      %v320 = vsel %vm315, %v310, 0
      %v323 = vsel %vm315, %v312, 0
      %v326 = vsel %vm315, %v314, 0
      %328 = vmatpush.bf16.xpose.msra.mxu0 0
      %329 = vmatpush.bf16.xpose.msra.mxu0 0
      %330 = vmatpush.bf16.xpose.msra.mxu0 0
      %331 = vmatpush.bf16.xpose.msra.mxu0 0
      %332 = vmatpush.bf16.xpose.msra.mxu0 0
      %333 = vmatpush.bf16.xpose.msra.mxu0 %v326
      %334 = vmatpush.bf16.xpose.msra.mxu0 %v323
      %335 = vmatpush.bf16.xpose.msra.mxu0 %v320
      %336 = vmatmul.bf16.gmra.mxu0 %v317
      %v337 = vpop.f32.mrf.mxu0
      %v338 = vadd.f32 0.0, %v337
      %v339 = vpop.f32.mrf.mxu0
      %v340 = vadd.f32 0.0, %v339
      %341 = vdwg.mxu0
      %v342 = vmul.f32 %v338, 0.25
      %v343 = vmul.f32 %v340, 0.25
      %v344 = vsel %vm268, 1, 0
      %vm345 = vcmp.eq.s32.totalorder %v344, 1
      %v346 = vsel %vm345, %v342, -1e+30
      %v347 = vsel %vm345, %v343, -1e+30
      %vm348 = vcmask 392192
      %v349 = vsel %vm348, %v346, -inf
      %350 = vmax.xlane.f32.xlu0 %v349
      %v351 = vpop.xlane.xlu0 %350
      %v352 = vsel %vm348, %v347, -inf
      %353 = vmax.xlane.f32.xlu0 %v352
      %v354 = vpop.xlane.xlu0 %353
      %v355 = vsub.f32 %v346, %v351
      %v356 = vsub.f32 %v347, %v354
      %v357 = vmul.f32 %v355, 1.442695
      %v358 = vpow.pop %v357
      %v359 = vmul.f32 %v356, 1.442695
      %v360 = vpow.pop %v359
      %v361 = vsel %vm348, %v358, 0.0
      %362 = vadd.xlane.f32.xlu0 %v361
      %v363 = vpop.xlane.xlu0 %362
      %v364 = vsel %vm348, %v360, 0.0
      %365 = vadd.xlane.f32.xlu0 %v364
      %v366 = vpop.xlane.xlu0 %365
      %v367 = vrcp.pop %v363
      %v368 = vrcp.pop %v366
      %v369 = vmul.f32 %v358, %v367
      %v370 = vmul.f32 %v360, %v368
      %v371 = vpack.c.bf16 %v370, %v369
      %v378 = vunpack.c.l.b16 %v283
      %v379 = vunpack.c.l.b16 %v284
      %v380 = vunpack.c.l.b16 %v285
      %v381 = vunpack.c.l.b16 %v286
      %v382 = vunpack.c.l.b16 %v287
      %v383 = vunpack.c.l.b16 %v288
      %v384 = vpack.c.b16 %v379, %v378
      %v385 = vpack.c.b16 %v381, %v380
      %v386 = vpack.c.b16 %v383, %v382
      %v391 = vsel %vm348, %v371, 0
      %393 = vmatpush.bf16.msra.mxu0 0
      %394 = vmatpush.bf16.msra.mxu0 0
      %395 = vmatpush.bf16.msra.mxu0 0
      %396 = vmatpush.bf16.msra.mxu0 0
      %397 = vmatpush.bf16.msra.mxu0 0
      %398 = vmatpush.bf16.msra.mxu0 %v386
      %399 = vmatpush.bf16.msra.mxu0 %v385
      %400 = vmatpush.bf16.msra.mxu0 %v384
      %401 = vmatmul.bf16.gmra.mxu0 %v391
      %v402 = vpop.f32.mrf.mxu0
      %v403 = vadd.f32 0.0, %v402
      %v404 = vpop.f32.mrf.mxu0
      %v405 = vadd.f32 0.0, %v404
      %406 = vdwg.mxu0
      %v407 = vpack.c.bf16 %v405, %v403
      %v408 = vld [vmem:[%s1] sm:$0xf]
      %v409 = vld [vmem:[%s1 + $0x4] sm:$0xf]
      %v412 = vunpack.c.l.b16 %v408
      %v413 = vunpack.c.l.b16 %v409
      %v414 = vpack.c.b16 %v413, %v412
      %v417 = vsel %vm315, %v407, 0
      %419 = vmatpush.bf16.msra.mxu0 0
      %420 = vmatpush.bf16.msra.mxu0 0
      %421 = vmatpush.bf16.msra.mxu0 0
      %422 = vmatpush.bf16.msra.mxu0 0
      %423 = vmatpush.bf16.msra.mxu0 0
      %424 = vmatpush.bf16.msra.mxu0 0
      %425 = vmatpush.bf16.msra.mxu0 0
      %426 = vmatpush.bf16.msra.mxu0 %v414
      %427 = vmatmul.bf16.gmra.mxu0 %v417
      %v428 = vpop.f32.mrf.mxu0
      %v429 = vadd.f32 0.0, %v428
      %v430 = vpop.f32.mrf.mxu0
      %v431 = vadd.f32 0.0, %v430
      %432 = vdwg.mxu0
      %v433 = vadd.f32 %v275, %v429
      %v434 = vadd.f32 %v276, %v431
      %435 = vrot.lane.b32.xlu0 %v293, 112
      %v436 = vpop.permute.xlu0 %435
      %437 = vrot.lane.b32.xlu0 %v306, 48
      %v438 = vpop.permute.xlu0 %437
      %439 = vrot.lane.b32.xlu0 %v307, 48
      %v440 = vpop.permute.xlu0 %439
      %441 = vrot.lane.b32.xlu0 %v308, 48
      %v442 = vpop.permute.xlu0 %441
      %v444 = vsel %vm315, %v436, 0
      %v447 = vsel %vm315, %v438, 0
      %v450 = vsel %vm315, %v440, 0
      %v453 = vsel %vm315, %v442, 0
      %455 = vmatpush.bf16.xpose.msra.mxu0 0
      %456 = vmatpush.bf16.xpose.msra.mxu0 0
      %457 = vmatpush.bf16.xpose.msra.mxu0 0
      %458 = vmatpush.bf16.xpose.msra.mxu0 0
      %459 = vmatpush.bf16.xpose.msra.mxu0 0
      %460 = vmatpush.bf16.xpose.msra.mxu0 %v453
      %461 = vmatpush.bf16.xpose.msra.mxu0 %v450
      %462 = vmatpush.bf16.xpose.msra.mxu0 %v447
      %463 = vmatmul.bf16.gmra.mxu0 %v444
      %v464 = vpop.f32.mrf.mxu0
      %v465 = vadd.f32 0.0, %v464
      %v466 = vpop.f32.mrf.mxu0
      %v467 = vadd.f32 0.0, %v466
      %468 = vdwg.mxu0
      %v469 = vmul.f32 %v465, 0.25
      %v470 = vmul.f32 %v467, 0.25
      %v471 = vsel %vm345, %v469, -1e+30
      %v472 = vsel %vm345, %v470, -1e+30
      %v473 = vsel %vm348, %v471, -inf
      %474 = vmax.xlane.f32.xlu0 %v473
      %v475 = vpop.xlane.xlu0 %474
      %v476 = vsel %vm348, %v472, -inf
      %477 = vmax.xlane.f32.xlu0 %v476
      %v478 = vpop.xlane.xlu0 %477
      %v479 = vsub.f32 %v471, %v475
      %v480 = vsub.f32 %v472, %v478
      %v481 = vmul.f32 %v479, 1.442695
      %v482 = vpow.pop %v481
      %v483 = vmul.f32 %v480, 1.442695
      %v484 = vpow.pop %v483
      %v485 = vsel %vm348, %v482, 0.0
      %486 = vadd.xlane.f32.xlu0 %v485
      %v487 = vpop.xlane.xlu0 %486
      %v488 = vsel %vm348, %v484, 0.0
      %489 = vadd.xlane.f32.xlu0 %v488
      %v490 = vpop.xlane.xlu0 %489
      %v491 = vrcp.pop %v487
      %v492 = vrcp.pop %v490
      %v493 = vmul.f32 %v482, %v491
      %v494 = vmul.f32 %v484, %v492
      %v495 = vpack.c.bf16 %v494, %v493
      %496 = vrot.lane.b32.xlu0 %v384, 112
      %v497 = vpop.permute.xlu0 %496
      %498 = vrot.lane.b32.xlu0 %v385, 112
      %v499 = vpop.permute.xlu0 %498
      %500 = vrot.lane.b32.xlu0 %v386, 112
      %v501 = vpop.permute.xlu0 %500
      %v506 = vsel %vm348, %v495, 0
      %508 = vmatpush.bf16.msra.mxu0 0
      %509 = vmatpush.bf16.msra.mxu0 0
      %510 = vmatpush.bf16.msra.mxu0 0
      %511 = vmatpush.bf16.msra.mxu0 0
      %512 = vmatpush.bf16.msra.mxu0 0
      %513 = vmatpush.bf16.msra.mxu0 %v501
      %514 = vmatpush.bf16.msra.mxu0 %v499
      %515 = vmatpush.bf16.msra.mxu0 %v497
      %516 = vmatmul.bf16.gmra.mxu0 %v506
      %v517 = vpop.f32.mrf.mxu0
      %v518 = vadd.f32 0.0, %v517
      %v519 = vpop.f32.mrf.mxu0
      %v520 = vadd.f32 0.0, %v519
      %521 = vdwg.mxu0
      %v522 = vpack.c.bf16 %v520, %v518
      %v523 = vld [vmem:[%s1 + $0x8] sm:$0xf]
      %v524 = vld [vmem:[%s1 + $0xc] sm:$0xf]
      %v527 = vunpack.c.l.b16 %v523
      %v528 = vunpack.c.l.b16 %v524
      %v529 = vpack.c.b16 %v528, %v527
      %v532 = vsel %vm315, %v522, 0
      %534 = vmatpush.bf16.msra.mxu0 0
      %535 = vmatpush.bf16.msra.mxu0 0
      %536 = vmatpush.bf16.msra.mxu0 0
      %537 = vmatpush.bf16.msra.mxu0 0
      %538 = vmatpush.bf16.msra.mxu0 0
      %539 = vmatpush.bf16.msra.mxu0 0
      %540 = vmatpush.bf16.msra.mxu0 0
      %541 = vmatpush.bf16.msra.mxu0 %v529
      %542 = vmatmul.bf16.gmra.mxu0 %v532
      %v543 = vpop.f32.mrf.mxu0
      %v544 = vadd.f32 0.0, %v543
      %v545 = vpop.f32.mrf.mxu0
      %v546 = vadd.f32 0.0, %v545
      %547 = vdwg.mxu0
      %v548 = vadd.f32 %v433, %v544
      %v549 = vadd.f32 %v434, %v546
      %550 = vrot.lane.b32.xlu0 %v293, 96
      %v551 = vpop.permute.xlu0 %550
      %552 = vrot.lane.b32.xlu0 %v306, 32
      %v553 = vpop.permute.xlu0 %552
      %554 = vrot.lane.b32.xlu0 %v307, 32
      %v555 = vpop.permute.xlu0 %554
      %556 = vrot.lane.b32.xlu0 %v308, 32
      %v557 = vpop.permute.xlu0 %556
      %v559 = vsel %vm315, %v551, 0
      %v562 = vsel %vm315, %v553, 0
      %v565 = vsel %vm315, %v555, 0
      %v568 = vsel %vm315, %v557, 0
      %570 = vmatpush.bf16.xpose.msra.mxu0 0
      %571 = vmatpush.bf16.xpose.msra.mxu0 0
      %572 = vmatpush.bf16.xpose.msra.mxu0 0
      %573 = vmatpush.bf16.xpose.msra.mxu0 0
      %574 = vmatpush.bf16.xpose.msra.mxu0 0
      %575 = vmatpush.bf16.xpose.msra.mxu0 %v568
      %576 = vmatpush.bf16.xpose.msra.mxu0 %v565
      %577 = vmatpush.bf16.xpose.msra.mxu0 %v562
      %578 = vmatmul.bf16.gmra.mxu0 %v559
      %v579 = vpop.f32.mrf.mxu0
      %v580 = vadd.f32 0.0, %v579
      %v581 = vpop.f32.mrf.mxu0
      %v582 = vadd.f32 0.0, %v581
      %583 = vdwg.mxu0
      %v584 = vmul.f32 %v580, 0.25
      %v585 = vmul.f32 %v582, 0.25
      %v586 = vsel %vm345, %v584, -1e+30
      %v587 = vsel %vm345, %v585, -1e+30
      %v588 = vsel %vm348, %v586, -inf
      %589 = vmax.xlane.f32.xlu0 %v588
      %v590 = vpop.xlane.xlu0 %589
      %v591 = vsel %vm348, %v587, -inf
      %592 = vmax.xlane.f32.xlu0 %v591
      %v593 = vpop.xlane.xlu0 %592
      %v594 = vsub.f32 %v586, %v590
      %v595 = vsub.f32 %v587, %v593
      %v596 = vmul.f32 %v594, 1.442695
      %v597 = vpow.pop %v596
      %v598 = vmul.f32 %v595, 1.442695
      %v599 = vpow.pop %v598
      %v600 = vsel %vm348, %v597, 0.0
      %601 = vadd.xlane.f32.xlu0 %v600
      %v602 = vpop.xlane.xlu0 %601
      %v603 = vsel %vm348, %v599, 0.0
      %604 = vadd.xlane.f32.xlu0 %v603
      %v605 = vpop.xlane.xlu0 %604
      %v606 = vrcp.pop %v602
      %v607 = vrcp.pop %v605
      %v608 = vmul.f32 %v597, %v606
      %v609 = vmul.f32 %v599, %v607
      %v610 = vpack.c.bf16 %v609, %v608
      %611 = vrot.lane.b32.xlu0 %v384, 96
      %v612 = vpop.permute.xlu0 %611
      %613 = vrot.lane.b32.xlu0 %v385, 96
      %v614 = vpop.permute.xlu0 %613
      %615 = vrot.lane.b32.xlu0 %v386, 96
      %v616 = vpop.permute.xlu0 %615
      %v621 = vsel %vm348, %v610, 0
      %623 = vmatpush.bf16.msra.mxu0 0
      %624 = vmatpush.bf16.msra.mxu0 0
      %625 = vmatpush.bf16.msra.mxu0 0
      %626 = vmatpush.bf16.msra.mxu0 0
      %627 = vmatpush.bf16.msra.mxu0 0
      %628 = vmatpush.bf16.msra.mxu0 %v616
      %629 = vmatpush.bf16.msra.mxu0 %v614
      %630 = vmatpush.bf16.msra.mxu0 %v612
      %631 = vmatmul.bf16.gmra.mxu0 %v621
      %v632 = vpop.f32.mrf.mxu0
      %v633 = vadd.f32 0.0, %v632
      %v634 = vpop.f32.mrf.mxu0
      %v635 = vadd.f32 0.0, %v634
      %636 = vdwg.mxu0
      %v637 = vpack.c.bf16 %v635, %v633
      %v638 = vld [vmem:[%s1 + $0x10] sm:$0xf]
      %v639 = vld [vmem:[%s1 + $0x14] sm:$0xf]
      %v642 = vunpack.c.l.b16 %v638
      %v643 = vunpack.c.l.b16 %v639
      %v644 = vpack.c.b16 %v643, %v642
      %v647 = vsel %vm315, %v637, 0
      %649 = vmatpush.bf16.msra.mxu0 0
      %650 = vmatpush.bf16.msra.mxu0 0
      %651 = vmatpush.bf16.msra.mxu0 0
      %652 = vmatpush.bf16.msra.mxu0 0
      %653 = vmatpush.bf16.msra.mxu0 0
      %654 = vmatpush.bf16.msra.mxu0 0
      %655 = vmatpush.bf16.msra.mxu0 0
      %656 = vmatpush.bf16.msra.mxu0 %v644
      %657 = vmatmul.bf16.gmra.mxu0 %v647
      %v658 = vpop.f32.mrf.mxu0
      %v659 = vadd.f32 0.0, %v658
      %v660 = vpop.f32.mrf.mxu0
      %v661 = vadd.f32 0.0, %v660
      %662 = vdwg.mxu0
      %v663 = vadd.f32 %v548, %v659
      %v664 = vadd.f32 %v549, %v661
      %665 = vrot.lane.b32.xlu0 %v293, 80
      %v666 = vpop.permute.xlu0 %665
      %667 = vrot.lane.b32.xlu0 %v306, 16
      %v668 = vpop.permute.xlu0 %667
      %669 = vrot.lane.b32.xlu0 %v307, 16
      %v670 = vpop.permute.xlu0 %669
      %671 = vrot.lane.b32.xlu0 %v308, 16
      %v672 = vpop.permute.xlu0 %671
      %v674 = vsel %vm315, %v666, 0
      %v677 = vsel %vm315, %v668, 0
      %v680 = vsel %vm315, %v670, 0
      %v683 = vsel %vm315, %v672, 0
      %685 = vmatpush.bf16.xpose.msra.mxu0 0
      %686 = vmatpush.bf16.xpose.msra.mxu0 0
      %687 = vmatpush.bf16.xpose.msra.mxu0 0
      %688 = vmatpush.bf16.xpose.msra.mxu0 0
      %689 = vmatpush.bf16.xpose.msra.mxu0 0
      %690 = vmatpush.bf16.xpose.msra.mxu0 %v683
      %691 = vmatpush.bf16.xpose.msra.mxu0 %v680
      %692 = vmatpush.bf16.xpose.msra.mxu0 %v677
      %693 = vmatmul.bf16.gmra.mxu0 %v674
      %v694 = vpop.f32.mrf.mxu0
      %v695 = vadd.f32 0.0, %v694
      %v696 = vpop.f32.mrf.mxu0
      %v697 = vadd.f32 0.0, %v696
      %698 = vdwg.mxu0
      %v699 = vmul.f32 %v695, 0.25
      %v700 = vmul.f32 %v697, 0.25
      %v701 = vsel %vm345, %v699, -1e+30
      %v702 = vsel %vm345, %v700, -1e+30
      %v703 = vsel %vm348, %v701, -inf
      %704 = vmax.xlane.f32.xlu0 %v703
      %v705 = vpop.xlane.xlu0 %704
      %v706 = vsel %vm348, %v702, -inf
      %707 = vmax.xlane.f32.xlu0 %v706
      %v708 = vpop.xlane.xlu0 %707
      %v709 = vsub.f32 %v701, %v705
      %v710 = vsub.f32 %v702, %v708
      %v711 = vmul.f32 %v709, 1.442695
      %v712 = vpow.pop %v711
      %v713 = vmul.f32 %v710, 1.442695
      %v714 = vpow.pop %v713
      %v715 = vsel %vm348, %v712, 0.0
      %716 = vadd.xlane.f32.xlu0 %v715
      %v717 = vpop.xlane.xlu0 %716
      %v718 = vsel %vm348, %v714, 0.0
      %719 = vadd.xlane.f32.xlu0 %v718
      %v720 = vpop.xlane.xlu0 %719
      %v721 = vrcp.pop %v717
      %v722 = vrcp.pop %v720
      %v723 = vmul.f32 %v712, %v721
      %v724 = vmul.f32 %v714, %v722
      %v725 = vpack.c.bf16 %v724, %v723
      %726 = vrot.lane.b32.xlu0 %v384, 80
      %v727 = vpop.permute.xlu0 %726
      %728 = vrot.lane.b32.xlu0 %v385, 80
      %v729 = vpop.permute.xlu0 %728
      %730 = vrot.lane.b32.xlu0 %v386, 80
      %v731 = vpop.permute.xlu0 %730
      %v736 = vsel %vm348, %v725, 0
      %738 = vmatpush.bf16.msra.mxu0 0
      %739 = vmatpush.bf16.msra.mxu0 0
      %740 = vmatpush.bf16.msra.mxu0 0
      %741 = vmatpush.bf16.msra.mxu0 0
      %742 = vmatpush.bf16.msra.mxu0 0
      %743 = vmatpush.bf16.msra.mxu0 %v731
      %744 = vmatpush.bf16.msra.mxu0 %v729
      %745 = vmatpush.bf16.msra.mxu0 %v727
      %746 = vmatmul.bf16.gmra.mxu0 %v736
      %v747 = vpop.f32.mrf.mxu0
      %v748 = vadd.f32 0.0, %v747
      %v749 = vpop.f32.mrf.mxu0
      %v750 = vadd.f32 0.0, %v749
      %751 = vdwg.mxu0
      %v752 = vpack.c.bf16 %v750, %v748
      %v753 = vld [vmem:[%s1 + $0x18] sm:$0xf]
      %v754 = vld [vmem:[%s1 + $0x1c] sm:$0xf]
      %v757 = vunpack.c.l.b16 %v753
      %v758 = vunpack.c.l.b16 %v754
      %v759 = vpack.c.b16 %v758, %v757
      %v762 = vsel %vm315, %v752, 0
      %764 = vmatpush.bf16.msra.mxu0 0
      %765 = vmatpush.bf16.msra.mxu0 0
      %766 = vmatpush.bf16.msra.mxu0 0
      %767 = vmatpush.bf16.msra.mxu0 0
      %768 = vmatpush.bf16.msra.mxu0 0
      %769 = vmatpush.bf16.msra.mxu0 0
      %770 = vmatpush.bf16.msra.mxu0 0
      %771 = vmatpush.bf16.msra.mxu0 %v759
      %772 = vmatmul.bf16.gmra.mxu0 %v762
      %v773 = vpop.f32.mrf.mxu0
      %v774 = vadd.f32 0.0, %v773
      %v775 = vpop.f32.mrf.mxu0
      %v776 = vadd.f32 0.0, %v775
      %777 = vdwg.mxu0
      %v778 = vadd.f32 %v663, %v774
      %v779 = vadd.f32 %v664, %v776
      %vm780 = vcmask 523264
      %781 = vst.msk [vmem:[%s255] sm:$0xff] %vm780, %v778
      %782 = vst.msk [vmem:[%s255 + $0x8] sm:$0xff] %vm780, %v779
      %s783 = smul.u32 2, %s20
      %p784 = scmp.lt.s32.totalorder %s19, 1
      %s785 = scalar_select %p784, %s19, 1
      %p786 = scmp.lt.s32.totalorder %s783, 5
      %s787 = scalar_select %p786, %s783, 5
      %s788 = smul.addr %s785, 6
      %s789 = sadd.s32 %s787, %s788
      %s790 = smul.addr %s789, 8
      %s791 = scalar_lea.vmem %s4, %s790
      // Predicated region
      $region37: #{visual_forward.13} parent=35 // pred_check
        %p792 = pneg %p143
      $region38: #{visual_forward.13} parent=35 // pred_check_branch
        %794 = sbr.rel (%p792) target = $region40
      $region39: #{visual_forward.13} parent=35 // pred_region
        %s795 = smul.u32 2, %s20
      $region40: #{visual_forward.13} parent=35 // pred_fallthru
        _
    $region36: #{visual_forward.13} parent=5 // pred_fallthru
      _
    %p796 = scmp.le.s32.totalorder 2, %s10
    // Predicated region
    $region41: #{visual_forward.13} parent=5 // pred_check
      %p797 = pneg %p796
    $region42: #{visual_forward.13} parent=5 // pred_check_branch
      %799 = sbr.rel (%p797) target = $region44
    $region43: #{visual_forward.13} parent=5 // pred_region
      %s800 = ssub.s32 %s10, 2
      // Predicated region
      $region45: #{visual_forward.13} parent=43 // pred_check
        %p801 = pneg %p149
      $region46: #{visual_forward.13} parent=43 // pred_check_branch
        %803 = sbr.rel (%p801) target = $region48
      $region47: #{visual_forward.13} parent=43 // pred_region
        %s804 = smul.u32 2, %s22
        %p805 = scmp.lt.s32.totalorder %s21, 1
        %s806 = scalar_select %p805, %s21, 1
        %p807 = scmp.lt.s32.totalorder %s804, 5
        %s808 = scalar_select %p807, %s804, 5
        %s809 = smul.addr %s806, 6
        %s810 = sadd.s32 %s808, %s809
        %s811 = smul.addr %s810, 8
        %s812 = scalar_lea.vmem %s4, %s811
      $region48: #{visual_forward.13} parent=43 // pred_fallthru
        _
    $region44: #{visual_forward.13} parent=5 // pred_fallthru
      _
  $region6: #{visual_forward.13} parent=0 // loop_footer
    %s14 = sadd.s32 1, %s10
  $region7: #{visual_forward.13} parent=0 // loop_footer_branch
    %9 = sbr.rel target = $region3
  $region8: #{visual_forward.13} parent=0 // loop_exit
    _

// kernel: visual_forward.19
$region0: #{visual_forward.19}
  #allocation0 [shape = 'u32[]', space=smem, size = 0x4, offset = 0x4, fixed_abs, tag = 'smem constant byte address 0x4 - core index']
  #allocation1 [shape = 'u32[72,128]{1,0:T(1,128)}', space=vmem, size = 0x9000, scoped, tag = 'internal scratch']
  %s0 = inlined_call_operand.vmem [shape: f32[2,64], index: 0, kind: input, shape index: {}]
  %s1 = inlined_call_operand.vmem [shape: bf16[64,32], index: 1, kind: input, shape index: {}]
  %s2 = inlined_call_operand.vmem [shape: f32[1,32], index: 2, kind: input, shape index: {}]
  %s3 = inlined_call_operand.hbm [shape: f32[2,32], index: 3, kind: output, shape index: {}]
  %s4 = sld [smem:[#allocation0]]
  $region22: #{visual_forward.19} parent=0
    _
  %s6 = ssub.s32 1, %s4
  %s7 = scalar_select 0, %s6, %s4
  $region1: #{visual_forward.19} parent=0
    #allocation2 [shape = 'u8[1024]{0}', space=vmem, size = 0x400, scoped, tag = 'output window, operand 0, single buffered']
    #allocation3 [shape = 's32[1]{0}', space=sflag, size = 0x4, scoped, tag = 'scoped memory for visual_forward.19']
    %8 = vsyncpa [#allocation3], 0
    // Predicated region
    $region2: #{visual_forward.19} parent=1 // pred_check
      _
    $region3: #{visual_forward.19} parent=1 // pred_check_branch
      %10 = sbr.rel (0) target = $region5
    $region4: #{visual_forward.19} parent=1 // pred_region
      _
    $region5: #{visual_forward.19} parent=1 // pred_fallthru
      _
    // Predicated region
    $region6: #{visual_forward.19} parent=1 // pred_check
      _
    $region7: #{visual_forward.19} parent=1 // pred_check_branch
      %12 = sbr.rel (0) target = $region9
    $region8: #{visual_forward.19} parent=1 // pred_region
      _
    $region9: #{visual_forward.19} parent=1 // pred_fallthru
      _
    // Predicated region
    $region10: #{visual_forward.19} parent=1 // pred_check
      _
    $region11: #{visual_forward.19} parent=1 // pred_check_branch
      %14 = sbr.rel (0) target = $region13
    $region12: #{visual_forward.19} parent=1 // pred_region
      _
    $region13: #{visual_forward.19} parent=1 // pred_fallthru
      _
    %v16 = vld [vmem:[%s0] sm:$0x3]
    %v17 = vpack.c.bf16 %v16, %v16
    %v18 = vld [vmem:[%s1] sm:$0xf]
    %v19 = vld [vmem:[%s1 + $0x4] sm:$0xf]
    %v20 = vld [vmem:[%s1 + $0x8] sm:$0xf]
    %v21 = vld [vmem:[%s1 + $0xc] sm:$0xf]
    %v22 = vld [vmem:[%s1 + $0x10] sm:$0xf]
    %v23 = vld [vmem:[%s1 + $0x14] sm:$0xf]
    %v24 = vld [vmem:[%s1 + $0x18] sm:$0xf]
    %v25 = vld [vmem:[%s1 + $0x1c] sm:$0xf]
    %v26 = vld [vmem:[%s2] sm:$0x1]
    %v28 = vperm.slane %v26, 0
    %v38 = vunpack.c.l.b16 %v18
    %v39 = vunpack.c.l.b16 %v19
    %v40 = vunpack.c.l.b16 %v20
    %v41 = vunpack.c.l.b16 %v21
    %v42 = vunpack.c.l.b16 %v22
    %v43 = vunpack.c.l.b16 %v23
    %v44 = vunpack.c.l.b16 %v24
    %v45 = vunpack.c.l.b16 %v25
    %v46 = vpack.c.b16 %v39, %v38
    %v47 = vpack.c.b16 %v41, %v40
    %v48 = vpack.c.b16 %v43, %v42
    %v49 = vpack.c.b16 %v45, %v44
    %vm54 = vcmask 523264
    %v56 = vsel %vm54, %v17, 0
    %58 = vmatpush.bf16.msra.mxu0 0
    %59 = vmatpush.bf16.msra.mxu0 0
    %60 = vmatpush.bf16.msra.mxu0 0
    %61 = vmatpush.bf16.msra.mxu0 0
    %62 = vmatpush.bf16.msra.mxu0 %v49
    %63 = vmatpush.bf16.msra.mxu0 %v48
    %64 = vmatpush.bf16.msra.mxu0 %v47
    %65 = vmatpush.bf16.msra.mxu0 %v46
    %66 = vmatmul.bf16.gmra.mxu0 %v56
    %v67 = vpop.f32.mrf.mxu0
    %v68 = vadd.f32 %v28, %v67
    %v69 = vpop.f32.mrf.mxu0
    %70 = vdwg.mxu0
    %vm71 = vcmask 254976
    %72 = vst.msk [vmem:[#allocation2] sm:$0x3] %vm71, %v68
    // Predicated region
    $region14: #{visual_forward.19} parent=1 // pred_check
      _
    $region15: #{visual_forward.19} parent=1 // pred_check_branch
      %74 = sbr.rel (0) target = $region17
    $region16: #{visual_forward.19} parent=1 // pred_region
      %76 = vsyncadd [#allocation3], 0
      %s78 = sshll.u32 [#allocation2], 4
      %s79 = int_to_ptr.vmem [resolvable:$true] %s78
      %s80 = sshll.u32 %s3, 4
      %s81 = int_to_ptr.hbm [resolvable:$true] %s80
      %83 = dma.vmem_to_hbm [thread:$0]  %s79, 32, %s81, [#allocation3]
    $region17: #{visual_forward.19} parent=1 // pred_fallthru
      _
    // Predicated region
    $region18: #{visual_forward.19} parent=1 // pred_check
      _
    $region19: #{visual_forward.19} parent=1 // pred_check_branch
      %85 = sbr.rel (0) target = $region21
    $region20: #{visual_forward.19} parent=1 // pred_region
      %87 = dma.done [#allocation3], 32
    $region21: #{visual_forward.19} parent=1 // pred_fallthru
      _
    %88 = vsyncpa [#allocation3], 1

// kernel: visual_forward.14
$region0: #{visual_forward.14}
  #allocation0 [shape = 'u32[]', space=smem, size = 0x4, offset = 0x4, fixed_abs, tag = 'smem constant byte address 0x4 - core index']
  #allocation1 [shape = 'u32[72,128]{1,0:T(1,128)}', space=vmem, size = 0x9000, scoped, tag = 'internal scratch']
  #allocation2 [shape = 'bf16[96,64]{1,0:T(8,128)(2,1)}', space=vmem, size = 0x6000, scoped, tag = 'scratch operand']
  %s0 = inlined_call_operand.vmem [shape: f32[96,64], index: 0, kind: input, shape index: {}, may-alias: {0,7}]
  %s1 = inlined_call_operand.vmem [shape: f32[1,64], index: 1, kind: input, shape index: {}]
  %s2 = inlined_call_operand.vmem [shape: f32[1,64], index: 2, kind: input, shape index: {}, may-alias: {2,6}]
  %s3 = inlined_call_operand.vmem [shape: bf16[64,256], index: 3, kind: input, shape index: {}]
  %s4 = inlined_call_operand.vmem [shape: f32[1,256], index: 4, kind: input, shape index: {}]
  %s5 = inlined_call_operand.vmem [shape: bf16[256,64], index: 5, kind: input, shape index: {}]
  %s6 = inlined_call_operand.vmem [shape: f32[1,64], index: 6, kind: input, shape index: {}, may-alias: {2,6}]
  %s7 = inlined_call_operand.vmem [shape: f32[96,64], index: 7, kind: output, shape index: {}, may-alias: {0,7}]
  %s8 = sld [smem:[#allocation0]]
  $region42: #{visual_forward.14} parent=0
    _
  %s10 = ssub.s32 1, %s8
  %s11 = scalar_select 0, %s10, %s8
  // Predicated region
  $region2: #{visual_forward.14} parent=0 // pred_check
    _
  $region3: #{visual_forward.14} parent=0 // pred_check_branch
    %13 = sbr.rel (0) target = $region5
  $region4: #{visual_forward.14} parent=0 // pred_region
    _
  $region5: #{visual_forward.14} parent=0 // pred_fallthru
    _
  // Predicated region
  $region6: #{visual_forward.14} parent=0 // pred_check
    _
  $region7: #{visual_forward.14} parent=0 // pred_check_branch
    %15 = sbr.rel (0) target = $region9
  $region8: #{visual_forward.14} parent=0 // pred_region
    _
  $region9: #{visual_forward.14} parent=0 // pred_fallthru
    _
  // Predicated region
  $region10: #{visual_forward.14} parent=0 // pred_check
    _
  $region11: #{visual_forward.14} parent=0 // pred_check_branch
    %17 = sbr.rel (0) target = $region13
  $region12: #{visual_forward.14} parent=0 // pred_region
    _
  $region13: #{visual_forward.14} parent=0 // pred_fallthru
    _
  // Predicated region
  $region14: #{visual_forward.14} parent=0 // pred_check
    _
  $region15: #{visual_forward.14} parent=0 // pred_check_branch
    %19 = sbr.rel (0) target = $region17
  $region16: #{visual_forward.14} parent=0 // pred_region
    _
  $region17: #{visual_forward.14} parent=0 // pred_fallthru
    _
  // Predicated region
  $region18: #{visual_forward.14} parent=0 // pred_check
    _
  $region19: #{visual_forward.14} parent=0 // pred_check_branch
    %21 = sbr.rel (0) target = $region21
  $region20: #{visual_forward.14} parent=0 // pred_region
    _
  $region21: #{visual_forward.14} parent=0 // pred_fallthru
    _
  // Predicated region
  $region22: #{visual_forward.14} parent=0 // pred_check
    _
  $region23: #{visual_forward.14} parent=0 // pred_check_branch
    %23 = sbr.rel (0) target = $region25
  $region24: #{visual_forward.14} parent=0 // pred_region
    _
  $region25: #{visual_forward.14} parent=0 // pred_fallthru
    _
  // Predicated region
  $region26: #{visual_forward.14} parent=0 // pred_check
    _
  $region27: #{visual_forward.14} parent=0 // pred_check_branch
    %25 = sbr.rel (0) target = $region29
  $region28: #{visual_forward.14} parent=0 // pred_region
    _
  $region29: #{visual_forward.14} parent=0 // pred_fallthru
    _
  %p27 = scmp.eq.s32.totalorder 0, 0
  // Predicated region
  $region30: #{visual_forward.14} parent=0 // pred_check
    %p28 = pneg %p27
  $region31: #{visual_forward.14} parent=0 // pred_check_branch
    %30 = sbr.rel (%p28) target = $region33
  $region32: #{visual_forward.14} parent=0 // pred_region
    %v31 = vld [vmem:[%s0] sm:$0xff]
    %v32 = vld [vmem:[%s0 + $0x8] sm:$0xff]
    %v33 = vld [vmem:[%s0 + $0x10] sm:$0xff]
    %v34 = vld [vmem:[%s0 + $0x18] sm:$0xff]
    %v35 = vld [vmem:[%s0 + $0x20] sm:$0xff]
    %v36 = vld [vmem:[%s0 + $0x28] sm:$0xff]
    %v37 = vld [vmem:[%s0 + $0x30] sm:$0xff]
    %v38 = vld [vmem:[%s0 + $0x38] sm:$0xff]
    %v39 = vld [vmem:[%s0 + $0x40] sm:$0xff]
    %v40 = vld [vmem:[%s0 + $0x48] sm:$0xff]
    %v41 = vld [vmem:[%s0 + $0x50] sm:$0xff]
    %v42 = vld [vmem:[%s0 + $0x58] sm:$0xff]
    %vm43 = vcmask 523264
    %v44 = vsel %vm43, %v31, 0.0
    %45 = vadd.xlane.f32.xlu0 %v44
    %v46 = vpop.xlane.xlu0 %45
    %v47 = vsel %vm43, %v32, 0.0
    %48 = vadd.xlane.f32.xlu0 %v47
    %v49 = vpop.xlane.xlu0 %48
    %v50 = vsel %vm43, %v33, 0.0
    %51 = vadd.xlane.f32.xlu0 %v50
    %v52 = vpop.xlane.xlu0 %51
    %v53 = vsel %vm43, %v34, 0.0
    %54 = vadd.xlane.f32.xlu0 %v53
    %v55 = vpop.xlane.xlu0 %54
    %v56 = vsel %vm43, %v35, 0.0
    %57 = vadd.xlane.f32.xlu0 %v56
    %v58 = vpop.xlane.xlu0 %57
    %v59 = vsel %vm43, %v36, 0.0
    %60 = vadd.xlane.f32.xlu0 %v59
    %v61 = vpop.xlane.xlu0 %60
    %v62 = vsel %vm43, %v37, 0.0
    %63 = vadd.xlane.f32.xlu0 %v62
    %v64 = vpop.xlane.xlu0 %63
    %v65 = vsel %vm43, %v38, 0.0
    %66 = vadd.xlane.f32.xlu0 %v65
    %v67 = vpop.xlane.xlu0 %66
    %v68 = vsel %vm43, %v39, 0.0
    %69 = vadd.xlane.f32.xlu0 %v68
    %v70 = vpop.xlane.xlu0 %69
    %v71 = vsel %vm43, %v40, 0.0
    %72 = vadd.xlane.f32.xlu0 %v71
    %v73 = vpop.xlane.xlu0 %72
    %v74 = vsel %vm43, %v41, 0.0
    %75 = vadd.xlane.f32.xlu0 %v74
    %v76 = vpop.xlane.xlu0 %75
    %v77 = vsel %vm43, %v42, 0.0
    %78 = vadd.xlane.f32.xlu0 %v77
    %v79 = vpop.xlane.xlu0 %78
    %v80 = vrcp.pop 64.0
    %v81 = vmul.f32 64.0, %v80
    %v82 = vsub.f32 1.0, %v81
    %v83 = vmul.f32 %v80, %v82
    %v84 = vadd.f32 %v80, %v83
    %vm85 = vweird.f32 %v80
    %v86 = vsel %vm85, %v80, %v84
    %v87 = vmul.f32 %v46, %v86
    %v88 = vmul.f32 %v49, %v86
    %v89 = vmul.f32 %v52, %v86
    %v90 = vmul.f32 %v55, %v86
    %v91 = vmul.f32 %v58, %v86
    %v92 = vmul.f32 %v61, %v86
    %v93 = vmul.f32 %v64, %v86
    %v94 = vmul.f32 %v67, %v86
    %v95 = vmul.f32 %v70, %v86
    %v96 = vmul.f32 %v73, %v86
    %v97 = vmul.f32 %v76, %v86
    %v98 = vmul.f32 %v79, %v86
    %v99 = vsub.f32 %v31, %v87
    %v100 = vsub.f32 %v32, %v88
    %v101 = vsub.f32 %v33, %v89
    %v102 = vsub.f32 %v34, %v90
    %v103 = vsub.f32 %v35, %v91
    %v104 = vsub.f32 %v36, %v92
    %v105 = vsub.f32 %v37, %v93
    %v106 = vsub.f32 %v38, %v94
    %v107 = vsub.f32 %v39, %v95
    %v108 = vsub.f32 %v40, %v96
    %v109 = vsub.f32 %v41, %v97
    %v110 = vsub.f32 %v42, %v98
    %v111 = vmul.f32 %v99, %v99
    %v112 = vmul.f32 %v100, %v100
    %v113 = vmul.f32 %v101, %v101
    %v114 = vmul.f32 %v102, %v102
    %v115 = vmul.f32 %v103, %v103
    %v116 = vmul.f32 %v104, %v104
    %v117 = vmul.f32 %v105, %v105
    %v118 = vmul.f32 %v106, %v106
    %v119 = vmul.f32 %v107, %v107
    %v120 = vmul.f32 %v108, %v108
    %v121 = vmul.f32 %v109, %v109
    %v122 = vmul.f32 %v110, %v110
    %v123 = vsel %vm43, %v111, 0.0
    %124 = vadd.xlane.f32.xlu0 %v123
    %v125 = vpop.xlane.xlu0 %124
    %v126 = vsel %vm43, %v112, 0.0
    %127 = vadd.xlane.f32.xlu0 %v126
    %v128 = vpop.xlane.xlu0 %127
    %v129 = vsel %vm43, %v113, 0.0
    %130 = vadd.xlane.f32.xlu0 %v129
    %v131 = vpop.xlane.xlu0 %130
    %v132 = vsel %vm43, %v114, 0.0
    %133 = vadd.xlane.f32.xlu0 %v132
    %v134 = vpop.xlane.xlu0 %133
    %v135 = vsel %vm43, %v115, 0.0
    %136 = vadd.xlane.f32.xlu0 %v135
    %v137 = vpop.xlane.xlu0 %136
    %v138 = vsel %vm43, %v116, 0.0
    %139 = vadd.xlane.f32.xlu0 %v138
    %v140 = vpop.xlane.xlu0 %139
    %v141 = vsel %vm43, %v117, 0.0
    %142 = vadd.xlane.f32.xlu0 %v141
    %v143 = vpop.xlane.xlu0 %142
    %v144 = vsel %vm43, %v118, 0.0
    %145 = vadd.xlane.f32.xlu0 %v144
    %v146 = vpop.xlane.xlu0 %145
    %v147 = vsel %vm43, %v119, 0.0
    %148 = vadd.xlane.f32.xlu0 %v147
    %v149 = vpop.xlane.xlu0 %148
    %v150 = vsel %vm43, %v120, 0.0
    %151 = vadd.xlane.f32.xlu0 %v150
    %v152 = vpop.xlane.xlu0 %151
    %v153 = vsel %vm43, %v121, 0.0
    %154 = vadd.xlane.f32.xlu0 %v153
    %v155 = vpop.xlane.xlu0 %154
    %v156 = vsel %vm43, %v122, 0.0
    %157 = vadd.xlane.f32.xlu0 %v156
    %v158 = vpop.xlane.xlu0 %157
    %v159 = vmul.f32 %v125, %v86
    %v160 = vmul.f32 %v128, %v86
    %v161 = vmul.f32 %v131, %v86
    %v162 = vmul.f32 %v134, %v86
    %v163 = vmul.f32 %v137, %v86
    %v164 = vmul.f32 %v140, %v86
    %v165 = vmul.f32 %v143, %v86
    %v166 = vmul.f32 %v146, %v86
    %v167 = vmul.f32 %v149, %v86
    %v168 = vmul.f32 %v152, %v86
    %v169 = vmul.f32 %v155, %v86
    %v170 = vmul.f32 %v158, %v86
    %v171 = vadd.f32 %v159, 1e-05
    %v172 = vadd.f32 %v160, 1e-05
    %v173 = vadd.f32 %v161, 1e-05
    %v174 = vadd.f32 %v162, 1e-05
    %v175 = vadd.f32 %v163, 1e-05
    %v176 = vadd.f32 %v164, 1e-05
    %v177 = vadd.f32 %v165, 1e-05
    %v178 = vadd.f32 %v166, 1e-05
    %v179 = vadd.f32 %v167, 1e-05
    %v180 = vadd.f32 %v168, 1e-05
    %v181 = vadd.f32 %v169, 1e-05
    %v182 = vadd.f32 %v170, 1e-05
    %v183 = vrsqrt.pop %v171
    %v184 = vmul.f32 %v183, %v171
    %v185 = vmul.f32 %v184, %v183
    %v186 = vmul.f32 0.5, %v185
    %v187 = vsub.f32 1.5, %v186
    %v188 = vmul.f32 %v183, %v187
    %vm189 = vweird.f32 %v171
    %vm190 = vweird.f32 %v183
    %vm191 = vmor %vm189, %vm190
    %v192 = vsel %vm191, %v183, %v188
    %v193 = vrsqrt.pop %v172
    %v194 = vmul.f32 %v193, %v172
    %v195 = vmul.f32 %v194, %v193
    %v196 = vmul.f32 0.5, %v195
    %v197 = vsub.f32 1.5, %v196
    %v198 = vmul.f32 %v193, %v197
    %vm199 = vweird.f32 %v172
    %vm200 = vweird.f32 %v193
    %vm201 = vmor %vm199, %vm200
    %v202 = vsel %vm201, %v193, %v198
    %v203 = vrsqrt.pop %v173
    %v204 = vmul.f32 %v203, %v173
    %v205 = vmul.f32 %v204, %v203
    %v206 = vmul.f32 0.5, %v205
    %v207 = vsub.f32 1.5, %v206
    %v208 = vmul.f32 %v203, %v207
    %vm209 = vweird.f32 %v173
    %vm210 = vweird.f32 %v203
    %vm211 = vmor %vm209, %vm210
    %v212 = vsel %vm211, %v203, %v208
    %v213 = vrsqrt.pop %v174
    %v214 = vmul.f32 %v213, %v174
    %v215 = vmul.f32 %v214, %v213
    %v216 = vmul.f32 0.5, %v215
    %v217 = vsub.f32 1.5, %v216
    %v218 = vmul.f32 %v213, %v217
    %vm219 = vweird.f32 %v174
    %vm220 = vweird.f32 %v213
    %vm221 = vmor %vm219, %vm220
    %v222 = vsel %vm221, %v213, %v218
    %v223 = vrsqrt.pop %v175
    %v224 = vmul.f32 %v223, %v175
    %v225 = vmul.f32 %v224, %v223
    %v226 = vmul.f32 0.5, %v225
    %v227 = vsub.f32 1.5, %v226
    %v228 = vmul.f32 %v223, %v227
    %vm229 = vweird.f32 %v175
    %vm230 = vweird.f32 %v223
    %vm231 = vmor %vm229, %vm230
    %v232 = vsel %vm231, %v223, %v228
    %v233 = vrsqrt.pop %v176
    %v234 = vmul.f32 %v233, %v176
    %v235 = vmul.f32 %v234, %v233
    %v236 = vmul.f32 0.5, %v235
    %v237 = vsub.f32 1.5, %v236
    %v238 = vmul.f32 %v233, %v237
    %vm239 = vweird.f32 %v176
    %vm240 = vweird.f32 %v233
    %vm241 = vmor %vm239, %vm240
    %v242 = vsel %vm241, %v233, %v238
    %v243 = vrsqrt.pop %v177
    %v244 = vmul.f32 %v243, %v177
    %v245 = vmul.f32 %v244, %v243
    %v246 = vmul.f32 0.5, %v245
    %v247 = vsub.f32 1.5, %v246
    %v248 = vmul.f32 %v243, %v247
    %vm249 = vweird.f32 %v177
    %vm250 = vweird.f32 %v243
    %vm251 = vmor %vm249, %vm250
    %v252 = vsel %vm251, %v243, %v248
    %v253 = vrsqrt.pop %v178
    %v254 = vmul.f32 %v253, %v178
    %v255 = vmul.f32 %v254, %v253
    %v256 = vmul.f32 0.5, %v255
    %v257 = vsub.f32 1.5, %v256
    %v258 = vmul.f32 %v253, %v257
    %vm259 = vweird.f32 %v178
    %vm260 = vweird.f32 %v253
    %vm261 = vmor %vm259, %vm260
    %v262 = vsel %vm261, %v253, %v258
    %v263 = vrsqrt.pop %v179
    %v264 = vmul.f32 %v263, %v179
    %v265 = vmul.f32 %v264, %v263
    %v266 = vmul.f32 0.5, %v265
    %v267 = vsub.f32 1.5, %v266
    %v268 = vmul.f32 %v263, %v267
    %vm269 = vweird.f32 %v179
    %vm270 = vweird.f32 %v263
    %vm271 = vmor %vm269, %vm270
    %v272 = vsel %vm271, %v263, %v268
    %v273 = vrsqrt.pop %v180
    %v274 = vmul.f32 %v273, %v180
    %v275 = vmul.f32 %v274, %v273
    %v276 = vmul.f32 0.5, %v275
    %v277 = vsub.f32 1.5, %v276
    %v278 = vmul.f32 %v273, %v277
    %vm279 = vweird.f32 %v180
    %vm280 = vweird.f32 %v273
    %vm281 = vmor %vm279, %vm280
    %v282 = vsel %vm281, %v273, %v278
    %v283 = vrsqrt.pop %v181
    %v284 = vmul.f32 %v283, %v181
    %v285 = vmul.f32 %v284, %v283
    %v286 = vmul.f32 0.5, %v285
    %v287 = vsub.f32 1.5, %v286
    %v288 = vmul.f32 %v283, %v287
    %vm289 = vweird.f32 %v181
    %vm290 = vweird.f32 %v283
    %vm291 = vmor %vm289, %vm290
    %v292 = vsel %vm291, %v283, %v288
    %v293 = vrsqrt.pop %v182
    %v294 = vmul.f32 %v293, %v182
    %v295 = vmul.f32 %v294, %v293
    %v296 = vmul.f32 0.5, %v295
    %v297 = vsub.f32 1.5, %v296
    %v298 = vmul.f32 %v293, %v297
    %vm299 = vweird.f32 %v182
    %vm300 = vweird.f32 %v293
    %vm301 = vmor %vm299, %vm300
    %v302 = vsel %vm301, %v293, %v298
    %v303 = vmul.f32 %v99, %v192
    %v304 = vmul.f32 %v100, %v202
    %v305 = vmul.f32 %v101, %v212
    %v306 = vmul.f32 %v102, %v222
    %v307 = vmul.f32 %v103, %v232
    %v308 = vmul.f32 %v104, %v242
    %v309 = vmul.f32 %v105, %v252
    %v310 = vmul.f32 %v106, %v262
    %v311 = vmul.f32 %v107, %v272
    %v312 = vmul.f32 %v108, %v282
    %v313 = vmul.f32 %v109, %v292
    %v314 = vmul.f32 %v110, %v302
    %v315 = vld [vmem:[%s1] sm:$0x1]
    %v317 = vperm.slane %v315, 0
    %v319 = vmul.f32 %v303, %v317
    %v320 = vmul.f32 %v304, %v317
    %v321 = vmul.f32 %v305, %v317
    %v322 = vmul.f32 %v306, %v317
    %v323 = vmul.f32 %v307, %v317
    %v324 = vmul.f32 %v308, %v317
    %v325 = vmul.f32 %v309, %v317
    %v326 = vmul.f32 %v310, %v317
    %v327 = vmul.f32 %v311, %v317
    %v328 = vmul.f32 %v312, %v317
    %v329 = vmul.f32 %v313, %v317
    %v330 = vmul.f32 %v314, %v317
    %v331 = vld [vmem:[%s2] sm:$0x1]
    %v333 = vperm.slane %v331, 0
    %v335 = vadd.f32 %v319, %v333
    %v336 = vadd.f32 %v320, %v333
    %v337 = vadd.f32 %v321, %v333
    %v338 = vadd.f32 %v322, %v333
    %v339 = vadd.f32 %v323, %v333
    %v340 = vadd.f32 %v324, %v333
    %v341 = vadd.f32 %v325, %v333
    %v342 = vadd.f32 %v326, %v333
    %v343 = vadd.f32 %v327, %v333
    %v344 = vadd.f32 %v328, %v333
    %v345 = vadd.f32 %v329, %v333
    %v346 = vadd.f32 %v330, %v333
    %v347 = vpack.c.bf16 %v335, %v335
    %v348 = vpack.c.bf16 %v336, %v336
    %v349 = vpack.c.bf16 %v337, %v337
    %v350 = vpack.c.bf16 %v338, %v338
    %v351 = vpack.c.bf16 %v339, %v339
    %v352 = vpack.c.bf16 %v340, %v340
    %v353 = vpack.c.bf16 %v341, %v341
    %v354 = vpack.c.bf16 %v342, %v342
    %v355 = vpack.c.bf16 %v343, %v343
    %v356 = vpack.c.bf16 %v344, %v344
    %v357 = vpack.c.bf16 %v345, %v345
    %v358 = vpack.c.bf16 %v346, %v346
    %vm359 = vcmask 519168
    %360 = vst.msk [vmem:[#allocation2] sm:$0xf] %vm359, %v347
    %361 = vst.msk [vmem:[#allocation2 + $0x4] sm:$0xf] %vm359, %v348
    %362 = vst.msk [vmem:[#allocation2 + $0x8] sm:$0xf] %vm359, %v349
    %363 = vst.msk [vmem:[#allocation2 + $0xc] sm:$0xf] %vm359, %v350
    %364 = vst.msk [vmem:[#allocation2 + $0x10] sm:$0xf] %vm359, %v351
    %365 = vst.msk [vmem:[#allocation2 + $0x14] sm:$0xf] %vm359, %v352
    %366 = vst.msk [vmem:[#allocation2 + $0x18] sm:$0xf] %vm359, %v353
    %367 = vst.msk [vmem:[#allocation2 + $0x1c] sm:$0xf] %vm359, %v354
    %368 = vst.msk [vmem:[#allocation2 + $0x20] sm:$0xf] %vm359, %v355
    %369 = vst.msk [vmem:[#allocation2 + $0x24] sm:$0xf] %vm359, %v356
    %370 = vst.msk [vmem:[#allocation2 + $0x28] sm:$0xf] %vm359, %v357
    %371 = vst.msk [vmem:[#allocation2 + $0x2c] sm:$0xf] %vm359, %v358
    %v372 = vld [vmem:[%s6] sm:$0x1]
    %v374 = vperm.slane %v372, 0
    %v376 = vadd.f32 %v31, %v374
    %v377 = vadd.f32 %v32, %v374
    %v378 = vadd.f32 %v33, %v374
    %v379 = vadd.f32 %v34, %v374
    %v380 = vadd.f32 %v35, %v374
    %v381 = vadd.f32 %v36, %v374
    %v382 = vadd.f32 %v37, %v374
    %v383 = vadd.f32 %v38, %v374
    %v384 = vadd.f32 %v39, %v374
    %v385 = vadd.f32 %v40, %v374
    %v386 = vadd.f32 %v41, %v374
    %v387 = vadd.f32 %v42, %v374
    %388 = vst.msk [vmem:[%s7] sm:$0xff] %vm43, %v376
    %389 = vst.msk [vmem:[%s7 + $0x8] sm:$0xff] %vm43, %v377
    %390 = vst.msk [vmem:[%s7 + $0x10] sm:$0xff] %vm43, %v378
    %391 = vst.msk [vmem:[%s7 + $0x18] sm:$0xff] %vm43, %v379
    %392 = vst.msk [vmem:[%s7 + $0x20] sm:$0xff] %vm43, %v380
    %393 = vst.msk [vmem:[%s7 + $0x28] sm:$0xff] %vm43, %v381
    %394 = vst.msk [vmem:[%s7 + $0x30] sm:$0xff] %vm43, %v382
    %395 = vst.msk [vmem:[%s7 + $0x38] sm:$0xff] %vm43, %v383
    %396 = vst.msk [vmem:[%s7 + $0x40] sm:$0xff] %vm43, %v384
    %397 = vst.msk [vmem:[%s7 + $0x48] sm:$0xff] %vm43, %v385
    %398 = vst.msk [vmem:[%s7 + $0x50] sm:$0xff] %vm43, %v386
    %399 = vst.msk [vmem:[%s7 + $0x58] sm:$0xff] %vm43, %v387
  $region33: #{visual_forward.14} parent=0 // pred_fallthru
    _
  %v400 = vld [vmem:[#allocation2] sm:$0xf]
  %v401 = vld [vmem:[#allocation2 + $0x4] sm:$0xf]
  %v402 = vld [vmem:[#allocation2 + $0x8] sm:$0xf]
  %v403 = vld [vmem:[#allocation2 + $0xc] sm:$0xf]
  %v404 = vld [vmem:[#allocation2 + $0x10] sm:$0xf]
  %v405 = vld [vmem:[#allocation2 + $0x14] sm:$0xf]
  %v406 = vld [vmem:[#allocation2 + $0x18] sm:$0xf]
  %v407 = vld [vmem:[#allocation2 + $0x1c] sm:$0xf]
  %v408 = vld [vmem:[#allocation2 + $0x20] sm:$0xf]
  %v409 = vld [vmem:[#allocation2 + $0x24] sm:$0xf]
  %v410 = vld [vmem:[#allocation2 + $0x28] sm:$0xf]
  %v411 = vld [vmem:[#allocation2 + $0x2c] sm:$0xf]
  %v412 = vld [vmem:[%s3] sm:$0xff]
  %v413 = vld [vmem:[%s3 + $0x8] sm:$0xff]
  %v414 = vld [vmem:[%s3 + $0x10] sm:$0xff]
  %v415 = vld [vmem:[%s3 + $0x18] sm:$0xff]
  %v416 = vld [vmem:[%s3 + $0x20] sm:$0xff]
  %v417 = vld [vmem:[%s3 + $0x28] sm:$0xff]
  %v418 = vld [vmem:[%s3 + $0x30] sm:$0xff]
  %v419 = vld [vmem:[%s3 + $0x38] sm:$0xff]
  %v420 = vld [vmem:[%s4] sm:$0x3]
  %v422 = vperm.slane %v420, 0
  %v423 = vperm.slane %v420, 1
  %v438 = vunpack.c.l.b16 %v400
  %v439 = vunpack.c.l.b16 %v401
  %v440 = vunpack.c.l.b16 %v402
  %v441 = vunpack.c.l.b16 %v403
  %v442 = vunpack.c.l.b16 %v404
  %v443 = vunpack.c.l.b16 %v405
  %v444 = vunpack.c.l.b16 %v406
  %v445 = vunpack.c.l.b16 %v407
  %v446 = vunpack.c.l.b16 %v408
  %v447 = vunpack.c.l.b16 %v409
  %v448 = vunpack.c.l.b16 %v410
  %v449 = vunpack.c.l.b16 %v411
  %v450 = vpack.c.b16 %v439, %v438
  %v451 = vpack.c.b16 %v441, %v440
  %v452 = vpack.c.b16 %v443, %v442
  %v453 = vpack.c.b16 %v445, %v444
  %v454 = vpack.c.b16 %v447, %v446
  %v455 = vpack.c.b16 %v449, %v448
  %v464 = vunpack.c.l.b16 %v412
  %v465 = vunpack.c.h.b16 %v412
  %v466 = vunpack.c.l.b16 %v413
  %v467 = vunpack.c.h.b16 %v413
  %v468 = vunpack.c.l.b16 %v414
  %v469 = vunpack.c.h.b16 %v414
  %v470 = vunpack.c.l.b16 %v415
  %v471 = vunpack.c.h.b16 %v415
  %v472 = vunpack.c.l.b16 %v416
  %v473 = vunpack.c.h.b16 %v416
  %v474 = vunpack.c.l.b16 %v417
  %v475 = vunpack.c.h.b16 %v417
  %v476 = vunpack.c.l.b16 %v418
  %v477 = vunpack.c.h.b16 %v418
  %v478 = vunpack.c.l.b16 %v419
  %v479 = vunpack.c.h.b16 %v419
  %v480 = vpack.c.b16 %v466, %v464
  %v481 = vpack.c.b16 %v467, %v465
  %v482 = vpack.c.b16 %v470, %v468
  %v483 = vpack.c.b16 %v471, %v469
  %v484 = vpack.c.b16 %v474, %v472
  %v485 = vpack.c.b16 %v475, %v473
  %v486 = vpack.c.b16 %v478, %v476
  %v487 = vpack.c.b16 %v479, %v477
  %vm496 = vcmask 523264
  %v498 = vsel %vm496, %v450, 0
  %v501 = vsel %vm496, %v451, 0
  %v504 = vsel %vm496, %v452, 0
  %v507 = vsel %vm496, %v453, 0
  %v510 = vsel %vm496, %v454, 0
  %v513 = vsel %vm496, %v455, 0
  %515 = vmatpush.bf16.msra.mxu0 0
  %516 = vmatpush.bf16.msra.mxu0 0
  %517 = vmatpush.bf16.msra.mxu0 0
  %518 = vmatpush.bf16.msra.mxu0 0
  %519 = vmatpush.bf16.msra.mxu0 %v486
  %520 = vmatpush.bf16.msra.mxu0 %v484
  %521 = vmatpush.bf16.msra.mxu0 %v482
  %522 = vmatpush.bf16.msra.mxu0 %v480
  %523 = vmatmul.bf16.gmra.mxu0 %v498
  %v524 = vpop.f32.mrf.mxu0
  %v525 = vadd.f32 %v422, %v524
  %v526 = vpop.f32.mrf.mxu0
  %v527 = vadd.f32 %v422, %v526
  %528 = vmatmul.bf16.gmra.mxu0 %v501
  %v529 = vpop.f32.mrf.mxu0
  %v530 = vadd.f32 %v422, %v529
  %v531 = vpop.f32.mrf.mxu0
  %v532 = vadd.f32 %v422, %v531
  %533 = vmatmul.bf16.gmra.mxu0 %v504
  %v534 = vpop.f32.mrf.mxu0
  %v535 = vadd.f32 %v422, %v534
  %v536 = vpop.f32.mrf.mxu0
  %v537 = vadd.f32 %v422, %v536
  %538 = vmatmul.bf16.gmra.mxu0 %v507
  %v539 = vpop.f32.mrf.mxu0
  %v540 = vadd.f32 %v422, %v539
  %v541 = vpop.f32.mrf.mxu0
  %v542 = vadd.f32 %v422, %v541
  %543 = vmatmul.bf16.gmra.mxu0 %v510
  %v544 = vpop.f32.mrf.mxu0
  %v545 = vadd.f32 %v422, %v544
  %v546 = vpop.f32.mrf.mxu0
  %v547 = vadd.f32 %v422, %v546
  %548 = vmatmul.bf16.gmra.mxu0 %v513
  %v549 = vpop.f32.mrf.mxu0
  %v550 = vadd.f32 %v422, %v549
  %v551 = vpop.f32.mrf.mxu0
  %v552 = vadd.f32 %v422, %v551
  %553 = vdwg.mxu0
  %554 = vmatpush.bf16.msra.mxu0 0
  %555 = vmatpush.bf16.msra.mxu0 0
  %556 = vmatpush.bf16.msra.mxu0 0
  %557 = vmatpush.bf16.msra.mxu0 0
  %558 = vmatpush.bf16.msra.mxu0 %v487
  %559 = vmatpush.bf16.msra.mxu0 %v485
  %560 = vmatpush.bf16.msra.mxu0 %v483
  %561 = vmatpush.bf16.msra.mxu0 %v481
  %562 = vmatmul.bf16.gmra.mxu0 %v498
  %v563 = vpop.f32.mrf.mxu0
  %v564 = vadd.f32 %v423, %v563
  %v565 = vpop.f32.mrf.mxu0
  %v566 = vadd.f32 %v423, %v565
  %567 = vmatmul.bf16.gmra.mxu0 %v501
  %v568 = vpop.f32.mrf.mxu0
  %v569 = vadd.f32 %v423, %v568
  %v570 = vpop.f32.mrf.mxu0
  %v571 = vadd.f32 %v423, %v570
  %572 = vmatmul.bf16.gmra.mxu0 %v504
  %v573 = vpop.f32.mrf.mxu0
  %v574 = vadd.f32 %v423, %v573
  %v575 = vpop.f32.mrf.mxu0
  %v576 = vadd.f32 %v423, %v575
  %577 = vmatmul.bf16.gmra.mxu0 %v507
  %v578 = vpop.f32.mrf.mxu0
  %v579 = vadd.f32 %v423, %v578
  %v580 = vpop.f32.mrf.mxu0
  %v581 = vadd.f32 %v423, %v580
  %582 = vmatmul.bf16.gmra.mxu0 %v510
  %v583 = vpop.f32.mrf.mxu0
  %v584 = vadd.f32 %v423, %v583
  %v585 = vpop.f32.mrf.mxu0
  %v586 = vadd.f32 %v423, %v585
  %587 = vmatmul.bf16.gmra.mxu0 %v513
  %v588 = vpop.f32.mrf.mxu0
  %v589 = vadd.f32 %v423, %v588
  %v590 = vpop.f32.mrf.mxu0
  %v591 = vadd.f32 %v423, %v590
  %592 = vdwg.mxu0
  %v593 = vmul.f32 %v525, 1.702
  %v594 = vmul.f32 %v564, 1.702
  %v595 = vmul.f32 %v527, 1.702
  %v596 = vmul.f32 %v566, 1.702
  %v597 = vmul.f32 %v530, 1.702
  %v598 = vmul.f32 %v569, 1.702
  %v599 = vmul.f32 %v532, 1.702
  %v600 = vmul.f32 %v571, 1.702
  %v601 = vmul.f32 %v535, 1.702
  %v602 = vmul.f32 %v574, 1.702
  %v603 = vmul.f32 %v537, 1.702
  %v604 = vmul.f32 %v576, 1.702
  %v605 = vmul.f32 %v540, 1.702
  %v606 = vmul.f32 %v579, 1.702
  %v607 = vmul.f32 %v542, 1.702
  %v608 = vmul.f32 %v581, 1.702
  %v609 = vmul.f32 %v545, 1.702
  %v610 = vmul.f32 %v584, 1.702
  %v611 = vmul.f32 %v547, 1.702
  %v612 = vmul.f32 %v586, 1.702
  %v613 = vmul.f32 %v550, 1.702
  %v614 = vmul.f32 %v589, 1.702
  %v615 = vmul.f32 %v552, 1.702
  %v616 = vmul.f32 %v591, 1.702
  %v617 = vxor.u32 %v593, 2147483648
  %v618 = vxor.u32 %v594, 2147483648
  %v619 = vxor.u32 %v595, 2147483648
  %v620 = vxor.u32 %v596, 2147483648
  %v621 = vxor.u32 %v597, 2147483648
  %v622 = vxor.u32 %v598, 2147483648
  %v623 = vxor.u32 %v599, 2147483648
  %v624 = vxor.u32 %v600, 2147483648
  %v625 = vxor.u32 %v601, 2147483648
  %v626 = vxor.u32 %v602, 2147483648
  %v627 = vxor.u32 %v603, 2147483648
  %v628 = vxor.u32 %v604, 2147483648
  %v629 = vxor.u32 %v605, 2147483648
  %v630 = vxor.u32 %v606, 2147483648
  %v631 = vxor.u32 %v607, 2147483648
  %v632 = vxor.u32 %v608, 2147483648
  %v633 = vxor.u32 %v609, 2147483648
  %v634 = vxor.u32 %v610, 2147483648
  %v635 = vxor.u32 %v611, 2147483648
  %v636 = vxor.u32 %v612, 2147483648
  %v637 = vxor.u32 %v613, 2147483648
  %v638 = vxor.u32 %v614, 2147483648
  %v639 = vxor.u32 %v615, 2147483648
  %v640 = vxor.u32 %v616, 2147483648
  %v641 = vmul.f32 %v617, 1.442695
  %v642 = vpow.pop %v641
  %v643 = vmul.f32 %v618, 1.442695
  %v644 = vpow.pop %v643
  %v645 = vmul.f32 %v619, 1.442695
  %v646 = vpow.pop %v645
  %v647 = vmul.f32 %v620, 1.442695
  %v648 = vpow.pop %v647
  %v649 = vmul.f32 %v621, 1.442695
  %v650 = vpow.pop %v649
  %v651 = vmul.f32 %v622, 1.442695
  %v652 = vpow.pop %v651
  %v653 = vmul.f32 %v623, 1.442695
  %v654 = vpow.pop %v653
  %v655 = vmul.f32 %v624, 1.442695
  %v656 = vpow.pop %v655
  %v657 = vmul.f32 %v625, 1.442695
  %v658 = vpow.pop %v657
  %v659 = vmul.f32 %v626, 1.442695
  %v660 = vpow.pop %v659
  %v661 = vmul.f32 %v627, 1.442695
  %v662 = vpow.pop %v661
  %v663 = vmul.f32 %v628, 1.442695
  %v664 = vpow.pop %v663
  %v665 = vmul.f32 %v629, 1.442695
  %v666 = vpow.pop %v665
  %v667 = vmul.f32 %v630, 1.442695
  %v668 = vpow.pop %v667
  %v669 = vmul.f32 %v631, 1.442695
  %v670 = vpow.pop %v669
  %v671 = vmul.f32 %v632, 1.442695
  %v672 = vpow.pop %v671
  %v673 = vmul.f32 %v633, 1.442695
  %v674 = vpow.pop %v673
  %v675 = vmul.f32 %v634, 1.442695
  %v676 = vpow.pop %v675
  %v677 = vmul.f32 %v635, 1.442695
  %v678 = vpow.pop %v677
  %v679 = vmul.f32 %v636, 1.442695
  %v680 = vpow.pop %v679
  %v681 = vmul.f32 %v637, 1.442695
  %v682 = vpow.pop %v681
  %v683 = vmul.f32 %v638, 1.442695
  %v684 = vpow.pop %v683
  %v685 = vmul.f32 %v639, 1.442695
  %v686 = vpow.pop %v685
  %v687 = vmul.f32 %v640, 1.442695
  %v688 = vpow.pop %v687
  %v689 = vadd.f32 %v642, 1.0
  %v690 = vadd.f32 %v644, 1.0
  %v691 = vadd.f32 %v646, 1.0
  %v692 = vadd.f32 %v648, 1.0
  %v693 = vadd.f32 %v650, 1.0
  %v694 = vadd.f32 %v652, 1.0
  %v695 = vadd.f32 %v654, 1.0
  %v696 = vadd.f32 %v656, 1.0
  %v697 = vadd.f32 %v658, 1.0
  %v698 = vadd.f32 %v660, 1.0
  %v699 = vadd.f32 %v662, 1.0
  %v700 = vadd.f32 %v664, 1.0
  %v701 = vadd.f32 %v666, 1.0
  %v702 = vadd.f32 %v668, 1.0
  %v703 = vadd.f32 %v670, 1.0
  %v704 = vadd.f32 %v672, 1.0
  %v705 = vadd.f32 %v674, 1.0
  %v706 = vadd.f32 %v676, 1.0
  %v707 = vadd.f32 %v678, 1.0
  %v708 = vadd.f32 %v680, 1.0
  %v709 = vadd.f32 %v682, 1.0
  %v710 = vadd.f32 %v684, 1.0
  %v711 = vadd.f32 %v686, 1.0
  %v712 = vadd.f32 %v688, 1.0
  %v713 = vrcp.pop %v689
  %v714 = vmul.f32 %v689, %v713
  %v715 = vsub.f32 1.0, %v714
  %v716 = vmul.f32 %v713, %v715
  %v717 = vadd.f32 %v713, %v716
  %vm718 = vweird.f32 %v689
  %vm719 = vweird.f32 %v713
  %vm720 = vmor %vm718, %vm719
  %v721 = vsel %vm720, %v713, %v717
  %v722 = vand.u32 2147483647, %v689
  %vm723 = vcmp.eq.f32.partialorder %v722, 8.507059e+37
  %v724 = vand.u32 %v689, 2147483648
  %v725 = vor.u32 1.1754944e-38, %v724
  %v726 = vsel %vm723, %v725, %v721
  %v727 = vmul.f32 1.0, %v726
  %v728 = vrcp.pop %v690
  %v729 = vmul.f32 %v690, %v728
  %v730 = vsub.f32 1.0, %v729
  %v731 = vmul.f32 %v728, %v730
  %v732 = vadd.f32 %v728, %v731
  %vm733 = vweird.f32 %v690
  %vm734 = vweird.f32 %v728
  %vm735 = vmor %vm733, %vm734
  %v736 = vsel %vm735, %v728, %v732
  %v737 = vand.u32 2147483647, %v690
  %vm738 = vcmp.eq.f32.partialorder %v737, 8.507059e+37
  %v739 = vand.u32 %v690, 2147483648
  %v740 = vor.u32 1.1754944e-38, %v739
  %v741 = vsel %vm738, %v740, %v736
  %v742 = vmul.f32 1.0, %v741
  %v743 = vrcp.pop %v691
  %v744 = vmul.f32 %v691, %v743
  %v745 = vsub.f32 1.0, %v744
  %v746 = vmul.f32 %v743, %v745
  %v747 = vadd.f32 %v743, %v746
  %vm748 = vweird.f32 %v691
  %vm749 = vweird.f32 %v743
  %vm750 = vmor %vm748, %vm749
  %v751 = vsel %vm750, %v743, %v747
  %v752 = vand.u32 2147483647, %v691
  %vm753 = vcmp.eq.f32.partialorder %v752, 8.507059e+37
  %v754 = vand.u32 %v691, 2147483648
  %v755 = vor.u32 1.1754944e-38, %v754
  %v756 = vsel %vm753, %v755, %v751
  %v757 = vmul.f32 1.0, %v756
  %v758 = vrcp.pop %v692
  %v759 = vmul.f32 %v692, %v758
  %v760 = vsub.f32 1.0, %v759
  %v761 = vmul.f32 %v758, %v760
  %v762 = vadd.f32 %v758, %v761
  %vm763 = vweird.f32 %v692
  %vm764 = vweird.f32 %v758
  %vm765 = vmor %vm763, %vm764
  %v766 = vsel %vm765, %v758, %v762
  %v767 = vand.u32 2147483647, %v692
  %vm768 = vcmp.eq.f32.partialorder %v767, 8.507059e+37
  %v769 = vand.u32 %v692, 2147483648
  %v770 = vor.u32 1.1754944e-38, %v769
  %v771 = vsel %vm768, %v770, %v766
  %v772 = vmul.f32 1.0, %v771
  %v773 = vrcp.pop %v693
  %v774 = vmul.f32 %v693, %v773
  %v775 = vsub.f32 1.0, %v774
  %v776 = vmul.f32 %v773, %v775
  %v777 = vadd.f32 %v773, %v776
  %vm778 = vweird.f32 %v693
  %vm779 = vweird.f32 %v773
  %vm780 = vmor %vm778, %vm779
  %v781 = vsel %vm780, %v773, %v777
  %v782 = vand.u32 2147483647, %v693
  %vm783 = vcmp.eq.f32.partialorder %v782, 8.507059e+37
  %v784 = vand.u32 %v693, 2147483648
  %v785 = vor.u32 1.1754944e-38, %v784
  %v786 = vsel %vm783, %v785, %v781
  %v787 = vmul.f32 1.0, %v786
  %v788 = vrcp.pop %v694
  %v789 = vmul.f32 %v694, %v788
  %v790 = vsub.f32 1.0, %v789
  %v791 = vmul.f32 %v788, %v790
  %v792 = vadd.f32 %v788, %v791
  %vm793 = vweird.f32 %v694
  %vm794 = vweird.f32 %v788
  %vm795 = vmor %vm793, %vm794
  %v796 = vsel %vm795, %v788, %v792
  %v797 = vand.u32 2147483647, %v694
  %vm798 = vcmp.eq.f32.partialorder %v797, 8.507059e+37
  %v799 = vand.u32 %v694, 2147483648
  %v800 = vor.u32 1.1754944e-38, %v799
  %v801 = vsel %vm798, %v800, %v796
  %v802 = vmul.f32 1.0, %v801
  %v803 = vrcp.pop %v695
  %v804 = vmul.f32 %v695, %v803
  %v805 = vsub.f32 1.0, %v804
  %v806 = vmul.f32 %v803, %v805
  %v807 = vadd.f32 %v803, %v806
  %vm808 = vweird.f32 %v695
  %vm809 = vweird.f32 %v803
  %vm810 = vmor %vm808, %vm809
  %v811 = vsel %vm810, %v803, %v807
  %v812 = vand.u32 2147483647, %v695
  %vm813 = vcmp.eq.f32.partialorder %v812, 8.507059e+37
  %v814 = vand.u32 %v695, 2147483648
  %v815 = vor.u32 1.1754944e-38, %v814
  %v816 = vsel %vm813, %v815, %v811
  %v817 = vmul.f32 1.0, %v816
  %v818 = vrcp.pop %v696
  %v819 = vmul.f32 %v696, %v818
  %v820 = vsub.f32 1.0, %v819
  %v821 = vmul.f32 %v818, %v820
  %v822 = vadd.f32 %v818, %v821
  %vm823 = vweird.f32 %v696
  %vm824 = vweird.f32 %v818
  %vm825 = vmor %vm823, %vm824
  %v826 = vsel %vm825, %v818, %v822
  %v827 = vand.u32 2147483647, %v696
  %vm828 = vcmp.eq.f32.partialorder %v827, 8.507059e+37
  %v829 = vand.u32 %v696, 2147483648
  %v830 = vor.u32 1.1754944e-38, %v829
  %v831 = vsel %vm828, %v830, %v826
  %v832 = vmul.f32 1.0, %v831
  %v833 = vrcp.pop %v697
  %v834 = vmul.f32 %v697, %v833
  %v835 = vsub.f32 1.0, %v834
  %v836 = vmul.f32 %v833, %v835
  %v837 = vadd.f32 %v833, %v836
  %vm838 = vweird.f32 %v697
  %vm839 = vweird.f32 %v833
  %vm840 = vmor %vm838, %vm839
  %v841 = vsel %vm840, %v833, %v837
  %v842 = vand.u32 2147483647, %v697
  %vm843 = vcmp.eq.f32.partialorder %v842, 8.507059e+37
  %v844 = vand.u32 %v697, 2147483648
  %v845 = vor.u32 1.1754944e-38, %v844
  %v846 = vsel %vm843, %v845, %v841
  %v847 = vmul.f32 1.0, %v846
  %v848 = vrcp.pop %v698
  %v849 = vmul.f32 %v698, %v848
  %v850 = vsub.f32 1.0, %v849
  %v851 = vmul.f32 %v848, %v850
  %v852 = vadd.f32 %v848, %v851
  %vm853 = vweird.f32 %v698
  %vm854 = vweird.f32 %v848
  %vm855 = vmor %vm853, %vm854
  %v856 = vsel %vm855, %v848, %v852
  %v857 = vand.u32 2147483647, %v698
  %vm858 = vcmp.eq.f32.partialorder %v857, 8.507059e+37
  %v859 = vand.u32 %v698, 2147483648
  %v860 = vor.u32 1.1754944e-38, %v859
  %v861 = vsel %vm858, %v860, %v856
  %v862 = vmul.f32 1.0, %v861
  %v863 = vrcp.pop %v699
  %v864 = vmul.f32 %v699, %v863
  %v865 = vsub.f32 1.0, %v864
  %v866 = vmul.f32 %v863, %v865
  %v867 = vadd.f32 %v863, %v866
  %vm868 = vweird.f32 %v699
  %vm869 = vweird.f32 %v863
  %vm870 = vmor %vm868, %vm869
  %v871 = vsel %vm870, %v863, %v867
  %v872 = vand.u32 2147483647, %v699
  %vm873 = vcmp.eq.f32.partialorder %v872, 8.507059e+37
  %v874 = vand.u32 %v699, 2147483648
  %v875 = vor.u32 1.1754944e-38, %v874
  %v876 = vsel %vm873, %v875, %v871
  %v877 = vmul.f32 1.0, %v876
  %v878 = vrcp.pop %v700
  %v879 = vmul.f32 %v700, %v878
  %v880 = vsub.f32 1.0, %v879
  %v881 = vmul.f32 %v878, %v880
  %v882 = vadd.f32 %v878, %v881
  %vm883 = vweird.f32 %v700
  %vm884 = vweird.f32 %v878
  %vm885 = vmor %vm883, %vm884
  %v886 = vsel %vm885, %v878, %v882
  %v887 = vand.u32 2147483647, %v700
  %vm888 = vcmp.eq.f32.partialorder %v887, 8.507059e+37
  %v889 = vand.u32 %v700, 2147483648
  %v890 = vor.u32 1.1754944e-38, %v889
  %v891 = vsel %vm888, %v890, %v886
  %v892 = vmul.f32 1.0, %v891
  %v893 = vrcp.pop %v701
  %v894 = vmul.f32 %v701, %v893
  %v895 = vsub.f32 1.0, %v894
  %v896 = vmul.f32 %v893, %v895
  %v897 = vadd.f32 %v893, %v896
  %vm898 = vweird.f32 %v701
  %vm899 = vweird.f32 %v893
  %vm900 = vmor %vm898, %vm899
  %v901 = vsel %vm900, %v893, %v897
  %v902 = vand.u32 2147483647, %v701
  %vm903 = vcmp.eq.f32.partialorder %v902, 8.507059e+37
  %v904 = vand.u32 %v701, 2147483648
  %v905 = vor.u32 1.1754944e-38, %v904
  %v906 = vsel %vm903, %v905, %v901
  %v907 = vmul.f32 1.0, %v906
  %v908 = vrcp.pop %v702
  %v909 = vmul.f32 %v702, %v908
  %v910 = vsub.f32 1.0, %v909
  %v911 = vmul.f32 %v908, %v910
  %v912 = vadd.f32 %v908, %v911
  %vm913 = vweird.f32 %v702
  %vm914 = vweird.f32 %v908
  %vm915 = vmor %vm913, %vm914
  %v916 = vsel %vm915, %v908, %v912
  %v917 = vand.u32 2147483647, %v702
  %vm918 = vcmp.eq.f32.partialorder %v917, 8.507059e+37
  %v919 = vand.u32 %v702, 2147483648
  %v920 = vor.u32 1.1754944e-38, %v919
  %v921 = vsel %vm918, %v920, %v916
  %v922 = vmul.f32 1.0, %v921
  %v923 = vrcp.pop %v703
  %v924 = vmul.f32 %v703, %v923
  %v925 = vsub.f32 1.0, %v924
  %v926 = vmul.f32 %v923, %v925
  %v927 = vadd.f32 %v923, %v926
  %vm928 = vweird.f32 %v703
  %vm929 = vweird.f32 %v923
  %vm930 = vmor %vm928, %vm929
  %v931 = vsel %vm930, %v923, %v927
  %v932 = vand.u32 2147483647, %v703
  %vm933 = vcmp.eq.f32.partialorder %v932, 8.507059e+37
  %v934 = vand.u32 %v703, 2147483648
  %v935 = vor.u32 1.1754944e-38, %v934
  %v936 = vsel %vm933, %v935, %v931
  %v937 = vmul.f32 1.0, %v936
  %v938 = vrcp.pop %v704
  %v939 = vmul.f32 %v704, %v938
  %v940 = vsub.f32 1.0, %v939
  %v941 = vmul.f32 %v938, %v940
  %v942 = vadd.f32 %v938, %v941
  %vm943 = vweird.f32 %v704
  %vm944 = vweird.f32 %v938
  %vm945 = vmor %vm943, %vm944
  %v946 = vsel %vm945, %v938, %v942
  %v947 = vand.u32 2147483647, %v704
  %vm948 = vcmp.eq.f32.partialorder %v947, 8.507059e+37
  %v949 = vand.u32 %v704, 2147483648
  %v950 = vor.u32 1.1754944e-38, %v949
  %v951 = vsel %vm948, %v950, %v946
  %v952 = vmul.f32 1.0, %v951
  %v953 = vrcp.pop %v705
  %v954 = vmul.f32 %v705, %v953
  %v955 = vsub.f32 1.0, %v954
  %v956 = vmul.f32 %v953, %v955
  %v957 = vadd.f32 %v953, %v956
  %vm958 = vweird.f32 %v705
  %vm959 = vweird.f32 %v953
  %vm960 = vmor %vm958, %vm959
  %v961 = vsel %vm960, %v953, %v957
  %v962 = vand.u32 2147483647, %v705
  %vm963 = vcmp.eq.f32.partialorder %v962, 8.507059e+37
  %v964 = vand.u32 %v705, 2147483648
  %v965 = vor.u32 1.1754944e-38, %v964
  %v966 = vsel %vm963, %v965, %v961
  %v967 = vmul.f32 1.0, %v966
  %v968 = vrcp.pop %v706
  %v969 = vmul.f32 %v706, %v968
  %v970 = vsub.f32 1.0, %v969
  %v971 = vmul.f32 %v968, %v970
  %v972 = vadd.f32 %v968, %v971
  %vm973 = vweird.f32 %v706
  %vm974 = vweird.f32 %v968
  %vm975 = vmor %vm973, %vm974
  %v976 = vsel %vm975, %v968, %v972
  %v977 = vand.u32 2147483647, %v706
  %vm978 = vcmp.eq.f32.partialorder %v977, 8.507059e+37
  %v979 = vand.u32 %v706, 2147483648
  %v980 = vor.u32 1.1754944e-38, %v979
  %v981 = vsel %vm978, %v980, %v976
  %v982 = vmul.f32 1.0, %v981
  %v983 = vrcp.pop %v707
  %v984 = vmul.f32 %v707, %v983
  %v985 = vsub.f32 1.0, %v984
  %v986 = vmul.f32 %v983, %v985
  %v987 = vadd.f32 %v983, %v986
  %vm988 = vweird.f32 %v707
  %vm989 = vweird.f32 %v983
  %vm990 = vmor %vm988, %vm989
  %v991 = vsel %vm990, %v983, %v987
  %v992 = vand.u32 2147483647, %v707
  %vm993 = vcmp.eq.f32.partialorder %v992, 8.507059e+37
  %v994 = vand.u32 %v707, 2147483648
  %v995 = vor.u32 1.1754944e-38, %v994
  %v996 = vsel %vm993, %v995, %v991
  %v997 = vmul.f32 1.0, %v996
  %v998 = vrcp.pop %v708
  %v999 = vmul.f32 %v708, %v998
  %v1000 = vsub.f32 1.0, %v999
  %v1001 = vmul.f32 %v998, %v1000
  %v1002 = vadd.f32 %v998, %v1001
  %vm1003 = vweird.f32 %v708
  %vm1004 = vweird.f32 %v998
  %vm1005 = vmor %vm1003, %vm1004
  %v1006 = vsel %vm1005, %v998, %v1002
  %v1007 = vand.u32 2147483647, %v708
  %vm1008 = vcmp.eq.f32.partialorder %v1007, 8.507059e+37
  %v1009 = vand.u32 %v708, 2147483648
  %v1010 = vor.u32 1.1754944e-38, %v1009
  %v1011 = vsel %vm1008, %v1010, %v1006
  %v1012 = vmul.f32 1.0, %v1011
  %v1013 = vrcp.pop %v709
  %v1014 = vmul.f32 %v709, %v1013
  %v1015 = vsub.f32 1.0, %v1014
  %v1016 = vmul.f32 %v1013, %v1015
  %v1017 = vadd.f32 %v1013, %v1016
  %vm1018 = vweird.f32 %v709
  %vm1019 = vweird.f32 %v1013
  %vm1020 = vmor %vm1018, %vm1019
  %v1021 = vsel %vm1020, %v1013, %v1017
  %v1022 = vand.u32 2147483647, %v709
  %vm1023 = vcmp.eq.f32.partialorder %v1022, 8.507059e+37
  %v1024 = vand.u32 %v709, 2147483648
  %v1025 = vor.u32 1.1754944e-38, %v1024
  %v1026 = vsel %vm1023, %v1025, %v1021
  %v1027 = vmul.f32 1.0, %v1026
  %v1028 = vrcp.pop %v710
  %v1029 = vmul.f32 %v710, %v1028
  %v1030 = vsub.f32 1.0, %v1029
  %v1031 = vmul.f32 %v1028, %v1030
  %v1032 = vadd.f32 %v1028, %v1031
  %vm1033 = vweird.f32 %v710
  %vm1034 = vweird.f32 %v1028
  %vm1035 = vmor %vm1033, %vm1034
  %v1036 = vsel %vm1035, %v1028, %v1032
  %v1037 = vand.u32 2147483647, %v710
  %vm1038 = vcmp.eq.f32.partialorder %v1037, 8.507059e+37
  %v1039 = vand.u32 %v710, 2147483648
  %v1040 = vor.u32 1.1754944e-38, %v1039
  %v1041 = vsel %vm1038, %v1040, %v1036
  %v1042 = vmul.f32 1.0, %v1041
  %v1043 = vrcp.pop %v711
  %v1044 = vmul.f32 %v711, %v1043
  %v1045 = vsub.f32 1.0, %v1044
  %v1046 = vmul.f32 %v1043, %v1045
  %v1047 = vadd.f32 %v1043, %v1046
  %vm1048 = vweird.f32 %v711
  %vm1049 = vweird.f32 %v1043
  %vm1050 = vmor %vm1048, %vm1049
  %v1051 = vsel %vm1050, %v1043, %v1047
  %v1052 = vand.u32 2147483647, %v711
  %vm1053 = vcmp.eq.f32.partialorder %v1052, 8.507059e+37
  %v1054 = vand.u32 %v711, 2147483648
  %v1055 = vor.u32 1.1754944e-38, %v1054
  %v1056 = vsel %vm1053, %v1055, %v1051
  %v1057 = vmul.f32 1.0, %v1056
  %v1058 = vrcp.pop %v712
  %v1059 = vmul.f32 %v712, %v1058
  %v1060 = vsub.f32 1.0, %v1059
  %v1061 = vmul.f32 %v1058, %v1060
  %v1062 = vadd.f32 %v1058, %v1061
  %vm1063 = vweird.f32 %v712
  %vm1064 = vweird.f32 %v1058
  %vm1065 = vmor %vm1063, %vm1064
  %v1066 = vsel %vm1065, %v1058, %v1062
  %v1067 = vand.u32 2147483647, %v712
  %vm1068 = vcmp.eq.f32.partialorder %v1067, 8.507059e+37
  %v1069 = vand.u32 %v712, 2147483648
  %v1070 = vor.u32 1.1754944e-38, %v1069
  %v1071 = vsel %vm1068, %v1070, %v1066
  %v1072 = vmul.f32 1.0, %v1071
  %v1073 = vmul.f32 %v525, %v727
  %v1074 = vmul.f32 %v564, %v742
  %v1075 = vmul.f32 %v527, %v757
  %v1076 = vmul.f32 %v566, %v772
  %v1077 = vmul.f32 %v530, %v787
  %v1078 = vmul.f32 %v569, %v802
  %v1079 = vmul.f32 %v532, %v817
  %v1080 = vmul.f32 %v571, %v832
  %v1081 = vmul.f32 %v535, %v847
  %v1082 = vmul.f32 %v574, %v862
  %v1083 = vmul.f32 %v537, %v877
  %v1084 = vmul.f32 %v576, %v892
  %v1085 = vmul.f32 %v540, %v907
  %v1086 = vmul.f32 %v579, %v922
  %v1087 = vmul.f32 %v542, %v937
  %v1088 = vmul.f32 %v581, %v952
  %v1089 = vmul.f32 %v545, %v967
  %v1090 = vmul.f32 %v584, %v982
  %v1091 = vmul.f32 %v547, %v997
  %v1092 = vmul.f32 %v586, %v1012
  %v1093 = vmul.f32 %v550, %v1027
  %v1094 = vmul.f32 %v589, %v1042
  %v1095 = vmul.f32 %v552, %v1057
  %v1096 = vmul.f32 %v591, %v1072
  %v1097 = vld [vmem:[%s7] sm:$0xff]
  %v1098 = vld [vmem:[%s7 + $0x8] sm:$0xff]
  %v1099 = vld [vmem:[%s7 + $0x10] sm:$0xff]
  %v1100 = vld [vmem:[%s7 + $0x18] sm:$0xff]
  %v1101 = vld [vmem:[%s7 + $0x20] sm:$0xff]
  %v1102 = vld [vmem:[%s7 + $0x28] sm:$0xff]
  %v1103 = vld [vmem:[%s7 + $0x30] sm:$0xff]
  %v1104 = vld [vmem:[%s7 + $0x38] sm:$0xff]
  %v1105 = vld [vmem:[%s7 + $0x40] sm:$0xff]
  %v1106 = vld [vmem:[%s7 + $0x48] sm:$0xff]
  %v1107 = vld [vmem:[%s7 + $0x50] sm:$0xff]
  %v1108 = vld [vmem:[%s7 + $0x58] sm:$0xff]
  %v1109 = vpack.c.bf16 %v1075, %v1073
  %v1110 = vpack.c.bf16 %v1076, %v1074
  %v1111 = vpack.c.bf16 %v1079, %v1077
  %v1112 = vpack.c.bf16 %v1080, %v1078
  %v1113 = vpack.c.bf16 %v1083, %v1081
  %v1114 = vpack.c.bf16 %v1084, %v1082
  %v1115 = vpack.c.bf16 %v1087, %v1085
  %v1116 = vpack.c.bf16 %v1088, %v1086
  %v1117 = vpack.c.bf16 %v1091, %v1089
  %v1118 = vpack.c.bf16 %v1092, %v1090
  %v1119 = vpack.c.bf16 %v1095, %v1093
  %v1120 = vpack.c.bf16 %v1096, %v1094
  %v1121 = vld [vmem:[%s5] sm:$0xf]
  %v1122 = vld [vmem:[%s5 + $0x4] sm:$0xf]
  %v1123 = vld [vmem:[%s5 + $0x8] sm:$0xf]
  %v1124 = vld [vmem:[%s5 + $0xc] sm:$0xf]
  %v1125 = vld [vmem:[%s5 + $0x10] sm:$0xf]
  %v1126 = vld [vmem:[%s5 + $0x14] sm:$0xf]
  %v1127 = vld [vmem:[%s5 + $0x18] sm:$0xf]
  %v1128 = vld [vmem:[%s5 + $0x1c] sm:$0xf]
  %v1129 = vld [vmem:[%s5 + $0x20] sm:$0xf]
  %v1130 = vld [vmem:[%s5 + $0x24] sm:$0xf]
  %v1131 = vld [vmem:[%s5 + $0x28] sm:$0xf]
  %v1132 = vld [vmem:[%s5 + $0x2c] sm:$0xf]
  %v1133 = vld [vmem:[%s5 + $0x30] sm:$0xf]
  %v1134 = vld [vmem:[%s5 + $0x34] sm:$0xf]
  %v1135 = vld [vmem:[%s5 + $0x38] sm:$0xf]
  %v1136 = vld [vmem:[%s5 + $0x3c] sm:$0xf]
  %v1137 = vld [vmem:[%s5 + $0x40] sm:$0xf]
  %v1138 = vld [vmem:[%s5 + $0x44] sm:$0xf]
  %v1139 = vld [vmem:[%s5 + $0x48] sm:$0xf]
  %v1140 = vld [vmem:[%s5 + $0x4c] sm:$0xf]
  %v1141 = vld [vmem:[%s5 + $0x50] sm:$0xf]
  %v1142 = vld [vmem:[%s5 + $0x54] sm:$0xf]
  %v1143 = vld [vmem:[%s5 + $0x58] sm:$0xf]
  %v1144 = vld [vmem:[%s5 + $0x5c] sm:$0xf]
  %v1145 = vld [vmem:[%s5 + $0x60] sm:$0xf]
  %v1146 = vld [vmem:[%s5 + $0x64] sm:$0xf]
  %v1147 = vld [vmem:[%s5 + $0x68] sm:$0xf]
  %v1148 = vld [vmem:[%s5 + $0x6c] sm:$0xf]
  %v1149 = vld [vmem:[%s5 + $0x70] sm:$0xf]
  %v1150 = vld [vmem:[%s5 + $0x74] sm:$0xf]
  %v1151 = vld [vmem:[%s5 + $0x78] sm:$0xf]
  %v1152 = vld [vmem:[%s5 + $0x7c] sm:$0xf]
  %v1185 = vunpack.c.l.b16 %v1121
  %v1186 = vunpack.c.l.b16 %v1122
  %v1187 = vunpack.c.l.b16 %v1123
  %v1188 = vunpack.c.l.b16 %v1124
  %v1189 = vunpack.c.l.b16 %v1125
  %v1190 = vunpack.c.l.b16 %v1126
  %v1191 = vunpack.c.l.b16 %v1127
  %v1192 = vunpack.c.l.b16 %v1128
  %v1193 = vunpack.c.l.b16 %v1129
  %v1194 = vunpack.c.l.b16 %v1130
  %v1195 = vunpack.c.l.b16 %v1131
  %v1196 = vunpack.c.l.b16 %v1132
  %v1197 = vunpack.c.l.b16 %v1133
  %v1198 = vunpack.c.l.b16 %v1134
  %v1199 = vunpack.c.l.b16 %v1135
  %v1200 = vunpack.c.l.b16 %v1136
  %v1201 = vunpack.c.l.b16 %v1137
  %v1202 = vunpack.c.l.b16 %v1138
  %v1203 = vunpack.c.l.b16 %v1139
  %v1204 = vunpack.c.l.b16 %v1140
  %v1205 = vunpack.c.l.b16 %v1141
  %v1206 = vunpack.c.l.b16 %v1142
  %v1207 = vunpack.c.l.b16 %v1143
  %v1208 = vunpack.c.l.b16 %v1144
  %v1209 = vunpack.c.l.b16 %v1145
  %v1210 = vunpack.c.l.b16 %v1146
  %v1211 = vunpack.c.l.b16 %v1147
  %v1212 = vunpack.c.l.b16 %v1148
  %v1213 = vunpack.c.l.b16 %v1149
  %v1214 = vunpack.c.l.b16 %v1150
  %v1215 = vunpack.c.l.b16 %v1151
  %v1216 = vunpack.c.l.b16 %v1152
  %v1217 = vpack.c.b16 %v1186, %v1185
  %v1218 = vpack.c.b16 %v1188, %v1187
  %v1219 = vpack.c.b16 %v1190, %v1189
  %v1220 = vpack.c.b16 %v1192, %v1191
  %v1221 = vpack.c.b16 %v1194, %v1193
  %v1222 = vpack.c.b16 %v1196, %v1195
  %v1223 = vpack.c.b16 %v1198, %v1197
  %v1224 = vpack.c.b16 %v1200, %v1199
  %v1225 = vpack.c.b16 %v1202, %v1201
  %v1226 = vpack.c.b16 %v1204, %v1203
  %v1227 = vpack.c.b16 %v1206, %v1205
  %v1228 = vpack.c.b16 %v1208, %v1207
  %v1229 = vpack.c.b16 %v1210, %v1209
  %v1230 = vpack.c.b16 %v1212, %v1211
  %v1231 = vpack.c.b16 %v1214, %v1213
  %v1232 = vpack.c.b16 %v1216, %v1215
  %1249 = vmatpush.bf16.msra.mxu0 %v1224
  %1250 = vmatpush.bf16.msra.mxu0 %v1223
  %1251 = vmatpush.bf16.msra.mxu0 %v1222
  %1252 = vmatpush.bf16.msra.mxu0 %v1221
  %1253 = vmatpush.bf16.msra.mxu0 %v1220
  %1254 = vmatpush.bf16.msra.mxu0 %v1219
  %1255 = vmatpush.bf16.msra.mxu0 %v1218
  %1256 = vmatpush.bf16.msra.mxu0 %v1217
  %1257 = vmatmul.bf16.gmra.mxu0 %v1109
  %v1258 = vpop.f32.mrf.mxu0
  %v1259 = vadd.f32 0.0, %v1258
  %v1260 = vpop.f32.mrf.mxu0
  %v1261 = vadd.f32 0.0, %v1260
  %1262 = vmatmul.bf16.gmra.mxu0 %v1111
  %v1263 = vpop.f32.mrf.mxu0
  %v1264 = vadd.f32 0.0, %v1263
  %v1265 = vpop.f32.mrf.mxu0
  %v1266 = vadd.f32 0.0, %v1265
  %1267 = vmatmul.bf16.gmra.mxu0 %v1113
  %v1268 = vpop.f32.mrf.mxu0
  %v1269 = vadd.f32 0.0, %v1268
  %v1270 = vpop.f32.mrf.mxu0
  %v1271 = vadd.f32 0.0, %v1270
  %1272 = vmatmul.bf16.gmra.mxu0 %v1115
  %v1273 = vpop.f32.mrf.mxu0
  %v1274 = vadd.f32 0.0, %v1273
  %v1275 = vpop.f32.mrf.mxu0
  %v1276 = vadd.f32 0.0, %v1275
  %1277 = vmatmul.bf16.gmra.mxu0 %v1117
  %v1278 = vpop.f32.mrf.mxu0
  %v1279 = vadd.f32 0.0, %v1278
  %v1280 = vpop.f32.mrf.mxu0
  %v1281 = vadd.f32 0.0, %v1280
  %1282 = vmatmul.bf16.gmra.mxu0 %v1119
  %v1283 = vpop.f32.mrf.mxu0
  %v1284 = vadd.f32 0.0, %v1283
  %v1285 = vpop.f32.mrf.mxu0
  %v1286 = vadd.f32 0.0, %v1285
  %1287 = vdwg.mxu0
  %1288 = vmatpush.bf16.msra.mxu0 %v1232
  %1289 = vmatpush.bf16.msra.mxu0 %v1231
  %1290 = vmatpush.bf16.msra.mxu0 %v1230
  %1291 = vmatpush.bf16.msra.mxu0 %v1229
  %1292 = vmatpush.bf16.msra.mxu0 %v1228
  %1293 = vmatpush.bf16.msra.mxu0 %v1227
  %1294 = vmatpush.bf16.msra.mxu0 %v1226
  %1295 = vmatpush.bf16.msra.mxu0 %v1225
  %1296 = vmatmul.bf16.gmra.mxu0 %v1110
  %v1297 = vpop.f32.mrf.mxu0
  %v1298 = vadd.f32 %v1259, %v1297
  %v1299 = vpop.f32.mrf.mxu0
  %v1300 = vadd.f32 %v1261, %v1299
  %1301 = vmatmul.bf16.gmra.mxu0 %v1112
  %v1302 = vpop.f32.mrf.mxu0
  %v1303 = vadd.f32 %v1264, %v1302
  %v1304 = vpop.f32.mrf.mxu0
  %v1305 = vadd.f32 %v1266, %v1304
  %1306 = vmatmul.bf16.gmra.mxu0 %v1114
  %v1307 = vpop.f32.mrf.mxu0
  %v1308 = vadd.f32 %v1269, %v1307
  %v1309 = vpop.f32.mrf.mxu0
  %v1310 = vadd.f32 %v1271, %v1309
  %1311 = vmatmul.bf16.gmra.mxu0 %v1116
  %v1312 = vpop.f32.mrf.mxu0
  %v1313 = vadd.f32 %v1274, %v1312
  %v1314 = vpop.f32.mrf.mxu0
  %v1315 = vadd.f32 %v1276, %v1314
  %1316 = vmatmul.bf16.gmra.mxu0 %v1118
  %v1317 = vpop.f32.mrf.mxu0
  %v1318 = vadd.f32 %v1279, %v1317
  %v1319 = vpop.f32.mrf.mxu0
  %v1320 = vadd.f32 %v1281, %v1319
  %1321 = vmatmul.bf16.gmra.mxu0 %v1120
  %v1322 = vpop.f32.mrf.mxu0
  %v1323 = vadd.f32 %v1284, %v1322
  %v1324 = vpop.f32.mrf.mxu0
  %v1325 = vadd.f32 %v1286, %v1324
  %1326 = vdwg.mxu0
  %v1327 = vadd.f32 %v1097, %v1298
  %v1328 = vadd.f32 %v1098, %v1300
  %v1329 = vadd.f32 %v1099, %v1303
  %v1330 = vadd.f32 %v1100, %v1305
  %v1331 = vadd.f32 %v1101, %v1308
  %v1332 = vadd.f32 %v1102, %v1310
  %v1333 = vadd.f32 %v1103, %v1313
  %v1334 = vadd.f32 %v1104, %v1315
  %v1335 = vadd.f32 %v1105, %v1318
  %v1336 = vadd.f32 %v1106, %v1320
  %v1337 = vadd.f32 %v1107, %v1323
  %v1338 = vadd.f32 %v1108, %v1325
  %1339 = vst.msk [vmem:[%s7] sm:$0xff] %vm496, %v1327
  %1340 = vst.msk [vmem:[%s7 + $0x8] sm:$0xff] %vm496, %v1328
  %1341 = vst.msk [vmem:[%s7 + $0x10] sm:$0xff] %vm496, %v1329
  %1342 = vst.msk [vmem:[%s7 + $0x18] sm:$0xff] %vm496, %v1330
  %1343 = vst.msk [vmem:[%s7 + $0x20] sm:$0xff] %vm496, %v1331
  %1344 = vst.msk [vmem:[%s7 + $0x28] sm:$0xff] %vm496, %v1332
  %1345 = vst.msk [vmem:[%s7 + $0x30] sm:$0xff] %vm496, %v1333
  %1346 = vst.msk [vmem:[%s7 + $0x38] sm:$0xff] %vm496, %v1334
  %1347 = vst.msk [vmem:[%s7 + $0x40] sm:$0xff] %vm496, %v1335
  %1348 = vst.msk [vmem:[%s7 + $0x48] sm:$0xff] %vm496, %v1336
  %1349 = vst.msk [vmem:[%s7 + $0x50] sm:$0xff] %vm496, %v1337
  %1350 = vst.msk [vmem:[%s7 + $0x58] sm:$0xff] %vm496, %v1338
  // Predicated region
  $region34: #{visual_forward.14} parent=0 // pred_check
    _
  $region35: #{visual_forward.14} parent=0 // pred_check_branch
    %1352 = sbr.rel (0) target = $region37
  $region36: #{visual_forward.14} parent=0 // pred_region
    _
  $region37: #{visual_forward.14} parent=0 // pred_fallthru
    _
  // Predicated region
  $region38: #{visual_forward.14} parent=0 // pred_check
    _
  $region39: #{visual_forward.14} parent=0 // pred_check_branch
    %1354 = sbr.rel (0) target = $region41
  $region40: #{visual_forward.14} parent=0 // pred_region
    _
  $region41: #{visual_forward.14} parent=0 // pred_fallthru
    _

</llo_original>
